<compile_context>
chip_gen: v7x
topology: tpu7x:2x2x1
jax: 0.10.0
libtpu: 0.0.40
codegen_flags: <defaults>
</compile_context>

<pallas_src>
import functools
import math

import jax
import jax.numpy as jnp
import numpy as np
from jax import lax
from jax.experimental import pallas as pl
from jax.experimental.pallas import tpu as pltpu

_LANE = 128      # vreg lane width
_SUBLANE = 8     # f32 sublane count


def _round_up(x, m):
    return ((x + m - 1) // m) * m


def _sigmoid(x):
    # sigmoid(x) = 0.5*tanh(x/2) + 0.5 : one EUP push per gate (vs exp + divide).
    return 0.5 * jnp.tanh(0.5 * x) + 0.5


def _vmem_capacity_bytes():
    try:
        cap = int(pltpu.get_tpu_info().vmem_capacity_bytes)
        if cap > 0:
            return cap
    except Exception:
        pass
    return 64 * 1024 * 1024          # conservative fallback (v7x per-TC VMEM)


def _plan_layer(T, Bb, D, Hp, x_bytes, y_bytes, max_chunk):
    """Pick the time-chunk size Tc and the scoped-VMEM limit from a VMEM budget."""
    G = 4 * Hp
    cap = _vmem_capacity_bytes()
    usable = min(int(cap * 0.5), 48 * 1024 * 1024)
    fixed = (D * G * 2               # W_ih^T (bf16, single-buffered)
             + Hp * G * 2            # W_hh^T (bf16, single-buffered)
             + G * 4                 # merged bias (f32)
             + 2 * Bb * Hp * 4       # h / c state scratch
             + 4 * Bb * Hp * 4)      # h_n / c_n output blocks (double-buffered)
    per_t = (2 * Bb * D * x_bytes        # x chunk (double-buffered)
             + 2 * Bb * Hp * y_bytes     # y chunk (double-buffered)
             + Bb * G * 4)               # gate pre-activation scratch (f32)
    tc_cap = max(1, min(max_chunk, T, (usable - fixed) // per_t))
    tc = tc_cap
    # Prefer a chunk size dividing T so no padded serial steps get executed.
    for d in range(tc_cap, 0, -1):
        if T % d == 0:
            if d >= max(1, tc_cap // 2):
                tc = d
            break
    est = fixed + per_t * tc + (2 << 20)
    vmem_limit = int(min(cap * 0.9, max(32 * 1024 * 1024, 2 * est)))
    return tc, vmem_limit


# -----------------------------------------------------------------------------
# Pallas kernel: one LSTM layer, fused input projection + recurrence over a
# time chunk.  Grid = (batch_blocks [parallel], time_chunks [sequential]).
# h / c state lives in VMEM scratch and persists across time chunks.
# -----------------------------------------------------------------------------
def _lstm_layer_kernel(x_ref, wih_ref, bias_ref, whh_ref,
                       y_ref, hn_ref, cn_ref,
                       gx_sc, h_sc, c_sc,
                       *, seq_len, unroll):
    t_chunk = pl.program_id(1)
    Tc, Bb, _ = x_ref.shape
    Hp = h_sc.shape[-1]

    @pl.when(t_chunk == 0)
    def _():
        h_sc[...] = jnp.zeros_like(h_sc)
        c_sc[...] = jnp.zeros_like(c_sc)

    # --- Fused input projection for the whole chunk (hidden under pipelining
    # of the next chunk's x DMA): one (Tc*Bb, D) x (D, 4Hp) MXU matmul with
    # bf16 operands / f32 accumulation; merged bias added exactly once here.
    x2d = x_ref[...].astype(jnp.bfloat16).reshape(Tc * Bb, -1)
    gx = jnp.dot(x2d, wih_ref[...], preferred_element_type=jnp.float32)
    gx_sc[...] = gx.reshape(Tc, Bb, 4 * Hp) + bias_ref[...]

    whh = whh_ref[...]                       # (Hp, 4Hp) bf16, VMEM resident
    ragged = (seq_len % Tc) != 0             # static python bool

    # TODO(synk): for tiny B, weight-stationary MXU driving
    # (pltpu.matmul_push_rhs / matmul_acc_lhs) would avoid re-pushing W_hh^T
    # every timestep; left to the default lowering here.
    def step(s, carry):
        h, c = carry                         # f32 (Bb, Hp)
        gates = gx_sc[s] + jnp.dot(h.astype(jnp.bfloat16), whh,
                                   preferred_element_type=jnp.float32)
        # Hp is a multiple of 128 -> every gate slice is lane-aligned (free).
        i_g = _sigmoid(gates[:, 0 * Hp:1 * Hp])
        f_g = _sigmoid(gates[:, 1 * Hp:2 * Hp])
        g_g = jnp.tanh(gates[:, 2 * Hp:3 * Hp])
        o_g = _sigmoid(gates[:, 3 * Hp:4 * Hp])
        c_new = f_g * c + i_g * g_g
        h_new = o_g * jnp.tanh(c_new)
        if ragged:
            # Back-padded steps of the last chunk must not disturb the carried
            # state; their y rows are sliced off in the wrapper.
            valid = (t_chunk * Tc + s) < seq_len
            h_new = jnp.where(valid, h_new, h)
            c_new = jnp.where(valid, c_new, c)
        y_ref[s] = h_new.astype(y_ref.dtype)     # lane-dense (Bb, Hp) store
        return h_new, c_new

    h, c = lax.fori_loop(0, Tc, step, (h_sc[...], c_sc[...]), unroll=unroll)
    h_sc[...] = h
    c_sc[...] = c

    @pl.when(t_chunk == pl.num_programs(1) - 1)
    def _():
        hn_ref[...] = h.astype(hn_ref.dtype)
        cn_ref[...] = c.astype(cn_ref.dtype)


def _lstm_layer(x_tbd, wih_t, whh_t, bias, *, y_dtype, max_chunk):
    """One LSTM layer over a time-major, batch/hidden-padded sequence.

    x_tbd:  (T, Bp, D) time-major input (f32 for layer 0, bf16 between layers).
    wih_t:  (D, 4Hp) bf16, gate columns padded per-gate to Hp.
    whh_t:  (Hp, 4Hp) bf16.
    bias:   (1, 4Hp) f32 = b_ih + b_hh, gate-padded with zeros.
    Returns y: (T, Bp, Hp) in y_dtype, h_n / c_n: (Bp, Hp) f32.
    """
    T, Bp, D = x_tbd.shape
    Hp = whh_t.shape[0]
    G = 4 * Hp

    # v7x megacore lever: split the padded batch across the two TensorCores
    # when there is enough of it (keeps every block a multiple of 16 rows so
    # bf16 blocks stay tile-friendly); otherwise a single batch block.
    nb = 2 if (Bp % 32 == 0) else 1
    Bb = Bp // nb

    x_bytes = jnp.dtype(x_tbd.dtype).itemsize
    y_bytes = jnp.dtype(y_dtype).itemsize
    Tc, vmem_limit = _plan_layer(T, Bb, D, Hp, x_bytes, y_bytes, max_chunk)

    n_chunks = pl.cdiv(T, Tc)
    Tp = n_chunks * Tc
    if Tp != T:
        # Back-pad time; the in-kernel validity guard freezes h/c on padded
        # steps and the padded y rows are sliced off below.
        x_tbd = jnp.pad(x_tbd, ((0, Tp - T), (0, 0), (0, 0)))

    kernel = functools.partial(_lstm_layer_kernel,
                               seq_len=T, unroll=min(Tc, 8))

    resident = pl.Buffered(1)   # constant-index weights: no second VMEM copy

    y, hn, cn = pl.pallas_call(
        kernel,
        out_shape=(jax.ShapeDtypeStruct((Tp, Bp, Hp), y_dtype),
                   jax.ShapeDtypeStruct((Bp, Hp), jnp.float32),
                   jax.ShapeDtypeStruct((Bp, Hp), jnp.float32)),
        grid_spec=pltpu.PrefetchScalarGridSpec(
            num_scalar_prefetch=0,
            grid=(nb, n_chunks),                         # (batch, time)
            in_specs=[
                pl.BlockSpec((Tc, Bb, D), lambda b, t: (t, b, 0)),      # x chunk
                pl.BlockSpec((D, G), lambda b, t: (0, 0),
                             pipeline_mode=resident),                   # W_ih^T
                pl.BlockSpec((1, G), lambda b, t: (0, 0),
                             pipeline_mode=resident),                   # bias
                pl.BlockSpec((Hp, G), lambda b, t: (0, 0),
                             pipeline_mode=resident),                   # W_hh^T
            ],
            out_specs=(
                pl.BlockSpec((Tc, Bb, Hp), lambda b, t: (t, b, 0)),     # y chunk
                pl.BlockSpec((Bb, Hp), lambda b, t: (b, 0)),            # h_n
                pl.BlockSpec((Bb, Hp), lambda b, t: (b, 0)),            # c_n
            ),
            scratch_shapes=[pltpu.VMEM((Tc, Bb, G), jnp.float32),   # gate pre-acts
                            pltpu.VMEM((Bb, Hp), jnp.float32),      # h state
                            pltpu.VMEM((Bb, Hp), jnp.float32)],     # c state
        ),
        compiler_params=pltpu.CompilerParams(
            dimension_semantics=("parallel", "arbitrary"),
            vmem_limit_bytes=vmem_limit),
    )(x_tbd, wih_t, bias, whh_t)

    if Tp != T:
        y = y[:T]
    return y, hn, cn


# -----------------------------------------------------------------------------
# Weight preparation: pad each gate block of H to Hp (lane multiple), merge the
# biases, transpose, cast matmul operands to bf16.
# -----------------------------------------------------------------------------
def _pad_gate_rows(w, H, Hp):
    # (4H, X) -> (4Hp, X): pad each PyTorch gate block [i, f, g, o] to Hp rows.
    X = w.shape[1]
    w4 = w.reshape(4, H, X)
    w4 = jnp.pad(w4, ((0, 0), (0, Hp - H), (0, 0)))
    return w4.reshape(4 * Hp, X)


def _prepare_layer_weights(wih, whh, bih, bhh, Hp, d_in_pad):
    # Zero padding keeps the padded hidden units exactly zero for all time:
    # their gate pre-activations are exactly 0 -> c_pad, h_pad stay 0.
    H = whh.shape[1]
    wih_p = _pad_gate_rows(wih, H, Hp)                         # (4Hp, D)
    if d_in_pad != wih_p.shape[1]:
        wih_p = jnp.pad(wih_p, ((0, 0), (0, d_in_pad - wih_p.shape[1])))
    whh_p = _pad_gate_rows(whh, H, Hp)                         # (4Hp, H)
    whh_p = jnp.pad(whh_p, ((0, 0), (0, Hp - H)))              # (4Hp, Hp)
    bias4 = (bih + bhh).reshape(4, H)
    bias_p = jnp.pad(bias4, ((0, 0), (0, Hp - H))).reshape(1, 4 * Hp)
    return (wih_p.T.astype(jnp.bfloat16),      # bf16 MXU operand
            whh_p.T.astype(jnp.bfloat16),      # bf16 MXU operand
            bias_p.astype(jnp.float32))


# -----------------------------------------------------------------------------
# Encoder: num_layers stacked LSTM layers (dropout_rate=0 -> no dropout).
# -----------------------------------------------------------------------------
def init_encoder_params(key, input_dim, hidden_dim, num_layers, dtype=jnp.float32):
    """PyTorch-style init: U(-1/sqrt(H), 1/sqrt(H)) for every LSTM tensor."""
    k = 1.0 / math.sqrt(hidden_dim)
    params = []
    for layer in range(num_layers):
        d_in = input_dim if layer == 0 else hidden_dim
        key, k1, k2, k3, k4 = jax.random.split(key, 5)
        wih = jax.random.uniform(k1, (4 * hidden_dim, d_in), dtype, -k, k)
        whh = jax.random.uniform(k2, (4 * hidden_dim, hidden_dim), dtype, -k, k)
        bih = jax.random.uniform(k3, (4 * hidden_dim,), dtype, -k, k)
        bhh = jax.random.uniform(k4, (4 * hidden_dim,), dtype, -k, k)
        params.append((wih, whh, bih, bhh))
    return params


@functools.partial(jax.jit, static_argnames=("max_chunk",))
def encoder_forward(x, params, max_chunk=64):
    """x: (B, T, input_dim) batch_first, like the PyTorch module.

    Returns (outputs, (h_n, c_n)):
      outputs: (B, T, H);  h_n, c_n: (num_layers, B, H)
    """
    B, T, _ = x.shape
    H = params[0][1].shape[1]
    Hp = _round_up(H, _LANE)                  # lane-aligned hidden dim
    Bp = _round_up(B, _SUBLANE)               # sublane-dense batch
    num_layers = len(params)

    x_tb = jnp.transpose(x, (1, 0, 2)).astype(jnp.float32)   # (T, B, D), once
    if Bp != B:
        x_tb = jnp.pad(x_tb, ((0, 0), (0, Bp - B), (0, 0)))

    # TODO(synk): inter-layer dropout not implemented (dropout_rate=0 in the spec).
    layer_in = x_tb
    h_list, c_list = [], []
    for layer, (wih, whh, bih, bhh) in enumerate(params):
        d_in = layer_in.shape[-1]
        wih_t, whh_t, bias = _prepare_layer_weights(wih, whh, bih, bhh, Hp, d_in)
        # Inter-layer activations travel in bf16 (half the HBM traffic); the
        # final layer emits f32 to match the module's output precision.
        y_dtype = jnp.float32 if layer == num_layers - 1 else jnp.bfloat16
        y, hn, cn = _lstm_layer(layer_in, wih_t, whh_t, bias,
                                y_dtype=y_dtype, max_chunk=max_chunk)
        layer_in = y
        h_list.append(hn[:B, :H])
        c_list.append(cn[:B, :H])

    outputs = jnp.transpose(layer_in[:, :B, :H], (1, 0, 2)).astype(x.dtype)
    h_n = jnp.stack(h_list, axis=0).astype(x.dtype)
    c_n = jnp.stack(c_list, axis=0).astype(x.dtype)
    return outputs, (h_n, c_n)


# -----------------------------------------------------------------------------
# Pure-JAX reference (lax.scan, f32) for correctness checking.
# -----------------------------------------------------------------------------
def encoder_forward_ref(x, params):
    B = x.shape[0]
    xt = jnp.transpose(x, (1, 0, 2))
    h_list, c_list = [], []
    for (wih, whh, bih, bhh) in params:
        H = whh.shape[1]

        def step(carry, x_t):
            h, c = carry
            gates = x_t @ wih.T + h @ whh.T + bih + bhh
            i = jax.nn.sigmoid(gates[:, 0 * H:1 * H])
            f = jax.nn.sigmoid(gates[:, 1 * H:2 * H])
            g = jnp.tanh(gates[:, 2 * H:3 * H])
            o = jax.nn.sigmoid(gates[:, 3 * H:4 * H])
            c_new = f * c + i * g
            h_new = o * jnp.tanh(c_new)
            return (h_new, c_new), h_new

        init = (jnp.zeros((B, H), x.dtype), jnp.zeros((B, H), x.dtype))
        (hn, cn), ys = lax.scan(step, init, xt)
        xt = ys
        h_list.append(hn)
        c_list.append(cn)
    return jnp.transpose(xt, (1, 0, 2)), (jnp.stack(h_list), jnp.stack(c_list))


def _check(x, params, max_chunk):
    out, (h_n, c_n) = encoder_forward(x, params, max_chunk=max_chunk)
    jax.block_until_ready((out, h_n, c_n))
    out_r, (h_r, c_r) = encoder_forward_ref(x, params)
    # bf16 matmul operands (f32 accumulation) -> looser tolerance than pure f32.
    np.testing.assert_allclose(np.asarray(out), np.asarray(out_r), rtol=2e-2, atol=2e-2)
    np.testing.assert_allclose(np.asarray(h_n), np.asarray(h_r), rtol=2e-2, atol=2e-2)
    np.testing.assert_allclose(np.asarray(c_n), np.asarray(c_r), rtol=2e-2, atol=2e-2)
    return out, h_n, c_n


if __name__ == "__main__":
    # Primary demo: small shapes consistent with the module.
    batch, seq, input_dim, hidden_dim, num_layers = 2, 8, 16, 32, 2
    key = jax.random.PRNGKey(0)
    key, kx = jax.random.split(key)
    x = jax.random.normal(kx, (batch, seq, input_dim), jnp.float32)
    params = init_encoder_params(key, input_dim, hidden_dim, num_layers)

    outputs, h_n, c_n = _check(x, params, max_chunk=64)
    assert outputs.shape == (batch, seq, hidden_dim)
    assert h_n.shape == (num_layers, batch, hidden_dim)
    assert c_n.shape == (num_layers, batch, hidden_dim)

    # Secondary check: exercises the batch-parallel grid axis (2 batch blocks),
    # multi-chunk state carry and the ragged-last-chunk guard (T=13, Tc=5).
    key, kx2 = jax.random.split(key)
    x2 = jax.random.normal(kx2, (32, 13, input_dim), jnp.float32)
    _check(x2, params, max_chunk=5)

    print("KERNEL_OK")
</pallas_src>

<mosaic_0001>
module attributes {stable_mosaic.version = 11 : i64} {
  func.func @_lstm_layer_kernel(%arg0: i32, %arg1: i32, %arg2: memref<8x8x16xf32, #tpu.memory_space<vmem>>, %arg3: memref<16x512xbf16, #tpu.memory_space<vmem>>, %arg4: memref<1x512xf32, #tpu.memory_space<vmem>>, %arg5: memref<128x512xbf16, #tpu.memory_space<vmem>>, %arg6: memref<8x8x128xbf16, #tpu.memory_space<vmem>>, %arg7: memref<8x128xf32, #tpu.memory_space<vmem>>, %arg8: memref<8x128xf32, #tpu.memory_space<vmem>>, %arg9: memref<8x8x512xf32, #tpu.memory_space<vmem>>, %arg10: memref<8x128xf32, #tpu.memory_space<vmem>>, %arg11: memref<8x128xf32, #tpu.memory_space<vmem>>) attributes {dimension_semantics = [#tpu.dimension_semantics<parallel>, #tpu.dimension_semantics<arbitrary>], iteration_bounds = array<i64: 1, 1>, scalar_prefetch = 0 : i64, scratch_operands = 3 : i64, tpu.core_type = #tpu.core_type<tc>, window_params = [{transform_indices = @transform_0, window_bounds = array<i64: 8, 8, 16>}, {pipeline_mode = #tpu.pipeline_mode<synchronous>, transform_indices = @transform_1, window_bounds = array<i64: 16, 512>}, {pipeline_mode = #tpu.pipeline_mode<synchronous>, transform_indices = @transform_2, window_bounds = array<i64: 1, 512>}, {pipeline_mode = #tpu.pipeline_mode<synchronous>, transform_indices = @transform_3, window_bounds = array<i64: 128, 512>}, {transform_indices = @transform_4, window_bounds = array<i64: 8, 8, 128>}, {transform_indices = @transform_5, window_bounds = array<i64: 8, 128>}, {transform_indices = @transform_6, window_bounds = array<i64: 8, 128>}]} {
    %c0_i32 = arith.constant 0 : i32
    %0 = arith.cmpi eq, %arg1, %c0_i32 : i32
    %1 = arith.extui %0 : i1 to i32
    %c0_i32_0 = arith.constant 0 : i32
    %2 = arith.cmpi ne, %1, %c0_i32_0 : i32
    scf.if %2 {
      %cst_135 = arith.constant 0.000000e+00 : f32
      %358 = vector.broadcast %cst_135 : f32 to vector<8x128xf32>
      %c0_136 = arith.constant 0 : index
      %c0_137 = arith.constant 0 : index
      %359 = vector.load %arg10[%c0_136, %c0_137] : memref<8x128xf32, #tpu.memory_space<vmem>>, vector<8x128xf32>
      tpu.vector_store %arg10[%c0_136, %c0_137], %358 {strides = array<i32>} : memref<8x128xf32, #tpu.memory_space<vmem>>, vector<8x128xf32>,
      %cst_138 = arith.constant 0.000000e+00 : f32
      %360 = vector.broadcast %cst_138 : f32 to vector<8x128xf32>
      %c0_139 = arith.constant 0 : index
      %c0_140 = arith.constant 0 : index
      %361 = vector.load %arg11[%c0_139, %c0_140] : memref<8x128xf32, #tpu.memory_space<vmem>>, vector<8x128xf32>
      tpu.vector_store %arg11[%c0_139, %c0_140], %360 {strides = array<i32>} : memref<8x128xf32, #tpu.memory_space<vmem>>, vector<8x128xf32>,
    } else {
    }
    %c0 = arith.constant 0 : index
    %c0_1 = arith.constant 0 : index
    %c0_2 = arith.constant 0 : index
    %3 = vector.load %arg2[%c0, %c0_1, %c0_2] : memref<8x8x16xf32, #tpu.memory_space<vmem>>, vector<8x8x16xf32>
    %4 = arith.truncf %3 : vector<8x8x16xf32> to vector<8x8x16xbf16>
    %5 = vector.shape_cast %4 : vector<8x8x16xbf16> to vector<64x16xbf16>
    %c0_3 = arith.constant 0 : index
    %c0_4 = arith.constant 0 : index
    %6 = vector.load %arg3[%c0_3, %c0_4] : memref<16x512xbf16, #tpu.memory_space<vmem>>, vector<16x512xbf16>
    %cst = arith.constant dense<0.000000e+00> : vector<64x512xf32>
    %7 = tpu.matmul %5, %6, %cst {dimension_numbers = #tpu.dot_dimension_numbers<[1], [0], [0], [1], [0, 0, 1, 1], [], []>} : vector<64x16xbf16>, vector<16x512xbf16>, vector<64x512xf32> -> vector<64x512xf32>
    %8 = vector.shape_cast %7 : vector<64x512xf32> to vector<8x8x512xf32>
    %c0_5 = arith.constant 0 : index
    %c0_6 = arith.constant 0 : index
    %9 = vector.load %arg4[%c0_5, %c0_6] : memref<1x512xf32, #tpu.memory_space<vmem>>, vector<1x512xf32>
    %10 = vector.shape_cast %9 : vector<1x512xf32> to vector<1x1x512xf32>
    %11 = vector.broadcast %10 : vector<1x1x512xf32> to vector<8x8x512xf32>
    %12 = arith.addf %8, %11 : vector<8x8x512xf32>
    %c0_7 = arith.constant 0 : index
    %c0_8 = arith.constant 0 : index
    %c0_9 = arith.constant 0 : index
    %13 = vector.load %arg9[%c0_7, %c0_8, %c0_9] : memref<8x8x512xf32, #tpu.memory_space<vmem>>, vector<8x8x512xf32>
    tpu.vector_store %arg9[%c0_7, %c0_8, %c0_9], %12 {strides = array<i32>} : memref<8x8x512xf32, #tpu.memory_space<vmem>>, vector<8x8x512xf32>,
    %c0_10 = arith.constant 0 : index
    %c0_11 = arith.constant 0 : index
    %14 = vector.load %arg5[%c0_10, %c0_11] : memref<128x512xbf16, #tpu.memory_space<vmem>>, vector<128x512xbf16>
    %c0_12 = arith.constant 0 : index
    %c0_13 = arith.constant 0 : index
    %15 = vector.load %arg10[%c0_12, %c0_13] : memref<8x128xf32, #tpu.memory_space<vmem>>, vector<8x128xf32>
    %c0_14 = arith.constant 0 : index
    %c0_15 = arith.constant 0 : index
    %16 = vector.load %arg11[%c0_14, %c0_15] : memref<8x128xf32, #tpu.memory_space<vmem>>, vector<8x128xf32>
    %c0_i32_16 = arith.constant 0 : i32
    %17 = arith.index_cast %c0_i32_16 : i32 to index
    %c0_17 = arith.constant 0 : index
    %c0_18 = arith.constant 0 : index
    %18 = vector.load %arg9[%17, %c0_17, %c0_18] : memref<8x8x512xf32, #tpu.memory_space<vmem>>, vector<1x8x512xf32>
    %19 = vector.shape_cast %18 : vector<1x8x512xf32> to vector<8x512xf32>
    %20 = arith.truncf %15 : vector<8x128xf32> to vector<8x128xbf16>
    %cst_19 = arith.constant dense<0.000000e+00> : vector<8x512xf32>
    %21 = tpu.matmul %20, %14, %cst_19 {dimension_numbers = #tpu.dot_dimension_numbers<[1], [0], [0], [1], [0, 0, 1, 1], [], []>} : vector<8x128xbf16>, vector<128x512xbf16>, vector<8x512xf32> -> vector<8x512xf32>
    %22 = arith.addf %19, %21 : vector<8x512xf32>
    %23 = vector.extract_strided_slice %22 {offsets = [0, 0], sizes = [8, 128], strides = [1, 1]} : vector<8x512xf32> to vector<8x128xf32>
    %cst_20 = arith.constant 5.000000e-01 : f32
    %24 = vector.broadcast %cst_20 : f32 to vector<8x128xf32>
    %25 = arith.mulf %24, %23 : vector<8x128xf32>
    %26 = math.tanh %25 : vector<8x128xf32>
    %cst_21 = arith.constant 5.000000e-01 : f32
    %27 = vector.broadcast %cst_21 : f32 to vector<8x128xf32>
    %28 = arith.mulf %27, %26 : vector<8x128xf32>
    %cst_22 = arith.constant 5.000000e-01 : f32
    %29 = vector.broadcast %cst_22 : f32 to vector<8x128xf32>
    %30 = arith.addf %28, %29 : vector<8x128xf32>
    %31 = vector.extract_strided_slice %22 {offsets = [0, 128], sizes = [8, 128], strides = [1, 1]} : vector<8x512xf32> to vector<8x128xf32>
    %cst_23 = arith.constant 5.000000e-01 : f32
    %32 = vector.broadcast %cst_23 : f32 to vector<8x128xf32>
    %33 = arith.mulf %32, %31 : vector<8x128xf32>
    %34 = math.tanh %33 : vector<8x128xf32>
    %cst_24 = arith.constant 5.000000e-01 : f32
    %35 = vector.broadcast %cst_24 : f32 to vector<8x128xf32>
    %36 = arith.mulf %35, %34 : vector<8x128xf32>
    %cst_25 = arith.constant 5.000000e-01 : f32
    %37 = vector.broadcast %cst_25 : f32 to vector<8x128xf32>
    %38 = arith.addf %36, %37 : vector<8x128xf32>
    %39 = vector.extract_strided_slice %22 {offsets = [0, 256], sizes = [8, 128], strides = [1, 1]} : vector<8x512xf32> to vector<8x128xf32>
    %40 = math.tanh %39 : vector<8x128xf32>
    %41 = vector.extract_strided_slice %22 {offsets = [0, 384], sizes = [8, 128], strides = [1, 1]} : vector<8x512xf32> to vector<8x128xf32>
    %cst_26 = arith.constant 5.000000e-01 : f32
    %42 = vector.broadcast %cst_26 : f32 to vector<8x128xf32>
    %43 = arith.mulf %42, %41 : vector<8x128xf32>
    %44 = math.tanh %43 : vector<8x128xf32>
    %cst_27 = arith.constant 5.000000e-01 : f32
    %45 = vector.broadcast %cst_27 : f32 to vector<8x128xf32>
    %46 = arith.mulf %45, %44 : vector<8x128xf32>
    %cst_28 = arith.constant 5.000000e-01 : f32
    %47 = vector.broadcast %cst_28 : f32 to vector<8x128xf32>
    %48 = arith.addf %46, %47 : vector<8x128xf32>
    %49 = arith.mulf %38, %16 : vector<8x128xf32>
    %50 = arith.mulf %30, %40 : vector<8x128xf32>
    %51 = arith.addf %49, %50 : vector<8x128xf32>
    %52 = math.tanh %51 : vector<8x128xf32>
    %53 = arith.mulf %48, %52 : vector<8x128xf32>
    %54 = arith.truncf %53 : vector<8x128xf32> to vector<8x128xbf16>
    %55 = arith.index_cast %c0_i32_16 : i32 to index
    %c0_29 = arith.constant 0 : index
    %c0_30 = arith.constant 0 : index
    %56 = vector.load %arg6[%55, %c0_29, %c0_30] : memref<8x8x128xbf16, #tpu.memory_space<vmem>>, vector<1x8x128xbf16>
    %57 = vector.shape_cast %56 : vector<1x8x128xbf16> to vector<8x128xbf16>
    %58 = vector.shape_cast %54 : vector<8x128xbf16> to vector<1x8x128xbf16>
    tpu.vector_store %arg6[%55, %c0_29, %c0_30], %58 {strides = array<i32>} : memref<8x8x128xbf16, #tpu.memory_space<vmem>>, vector<1x8x128xbf16>,
    %c1_i32 = arith.constant 1 : i32
    %59 = arith.index_cast %c1_i32 : i32 to index
    %c0_31 = arith.constant 0 : index
    %c0_32 = arith.constant 0 : index
    %60 = vector.load %arg9[%59, %c0_31, %c0_32] : memref<8x8x512xf32, #tpu.memory_space<vmem>>, vector<1x8x512xf32>
    %61 = vector.shape_cast %60 : vector<1x8x512xf32> to vector<8x512xf32>
    %62 = arith.truncf %53 : vector<8x128xf32> to vector<8x128xbf16>
    %cst_33 = arith.constant dense<0.000000e+00> : vector<8x512xf32>
    %63 = tpu.matmul %62, %14, %cst_33 {dimension_numbers = #tpu.dot_dimension_numbers<[1], [0], [0], [1], [0, 0, 1, 1], [], []>} : vector<8x128xbf16>, vector<128x512xbf16>, vector<8x512xf32> -> vector<8x512xf32>
    %64 = arith.addf %61, %63 : vector<8x512xf32>
    %65 = vector.extract_strided_slice %64 {offsets = [0, 0], sizes = [8, 128], strides = [1, 1]} : vector<8x512xf32> to vector<8x128xf32>
    %cst_34 = arith.constant 5.000000e-01 : f32
    %66 = vector.broadcast %cst_34 : f32 to vector<8x128xf32>
    %67 = arith.mulf %66, %65 : vector<8x128xf32>
    %68 = math.tanh %67 : vector<8x128xf32>
    %cst_35 = arith.constant 5.000000e-01 : f32
    %69 = vector.broadcast %cst_35 : f32 to vector<8x128xf32>
    %70 = arith.mulf %69, %68 : vector<8x128xf32>
    %cst_36 = arith.constant 5.000000e-01 : f32
    %71 = vector.broadcast %cst_36 : f32 to vector<8x128xf32>
    %72 = arith.addf %70, %71 : vector<8x128xf32>
    %73 = vector.extract_strided_slice %64 {offsets = [0, 128], sizes = [8, 128], strides = [1, 1]} : vector<8x512xf32> to vector<8x128xf32>
    %cst_37 = arith.constant 5.000000e-01 : f32
    %74 = vector.broadcast %cst_37 : f32 to vector<8x128xf32>
    %75 = arith.mulf %74, %73 : vector<8x128xf32>
    %76 = math.tanh %75 : vector<8x128xf32>
    %cst_38 = arith.constant 5.000000e-01 : f32
    %77 = vector.broadcast %cst_38 : f32 to vector<8x128xf32>
    %78 = arith.mulf %77, %76 : vector<8x128xf32>
    %cst_39 = arith.constant 5.000000e-01 : f32
    %79 = vector.broadcast %cst_39 : f32 to vector<8x128xf32>
    %80 = arith.addf %78, %79 : vector<8x128xf32>
    %81 = vector.extract_strided_slice %64 {offsets = [0, 256], sizes = [8, 128], strides = [1, 1]} : vector<8x512xf32> to vector<8x128xf32>
    %82 = math.tanh %81 : vector<8x128xf32>
    %83 = vector.extract_strided_slice %64 {offsets = [0, 384], sizes = [8, 128], strides = [1, 1]} : vector<8x512xf32> to vector<8x128xf32>
    %cst_40 = arith.constant 5.000000e-01 : f32
    %84 = vector.broadcast %cst_40 : f32 to vector<8x128xf32>
    %85 = arith.mulf %84, %83 : vector<8x128xf32>
    %86 = math.tanh %85 : vector<8x128xf32>
    %cst_41 = arith.constant 5.000000e-01 : f32
    %87 = vector.broadcast %cst_41 : f32 to vector<8x128xf32>
    %88 = arith.mulf %87, %86 : vector<8x128xf32>
    %cst_42 = arith.constant 5.000000e-01 : f32
    %89 = vector.broadcast %cst_42 : f32 to vector<8x128xf32>
    %90 = arith.addf %88, %89 : vector<8x128xf32>
    %91 = arith.mulf %80, %51 : vector<8x128xf32>
    %92 = arith.mulf %72, %82 : vector<8x128xf32>
    %93 = arith.addf %91, %92 : vector<8x128xf32>
    %94 = math.tanh %93 : vector<8x128xf32>
    %95 = arith.mulf %90, %94 : vector<8x128xf32>
    %96 = arith.truncf %95 : vector<8x128xf32> to vector<8x128xbf16>
    %97 = arith.index_cast %c1_i32 : i32 to index
    %c0_43 = arith.constant 0 : index
    %c0_44 = arith.constant 0 : index
    %98 = vector.load %arg6[%97, %c0_43, %c0_44] : memref<8x8x128xbf16, #tpu.memory_space<vmem>>, vector<1x8x128xbf16>
    %99 = vector.shape_cast %98 : vector<1x8x128xbf16> to vector<8x128xbf16>
    %100 = vector.shape_cast %96 : vector<8x128xbf16> to vector<1x8x128xbf16>
    tpu.vector_store %arg6[%97, %c0_43, %c0_44], %100 {strides = array<i32>} : memref<8x8x128xbf16, #tpu.memory_space<vmem>>, vector<1x8x128xbf16>,
    %c2_i32 = arith.constant 2 : i32
    %101 = arith.index_cast %c2_i32 : i32 to index
    %c0_45 = arith.constant 0 : index
    %c0_46 = arith.constant 0 : index
    %102 = vector.load %arg9[%101, %c0_45, %c0_46] : memref<8x8x512xf32, #tpu.memory_space<vmem>>, vector<1x8x512xf32>
    %103 = vector.shape_cast %102 : vector<1x8x512xf32> to vector<8x512xf32>
    %104 = arith.truncf %95 : vector<8x128xf32> to vector<8x128xbf16>
    %cst_47 = arith.constant dense<0.000000e+00> : vector<8x512xf32>
    %105 = tpu.matmul %104, %14, %cst_47 {dimension_numbers = #tpu.dot_dimension_numbers<[1], [0], [0], [1], [0, 0, 1, 1], [], []>} : vector<8x128xbf16>, vector<128x512xbf16>, vector<8x512xf32> -> vector<8x512xf32>
    %106 = arith.addf %103, %105 : vector<8x512xf32>
    %107 = vector.extract_strided_slice %106 {offsets = [0, 0], sizes = [8, 128], strides = [1, 1]} : vector<8x512xf32> to vector<8x128xf32>
    %cst_48 = arith.constant 5.000000e-01 : f32
    %108 = vector.broadcast %cst_48 : f32 to vector<8x128xf32>
    %109 = arith.mulf %108, %107 : vector<8x128xf32>
    %110 = math.tanh %109 : vector<8x128xf32>
    %cst_49 = arith.constant 5.000000e-01 : f32
    %111 = vector.broadcast %cst_49 : f32 to vector<8x128xf32>
    %112 = arith.mulf %111, %110 : vector<8x128xf32>
    %cst_50 = arith.constant 5.000000e-01 : f32
    %113 = vector.broadcast %cst_50 : f32 to vector<8x128xf32>
    %114 = arith.addf %112, %113 : vector<8x128xf32>
    %115 = vector.extract_strided_slice %106 {offsets = [0, 128], sizes = [8, 128], strides = [1, 1]} : vector<8x512xf32> to vector<8x128xf32>
    %cst_51 = arith.constant 5.000000e-01 : f32
    %116 = vector.broadcast %cst_51 : f32 to vector<8x128xf32>
    %117 = arith.mulf %116, %115 : vector<8x128xf32>
    %118 = math.tanh %117 : vector<8x128xf32>
    %cst_52 = arith.constant 5.000000e-01 : f32
    %119 = vector.broadcast %cst_52 : f32 to vector<8x128xf32>
    %120 = arith.mulf %119, %118 : vector<8x128xf32>
    %cst_53 = arith.constant 5.000000e-01 : f32
    %121 = vector.broadcast %cst_53 : f32 to vector<8x128xf32>
    %122 = arith.addf %120, %121 : vector<8x128xf32>
    %123 = vector.extract_strided_slice %106 {offsets = [0, 256], sizes = [8, 128], strides = [1, 1]} : vector<8x512xf32> to vector<8x128xf32>
    %124 = math.tanh %123 : vector<8x128xf32>
    %125 = vector.extract_strided_slice %106 {offsets = [0, 384], sizes = [8, 128], strides = [1, 1]} : vector<8x512xf32> to vector<8x128xf32>
    %cst_54 = arith.constant 5.000000e-01 : f32
    %126 = vector.broadcast %cst_54 : f32 to vector<8x128xf32>
    %127 = arith.mulf %126, %125 : vector<8x128xf32>
    %128 = math.tanh %127 : vector<8x128xf32>
    %cst_55 = arith.constant 5.000000e-01 : f32
    %129 = vector.broadcast %cst_55 : f32 to vector<8x128xf32>
    %130 = arith.mulf %129, %128 : vector<8x128xf32>
    %cst_56 = arith.constant 5.000000e-01 : f32
    %131 = vector.broadcast %cst_56 : f32 to vector<8x128xf32>
    %132 = arith.addf %130, %131 : vector<8x128xf32>
    %133 = arith.mulf %122, %93 : vector<8x128xf32>
    %134 = arith.mulf %114, %124 : vector<8x128xf32>
    %135 = arith.addf %133, %134 : vector<8x128xf32>
    %136 = math.tanh %135 : vector<8x128xf32>
    %137 = arith.mulf %132, %136 : vector<8x128xf32>
    %138 = arith.truncf %137 : vector<8x128xf32> to vector<8x128xbf16>
    %139 = arith.index_cast %c2_i32 : i32 to index
    %c0_57 = arith.constant 0 : index
    %c0_58 = arith.constant 0 : index
    %140 = vector.load %arg6[%139, %c0_57, %c0_58] : memref<8x8x128xbf16, #tpu.memory_space<vmem>>, vector<1x8x128xbf16>
    %141 = vector.shape_cast %140 : vector<1x8x128xbf16> to vector<8x128xbf16>
    %142 = vector.shape_cast %138 : vector<8x128xbf16> to vector<1x8x128xbf16>
    tpu.vector_store %arg6[%139, %c0_57, %c0_58], %142 {strides = array<i32>} : memref<8x8x128xbf16, #tpu.memory_space<vmem>>, vector<1x8x128xbf16>,
    %c3_i32 = arith.constant 3 : i32
    %143 = arith.index_cast %c3_i32 : i32 to index
    %c0_59 = arith.constant 0 : index
    %c0_60 = arith.constant 0 : index
    %144 = vector.load %arg9[%143, %c0_59, %c0_60] : memref<8x8x512xf32, #tpu.memory_space<vmem>>, vector<1x8x512xf32>
    %145 = vector.shape_cast %144 : vector<1x8x512xf32> to vector<8x512xf32>
    %146 = arith.truncf %137 : vector<8x128xf32> to vector<8x128xbf16>
    %cst_61 = arith.constant dense<0.000000e+00> : vector<8x512xf32>
    %147 = tpu.matmul %146, %14, %cst_61 {dimension_numbers = #tpu.dot_dimension_numbers<[1], [0], [0], [1], [0, 0, 1, 1], [], []>} : vector<8x128xbf16>, vector<128x512xbf16>, vector<8x512xf32> -> vector<8x512xf32>
    %148 = arith.addf %145, %147 : vector<8x512xf32>
    %149 = vector.extract_strided_slice %148 {offsets = [0, 0], sizes = [8, 128], strides = [1, 1]} : vector<8x512xf32> to vector<8x128xf32>
    %cst_62 = arith.constant 5.000000e-01 : f32
    %150 = vector.broadcast %cst_62 : f32 to vector<8x128xf32>
    %151 = arith.mulf %150, %149 : vector<8x128xf32>
    %152 = math.tanh %151 : vector<8x128xf32>
    %cst_63 = arith.constant 5.000000e-01 : f32
    %153 = vector.broadcast %cst_63 : f32 to vector<8x128xf32>
    %154 = arith.mulf %153, %152 : vector<8x128xf32>
    %cst_64 = arith.constant 5.000000e-01 : f32
    %155 = vector.broadcast %cst_64 : f32 to vector<8x128xf32>
    %156 = arith.addf %154, %155 : vector<8x128xf32>
    %157 = vector.extract_strided_slice %148 {offsets = [0, 128], sizes = [8, 128], strides = [1, 1]} : vector<8x512xf32> to vector<8x128xf32>
    %cst_65 = arith.constant 5.000000e-01 : f32
    %158 = vector.broadcast %cst_65 : f32 to vector<8x128xf32>
    %159 = arith.mulf %158, %157 : vector<8x128xf32>
    %160 = math.tanh %159 : vector<8x128xf32>
    %cst_66 = arith.constant 5.000000e-01 : f32
    %161 = vector.broadcast %cst_66 : f32 to vector<8x128xf32>
    %162 = arith.mulf %161, %160 : vector<8x128xf32>
    %cst_67 = arith.constant 5.000000e-01 : f32
    %163 = vector.broadcast %cst_67 : f32 to vector<8x128xf32>
    %164 = arith.addf %162, %163 : vector<8x128xf32>
    %165 = vector.extract_strided_slice %148 {offsets = [0, 256], sizes = [8, 128], strides = [1, 1]} : vector<8x512xf32> to vector<8x128xf32>
    %166 = math.tanh %165 : vector<8x128xf32>
    %167 = vector.extract_strided_slice %148 {offsets = [0, 384], sizes = [8, 128], strides = [1, 1]} : vector<8x512xf32> to vector<8x128xf32>
    %cst_68 = arith.constant 5.000000e-01 : f32
    %168 = vector.broadcast %cst_68 : f32 to vector<8x128xf32>
    %169 = arith.mulf %168, %167 : vector<8x128xf32>
    %170 = math.tanh %169 : vector<8x128xf32>
    %cst_69 = arith.constant 5.000000e-01 : f32
    %171 = vector.broadcast %cst_69 : f32 to vector<8x128xf32>
    %172 = arith.mulf %171, %170 : vector<8x128xf32>
    %cst_70 = arith.constant 5.000000e-01 : f32
    %173 = vector.broadcast %cst_70 : f32 to vector<8x128xf32>
    %174 = arith.addf %172, %173 : vector<8x128xf32>
    %175 = arith.mulf %164, %135 : vector<8x128xf32>
    %176 = arith.mulf %156, %166 : vector<8x128xf32>
    %177 = arith.addf %175, %176 : vector<8x128xf32>
    %178 = math.tanh %177 : vector<8x128xf32>
    %179 = arith.mulf %174, %178 : vector<8x128xf32>
    %180 = arith.truncf %179 : vector<8x128xf32> to vector<8x128xbf16>
    %181 = arith.index_cast %c3_i32 : i32 to index
    %c0_71 = arith.constant 0 : index
    %c0_72 = arith.constant 0 : index
    %182 = vector.load %arg6[%181, %c0_71, %c0_72] : memref<8x8x128xbf16, #tpu.memory_space<vmem>>, vector<1x8x128xbf16>
    %183 = vector.shape_cast %182 : vector<1x8x128xbf16> to vector<8x128xbf16>
    %184 = vector.shape_cast %180 : vector<8x128xbf16> to vector<1x8x128xbf16>
    tpu.vector_store %arg6[%181, %c0_71, %c0_72], %184 {strides = array<i32>} : memref<8x8x128xbf16, #tpu.memory_space<vmem>>, vector<1x8x128xbf16>,
    %c4_i32 = arith.constant 4 : i32
    %185 = arith.index_cast %c4_i32 : i32 to index
    %c0_73 = arith.constant 0 : index
    %c0_74 = arith.constant 0 : index
    %186 = vector.load %arg9[%185, %c0_73, %c0_74] : memref<8x8x512xf32, #tpu.memory_space<vmem>>, vector<1x8x512xf32>
    %187 = vector.shape_cast %186 : vector<1x8x512xf32> to vector<8x512xf32>
    %188 = arith.truncf %179 : vector<8x128xf32> to vector<8x128xbf16>
    %cst_75 = arith.constant dense<0.000000e+00> : vector<8x512xf32>
    %189 = tpu.matmul %188, %14, %cst_75 {dimension_numbers = #tpu.dot_dimension_numbers<[1], [0], [0], [1], [0, 0, 1, 1], [], []>} : vector<8x128xbf16>, vector<128x512xbf16>, vector<8x512xf32> -> vector<8x512xf32>
    %190 = arith.addf %187, %189 : vector<8x512xf32>
    %191 = vector.extract_strided_slice %190 {offsets = [0, 0], sizes = [8, 128], strides = [1, 1]} : vector<8x512xf32> to vector<8x128xf32>
    %cst_76 = arith.constant 5.000000e-01 : f32
    %192 = vector.broadcast %cst_76 : f32 to vector<8x128xf32>
    %193 = arith.mulf %192, %191 : vector<8x128xf32>
    %194 = math.tanh %193 : vector<8x128xf32>
    %cst_77 = arith.constant 5.000000e-01 : f32
    %195 = vector.broadcast %cst_77 : f32 to vector<8x128xf32>
    %196 = arith.mulf %195, %194 : vector<8x128xf32>
    %cst_78 = arith.constant 5.000000e-01 : f32
    %197 = vector.broadcast %cst_78 : f32 to vector<8x128xf32>
    %198 = arith.addf %196, %197 : vector<8x128xf32>
    %199 = vector.extract_strided_slice %190 {offsets = [0, 128], sizes = [8, 128], strides = [1, 1]} : vector<8x512xf32> to vector<8x128xf32>
    %cst_79 = arith.constant 5.000000e-01 : f32
    %200 = vector.broadcast %cst_79 : f32 to vector<8x128xf32>
    %201 = arith.mulf %200, %199 : vector<8x128xf32>
    %202 = math.tanh %201 : vector<8x128xf32>
    %cst_80 = arith.constant 5.000000e-01 : f32
    %203 = vector.broadcast %cst_80 : f32 to vector<8x128xf32>
    %204 = arith.mulf %203, %202 : vector<8x128xf32>
    %cst_81 = arith.constant 5.000000e-01 : f32
    %205 = vector.broadcast %cst_81 : f32 to vector<8x128xf32>
    %206 = arith.addf %204, %205 : vector<8x128xf32>
    %207 = vector.extract_strided_slice %190 {offsets = [0, 256], sizes = [8, 128], strides = [1, 1]} : vector<8x512xf32> to vector<8x128xf32>
    %208 = math.tanh %207 : vector<8x128xf32>
    %209 = vector.extract_strided_slice %190 {offsets = [0, 384], sizes = [8, 128], strides = [1, 1]} : vector<8x512xf32> to vector<8x128xf32>
    %cst_82 = arith.constant 5.000000e-01 : f32
    %210 = vector.broadcast %cst_82 : f32 to vector<8x128xf32>
    %211 = arith.mulf %210, %209 : vector<8x128xf32>
    %212 = math.tanh %211 : vector<8x128xf32>
    %cst_83 = arith.constant 5.000000e-01 : f32
    %213 = vector.broadcast %cst_83 : f32 to vector<8x128xf32>
    %214 = arith.mulf %213, %212 : vector<8x128xf32>
    %cst_84 = arith.constant 5.000000e-01 : f32
    %215 = vector.broadcast %cst_84 : f32 to vector<8x128xf32>
    %216 = arith.addf %214, %215 : vector<8x128xf32>
    %217 = arith.mulf %206, %177 : vector<8x128xf32>
    %218 = arith.mulf %198, %208 : vector<8x128xf32>
    %219 = arith.addf %217, %218 : vector<8x128xf32>
    %220 = math.tanh %219 : vector<8x128xf32>
    %221 = arith.mulf %216, %220 : vector<8x128xf32>
    %222 = arith.truncf %221 : vector<8x128xf32> to vector<8x128xbf16>
    %223 = arith.index_cast %c4_i32 : i32 to index
    %c0_85 = arith.constant 0 : index
    %c0_86 = arith.constant 0 : index
    %224 = vector.load %arg6[%223, %c0_85, %c0_86] : memref<8x8x128xbf16, #tpu.memory_space<vmem>>, vector<1x8x128xbf16>
    %225 = vector.shape_cast %224 : vector<1x8x128xbf16> to vector<8x128xbf16>
    %226 = vector.shape_cast %222 : vector<8x128xbf16> to vector<1x8x128xbf16>
    tpu.vector_store %arg6[%223, %c0_85, %c0_86], %226 {strides = array<i32>} : memref<8x8x128xbf16, #tpu.memory_space<vmem>>, vector<1x8x128xbf16>,
    %c5_i32 = arith.constant 5 : i32
    %227 = arith.index_cast %c5_i32 : i32 to index
    %c0_87 = arith.constant 0 : index
    %c0_88 = arith.constant 0 : index
    %228 = vector.load %arg9[%227, %c0_87, %c0_88] : memref<8x8x512xf32, #tpu.memory_space<vmem>>, vector<1x8x512xf32>
    %229 = vector.shape_cast %228 : vector<1x8x512xf32> to vector<8x512xf32>
    %230 = arith.truncf %221 : vector<8x128xf32> to vector<8x128xbf16>
    %cst_89 = arith.constant dense<0.000000e+00> : vector<8x512xf32>
    %231 = tpu.matmul %230, %14, %cst_89 {dimension_numbers = #tpu.dot_dimension_numbers<[1], [0], [0], [1], [0, 0, 1, 1], [], []>} : vector<8x128xbf16>, vector<128x512xbf16>, vector<8x512xf32> -> vector<8x512xf32>
    %232 = arith.addf %229, %231 : vector<8x512xf32>
    %233 = vector.extract_strided_slice %232 {offsets = [0, 0], sizes = [8, 128], strides = [1, 1]} : vector<8x512xf32> to vector<8x128xf32>
    %cst_90 = arith.constant 5.000000e-01 : f32
    %234 = vector.broadcast %cst_90 : f32 to vector<8x128xf32>
    %235 = arith.mulf %234, %233 : vector<8x128xf32>
    %236 = math.tanh %235 : vector<8x128xf32>
    %cst_91 = arith.constant 5.000000e-01 : f32
    %237 = vector.broadcast %cst_91 : f32 to vector<8x128xf32>
    %238 = arith.mulf %237, %236 : vector<8x128xf32>
    %cst_92 = arith.constant 5.000000e-01 : f32
    %239 = vector.broadcast %cst_92 : f32 to vector<8x128xf32>
    %240 = arith.addf %238, %239 : vector<8x128xf32>
    %241 = vector.extract_strided_slice %232 {offsets = [0, 128], sizes = [8, 128], strides = [1, 1]} : vector<8x512xf32> to vector<8x128xf32>
    %cst_93 = arith.constant 5.000000e-01 : f32
    %242 = vector.broadcast %cst_93 : f32 to vector<8x128xf32>
    %243 = arith.mulf %242, %241 : vector<8x128xf32>
    %244 = math.tanh %243 : vector<8x128xf32>
    %cst_94 = arith.constant 5.000000e-01 : f32
    %245 = vector.broadcast %cst_94 : f32 to vector<8x128xf32>
    %246 = arith.mulf %245, %244 : vector<8x128xf32>
    %cst_95 = arith.constant 5.000000e-01 : f32
    %247 = vector.broadcast %cst_95 : f32 to vector<8x128xf32>
    %248 = arith.addf %246, %247 : vector<8x128xf32>
    %249 = vector.extract_strided_slice %232 {offsets = [0, 256], sizes = [8, 128], strides = [1, 1]} : vector<8x512xf32> to vector<8x128xf32>
    %250 = math.tanh %249 : vector<8x128xf32>
    %251 = vector.extract_strided_slice %232 {offsets = [0, 384], sizes = [8, 128], strides = [1, 1]} : vector<8x512xf32> to vector<8x128xf32>
    %cst_96 = arith.constant 5.000000e-01 : f32
    %252 = vector.broadcast %cst_96 : f32 to vector<8x128xf32>
    %253 = arith.mulf %252, %251 : vector<8x128xf32>
    %254 = math.tanh %253 : vector<8x128xf32>
    %cst_97 = arith.constant 5.000000e-01 : f32
    %255 = vector.broadcast %cst_97 : f32 to vector<8x128xf32>
    %256 = arith.mulf %255, %254 : vector<8x128xf32>
    %cst_98 = arith.constant 5.000000e-01 : f32
    %257 = vector.broadcast %cst_98 : f32 to vector<8x128xf32>
    %258 = arith.addf %256, %257 : vector<8x128xf32>
    %259 = arith.mulf %248, %219 : vector<8x128xf32>
    %260 = arith.mulf %240, %250 : vector<8x128xf32>
    %261 = arith.addf %259, %260 : vector<8x128xf32>
    %262 = math.tanh %261 : vector<8x128xf32>
    %263 = arith.mulf %258, %262 : vector<8x128xf32>
    %264 = arith.truncf %263 : vector<8x128xf32> to vector<8x128xbf16>
    %265 = arith.index_cast %c5_i32 : i32 to index
    %c0_99 = arith.constant 0 : index
    %c0_100 = arith.constant 0 : index
    %266 = vector.load %arg6[%265, %c0_99, %c0_100] : memref<8x8x128xbf16, #tpu.memory_space<vmem>>, vector<1x8x128xbf16>
    %267 = vector.shape_cast %266 : vector<1x8x128xbf16> to vector<8x128xbf16>
    %268 = vector.shape_cast %264 : vector<8x128xbf16> to vector<1x8x128xbf16>
    tpu.vector_store %arg6[%265, %c0_99, %c0_100], %268 {strides = array<i32>} : memref<8x8x128xbf16, #tpu.memory_space<vmem>>, vector<1x8x128xbf16>,
    %c6_i32 = arith.constant 6 : i32
    %269 = arith.index_cast %c6_i32 : i32 to index
    %c0_101 = arith.constant 0 : index
    %c0_102 = arith.constant 0 : index
    %270 = vector.load %arg9[%269, %c0_101, %c0_102] : memref<8x8x512xf32, #tpu.memory_space<vmem>>, vector<1x8x512xf32>
    %271 = vector.shape_cast %270 : vector<1x8x512xf32> to vector<8x512xf32>
    %272 = arith.truncf %263 : vector<8x128xf32> to vector<8x128xbf16>
    %cst_103 = arith.constant dense<0.000000e+00> : vector<8x512xf32>
    %273 = tpu.matmul %272, %14, %cst_103 {dimension_numbers = #tpu.dot_dimension_numbers<[1], [0], [0], [1], [0, 0, 1, 1], [], []>} : vector<8x128xbf16>, vector<128x512xbf16>, vector<8x512xf32> -> vector<8x512xf32>
    %274 = arith.addf %271, %273 : vector<8x512xf32>
    %275 = vector.extract_strided_slice %274 {offsets = [0, 0], sizes = [8, 128], strides = [1, 1]} : vector<8x512xf32> to vector<8x128xf32>
    %cst_104 = arith.constant 5.000000e-01 : f32
    %276 = vector.broadcast %cst_104 : f32 to vector<8x128xf32>
    %277 = arith.mulf %276, %275 : vector<8x128xf32>
    %278 = math.tanh %277 : vector<8x128xf32>
    %cst_105 = arith.constant 5.000000e-01 : f32
    %279 = vector.broadcast %cst_105 : f32 to vector<8x128xf32>
    %280 = arith.mulf %279, %278 : vector<8x128xf32>
    %cst_106 = arith.constant 5.000000e-01 : f32
    %281 = vector.broadcast %cst_106 : f32 to vector<8x128xf32>
    %282 = arith.addf %280, %281 : vector<8x128xf32>
    %283 = vector.extract_strided_slice %274 {offsets = [0, 128], sizes = [8, 128], strides = [1, 1]} : vector<8x512xf32> to vector<8x128xf32>
    %cst_107 = arith.constant 5.000000e-01 : f32
    %284 = vector.broadcast %cst_107 : f32 to vector<8x128xf32>
    %285 = arith.mulf %284, %283 : vector<8x128xf32>
    %286 = math.tanh %285 : vector<8x128xf32>
    %cst_108 = arith.constant 5.000000e-01 : f32
    %287 = vector.broadcast %cst_108 : f32 to vector<8x128xf32>
    %288 = arith.mulf %287, %286 : vector<8x128xf32>
    %cst_109 = arith.constant 5.000000e-01 : f32
    %289 = vector.broadcast %cst_109 : f32 to vector<8x128xf32>
    %290 = arith.addf %288, %289 : vector<8x128xf32>
    %291 = vector.extract_strided_slice %274 {offsets = [0, 256], sizes = [8, 128], strides = [1, 1]} : vector<8x512xf32> to vector<8x128xf32>
    %292 = math.tanh %291 : vector<8x128xf32>
    %293 = vector.extract_strided_slice %274 {offsets = [0, 384], sizes = [8, 128], strides = [1, 1]} : vector<8x512xf32> to vector<8x128xf32>
    %cst_110 = arith.constant 5.000000e-01 : f32
    %294 = vector.broadcast %cst_110 : f32 to vector<8x128xf32>
    %295 = arith.mulf %294, %293 : vector<8x128xf32>
    %296 = math.tanh %295 : vector<8x128xf32>
    %cst_111 = arith.constant 5.000000e-01 : f32
    %297 = vector.broadcast %cst_111 : f32 to vector<8x128xf32>
    %298 = arith.mulf %297, %296 : vector<8x128xf32>
    %cst_112 = arith.constant 5.000000e-01 : f32
    %299 = vector.broadcast %cst_112 : f32 to vector<8x128xf32>
    %300 = arith.addf %298, %299 : vector<8x128xf32>
    %301 = arith.mulf %290, %261 : vector<8x128xf32>
    %302 = arith.mulf %282, %292 : vector<8x128xf32>
    %303 = arith.addf %301, %302 : vector<8x128xf32>
    %304 = math.tanh %303 : vector<8x128xf32>
    %305 = arith.mulf %300, %304 : vector<8x128xf32>
    %306 = arith.truncf %305 : vector<8x128xf32> to vector<8x128xbf16>
    %307 = arith.index_cast %c6_i32 : i32 to index
    %c0_113 = arith.constant 0 : index
    %c0_114 = arith.constant 0 : index
    %308 = vector.load %arg6[%307, %c0_113, %c0_114] : memref<8x8x128xbf16, #tpu.memory_space<vmem>>, vector<1x8x128xbf16>
    %309 = vector.shape_cast %308 : vector<1x8x128xbf16> to vector<8x128xbf16>
    %310 = vector.shape_cast %306 : vector<8x128xbf16> to vector<1x8x128xbf16>
    tpu.vector_store %arg6[%307, %c0_113, %c0_114], %310 {strides = array<i32>} : memref<8x8x128xbf16, #tpu.memory_space<vmem>>, vector<1x8x128xbf16>,
    %c7_i32 = arith.constant 7 : i32
    %311 = arith.index_cast %c7_i32 : i32 to index
    %c0_115 = arith.constant 0 : index
    %c0_116 = arith.constant 0 : index
    %312 = vector.load %arg9[%311, %c0_115, %c0_116] : memref<8x8x512xf32, #tpu.memory_space<vmem>>, vector<1x8x512xf32>
    %313 = vector.shape_cast %312 : vector<1x8x512xf32> to vector<8x512xf32>
    %314 = arith.truncf %305 : vector<8x128xf32> to vector<8x128xbf16>
    %cst_117 = arith.constant dense<0.000000e+00> : vector<8x512xf32>
    %315 = tpu.matmul %314, %14, %cst_117 {dimension_numbers = #tpu.dot_dimension_numbers<[1], [0], [0], [1], [0, 0, 1, 1], [], []>} : vector<8x128xbf16>, vector<128x512xbf16>, vector<8x512xf32> -> vector<8x512xf32>
    %316 = arith.addf %313, %315 : vector<8x512xf32>
    %317 = vector.extract_strided_slice %316 {offsets = [0, 0], sizes = [8, 128], strides = [1, 1]} : vector<8x512xf32> to vector<8x128xf32>
    %cst_118 = arith.constant 5.000000e-01 : f32
    %318 = vector.broadcast %cst_118 : f32 to vector<8x128xf32>
    %319 = arith.mulf %318, %317 : vector<8x128xf32>
    %320 = math.tanh %319 : vector<8x128xf32>
    %cst_119 = arith.constant 5.000000e-01 : f32
    %321 = vector.broadcast %cst_119 : f32 to vector<8x128xf32>
    %322 = arith.mulf %321, %320 : vector<8x128xf32>
    %cst_120 = arith.constant 5.000000e-01 : f32
    %323 = vector.broadcast %cst_120 : f32 to vector<8x128xf32>
    %324 = arith.addf %322, %323 : vector<8x128xf32>
    %325 = vector.extract_strided_slice %316 {offsets = [0, 128], sizes = [8, 128], strides = [1, 1]} : vector<8x512xf32> to vector<8x128xf32>
    %cst_121 = arith.constant 5.000000e-01 : f32
    %326 = vector.broadcast %cst_121 : f32 to vector<8x128xf32>
    %327 = arith.mulf %326, %325 : vector<8x128xf32>
    %328 = math.tanh %327 : vector<8x128xf32>
    %cst_122 = arith.constant 5.000000e-01 : f32
    %329 = vector.broadcast %cst_122 : f32 to vector<8x128xf32>
    %330 = arith.mulf %329, %328 : vector<8x128xf32>
    %cst_123 = arith.constant 5.000000e-01 : f32
    %331 = vector.broadcast %cst_123 : f32 to vector<8x128xf32>
    %332 = arith.addf %330, %331 : vector<8x128xf32>
    %333 = vector.extract_strided_slice %316 {offsets = [0, 256], sizes = [8, 128], strides = [1, 1]} : vector<8x512xf32> to vector<8x128xf32>
    %334 = math.tanh %333 : vector<8x128xf32>
    %335 = vector.extract_strided_slice %316 {offsets = [0, 384], sizes = [8, 128], strides = [1, 1]} : vector<8x512xf32> to vector<8x128xf32>
    %cst_124 = arith.constant 5.000000e-01 : f32
    %336 = vector.broadcast %cst_124 : f32 to vector<8x128xf32>
    %337 = arith.mulf %336, %335 : vector<8x128xf32>
    %338 = math.tanh %337 : vector<8x128xf32>
    %cst_125 = arith.constant 5.000000e-01 : f32
    %339 = vector.broadcast %cst_125 : f32 to vector<8x128xf32>
    %340 = arith.mulf %339, %338 : vector<8x128xf32>
    %cst_126 = arith.constant 5.000000e-01 : f32
    %341 = vector.broadcast %cst_126 : f32 to vector<8x128xf32>
    %342 = arith.addf %340, %341 : vector<8x128xf32>
    %343 = arith.mulf %332, %303 : vector<8x128xf32>
    %344 = arith.mulf %324, %334 : vector<8x128xf32>
    %345 = arith.addf %343, %344 : vector<8x128xf32>
    %346 = math.tanh %345 : vector<8x128xf32>
    %347 = arith.mulf %342, %346 : vector<8x128xf32>
    %348 = arith.truncf %347 : vector<8x128xf32> to vector<8x128xbf16>
    %349 = arith.index_cast %c7_i32 : i32 to index
    %c0_127 = arith.constant 0 : index
    %c0_128 = arith.constant 0 : index
    %350 = vector.load %arg6[%349, %c0_127, %c0_128] : memref<8x8x128xbf16, #tpu.memory_space<vmem>>, vector<1x8x128xbf16>
    %351 = vector.shape_cast %350 : vector<1x8x128xbf16> to vector<8x128xbf16>
    %352 = vector.shape_cast %348 : vector<8x128xbf16> to vector<1x8x128xbf16>
    tpu.vector_store %arg6[%349, %c0_127, %c0_128], %352 {strides = array<i32>} : memref<8x8x128xbf16, #tpu.memory_space<vmem>>, vector<1x8x128xbf16>,
    %c8_i32 = arith.constant 8 : i32
    %c0_129 = arith.constant 0 : index
    %c0_130 = arith.constant 0 : index
    %353 = vector.load %arg10[%c0_129, %c0_130] : memref<8x128xf32, #tpu.memory_space<vmem>>, vector<8x128xf32>
    tpu.vector_store %arg10[%c0_129, %c0_130], %347 {strides = array<i32>} : memref<8x128xf32, #tpu.memory_space<vmem>>, vector<8x128xf32>,
    %c0_131 = arith.constant 0 : index
    %c0_132 = arith.constant 0 : index
    %354 = vector.load %arg11[%c0_131, %c0_132] : memref<8x128xf32, #tpu.memory_space<vmem>>, vector<8x128xf32>
    tpu.vector_store %arg11[%c0_131, %c0_132], %345 {strides = array<i32>} : memref<8x128xf32, #tpu.memory_space<vmem>>, vector<8x128xf32>,
    %c0_i32_133 = arith.constant 0 : i32
    %355 = arith.cmpi eq, %arg1, %c0_i32_133 : i32
    %356 = arith.extui %355 : i1 to i32
    %c0_i32_134 = arith.constant 0 : i32
    %357 = arith.cmpi ne, %356, %c0_i32_134 : i32
    scf.if %357 {
      %c0_135 = arith.constant 0 : index
      %c0_136 = arith.constant 0 : index
      %358 = vector.load %arg7[%c0_135, %c0_136] : memref<8x128xf32, #tpu.memory_space<vmem>>, vector<8x128xf32>
      tpu.vector_store %arg7[%c0_135, %c0_136], %347 {strides = array<i32>} : memref<8x128xf32, #tpu.memory_space<vmem>>, vector<8x128xf32>,
      %c0_137 = arith.constant 0 : index
      %c0_138 = arith.constant 0 : index
      %359 = vector.load %arg8[%c0_137, %c0_138] : memref<8x128xf32, #tpu.memory_space<vmem>>, vector<8x128xf32>
      tpu.vector_store %arg8[%c0_137, %c0_138], %345 {strides = array<i32>} : memref<8x128xf32, #tpu.memory_space<vmem>>, vector<8x128xf32>,
    } else {
    }
    return
  }
  func.func @transform_0(%arg0: i32, %arg1: i32) -> (i32, i32, i32) {
    %c0_i32 = arith.constant 0 : i32
    %c0_i32_0 = arith.constant 0 : i32
    return %arg1, %arg0, %c0_i32 : i32, i32, i32
  }
  func.func @transform_1(%arg0: i32, %arg1: i32) -> (i32, i32) {
    %c0_i32 = arith.constant 0 : i32
    %c0_i32_0 = arith.constant 0 : i32
    %c0_i32_1 = arith.constant 0 : i32
    return %c0_i32, %c0_i32_0 : i32, i32
  }
  func.func @transform_2(%arg0: i32, %arg1: i32) -> (i32, i32) {
    %c0_i32 = arith.constant 0 : i32
    %c0_i32_0 = arith.constant 0 : i32
    %c0_i32_1 = arith.constant 0 : i32
    return %c0_i32, %c0_i32_0 : i32, i32
  }
  func.func @transform_3(%arg0: i32, %arg1: i32) -> (i32, i32) {
    %c0_i32 = arith.constant 0 : i32
    %c0_i32_0 = arith.constant 0 : i32
    %c0_i32_1 = arith.constant 0 : i32
    return %c0_i32, %c0_i32_0 : i32, i32
  }
  func.func @transform_4(%arg0: i32, %arg1: i32) -> (i32, i32, i32) {
    %c0_i32 = arith.constant 0 : i32
    %c0_i32_0 = arith.constant 0 : i32
    return %arg1, %arg0, %c0_i32 : i32, i32, i32
  }
  func.func @transform_5(%arg0: i32, %arg1: i32) -> (i32, i32) {
    %c0_i32 = arith.constant 0 : i32
    %c0_i32_0 = arith.constant 0 : i32
    return %arg0, %c0_i32 : i32, i32
  }
  func.func @transform_6(%arg0: i32, %arg1: i32) -> (i32, i32) {
    %c0_i32 = arith.constant 0 : i32
    %c0_i32_0 = arith.constant 0 : i32
    return %arg0, %c0_i32 : i32, i32
  }
}

module attributes {stable_mosaic.version = 11 : i64} {
  func.func @_lstm_layer_kernel(%arg0: i32, %arg1: i32, %arg2: memref<8x8x128xbf16, #tpu.memory_space<vmem>>, %arg3: memref<128x512xbf16, #tpu.memory_space<vmem>>, %arg4: memref<1x512xf32, #tpu.memory_space<vmem>>, %arg5: memref<128x512xbf16, #tpu.memory_space<vmem>>, %arg6: memref<8x8x128xf32, #tpu.memory_space<vmem>>, %arg7: memref<8x128xf32, #tpu.memory_space<vmem>>, %arg8: memref<8x128xf32, #tpu.memory_space<vmem>>, %arg9: memref<8x8x512xf32, #tpu.memory_space<vmem>>, %arg10: memref<8x128xf32, #tpu.memory_space<vmem>>, %arg11: memref<8x128xf32, #tpu.memory_space<vmem>>) attributes {dimension_semantics = [#tpu.dimension_semantics<parallel>, #tpu.dimension_semantics<arbitrary>], iteration_bounds = array<i64: 1, 1>, scalar_prefetch = 0 : i64, scratch_operands = 3 : i64, tpu.core_type = #tpu.core_type<tc>, window_params = [{transform_indices = @transform_0, window_bounds = array<i64: 8, 8, 128>}, {pipeline_mode = #tpu.pipeline_mode<synchronous>, transform_indices = @transform_1, window_bounds = array<i64: 128, 512>}, {pipeline_mode = #tpu.pipeline_mode<synchronous>, transform_indices = @transform_2, window_bounds = array<i64: 1, 512>}, {pipeline_mode = #tpu.pipeline_mode<synchronous>, transform_indices = @transform_3, window_bounds = array<i64: 128, 512>}, {transform_indices = @transform_4, window_bounds = array<i64: 8, 8, 128>}, {transform_indices = @transform_5, window_bounds = array<i64: 8, 128>}, {transform_indices = @transform_6, window_bounds = array<i64: 8, 128>}]} {
    %c0_i32 = arith.constant 0 : i32
    %0 = arith.cmpi eq, %arg1, %c0_i32 : i32
    %1 = arith.extui %0 : i1 to i32
    %c0_i32_0 = arith.constant 0 : i32
    %2 = arith.cmpi ne, %1, %c0_i32_0 : i32
    scf.if %2 {
      %cst_135 = arith.constant 0.000000e+00 : f32
      %349 = vector.broadcast %cst_135 : f32 to vector<8x128xf32>
      %c0_136 = arith.constant 0 : index
      %c0_137 = arith.constant 0 : index
      %350 = vector.load %arg10[%c0_136, %c0_137] : memref<8x128xf32, #tpu.memory_space<vmem>>, vector<8x128xf32>
      tpu.vector_store %arg10[%c0_136, %c0_137], %349 {strides = array<i32>} : memref<8x128xf32, #tpu.memory_space<vmem>>, vector<8x128xf32>,
      %cst_138 = arith.constant 0.000000e+00 : f32
      %351 = vector.broadcast %cst_138 : f32 to vector<8x128xf32>
      %c0_139 = arith.constant 0 : index
      %c0_140 = arith.constant 0 : index
      %352 = vector.load %arg11[%c0_139, %c0_140] : memref<8x128xf32, #tpu.memory_space<vmem>>, vector<8x128xf32>
      tpu.vector_store %arg11[%c0_139, %c0_140], %351 {strides = array<i32>} : memref<8x128xf32, #tpu.memory_space<vmem>>, vector<8x128xf32>,
    } else {
    }
    %c0 = arith.constant 0 : index
    %c0_1 = arith.constant 0 : index
    %c0_2 = arith.constant 0 : index
    %3 = vector.load %arg2[%c0, %c0_1, %c0_2] : memref<8x8x128xbf16, #tpu.memory_space<vmem>>, vector<8x8x128xbf16>
    %4 = vector.shape_cast %3 : vector<8x8x128xbf16> to vector<64x128xbf16>
    %c0_3 = arith.constant 0 : index
    %c0_4 = arith.constant 0 : index
    %5 = vector.load %arg3[%c0_3, %c0_4] : memref<128x512xbf16, #tpu.memory_space<vmem>>, vector<128x512xbf16>
    %cst = arith.constant dense<0.000000e+00> : vector<64x512xf32>
    %6 = tpu.matmul %4, %5, %cst {dimension_numbers = #tpu.dot_dimension_numbers<[1], [0], [0], [1], [0, 0, 1, 1], [], []>} : vector<64x128xbf16>, vector<128x512xbf16>, vector<64x512xf32> -> vector<64x512xf32>
    %7 = vector.shape_cast %6 : vector<64x512xf32> to vector<8x8x512xf32>
    %c0_5 = arith.constant 0 : index
    %c0_6 = arith.constant 0 : index
    %8 = vector.load %arg4[%c0_5, %c0_6] : memref<1x512xf32, #tpu.memory_space<vmem>>, vector<1x512xf32>
    %9 = vector.shape_cast %8 : vector<1x512xf32> to vector<1x1x512xf32>
    %10 = vector.broadcast %9 : vector<1x1x512xf32> to vector<8x8x512xf32>
    %11 = arith.addf %7, %10 : vector<8x8x512xf32>
    %c0_7 = arith.constant 0 : index
    %c0_8 = arith.constant 0 : index
    %c0_9 = arith.constant 0 : index
    %12 = vector.load %arg9[%c0_7, %c0_8, %c0_9] : memref<8x8x512xf32, #tpu.memory_space<vmem>>, vector<8x8x512xf32>
    tpu.vector_store %arg9[%c0_7, %c0_8, %c0_9], %11 {strides = array<i32>} : memref<8x8x512xf32, #tpu.memory_space<vmem>>, vector<8x8x512xf32>,
    %c0_10 = arith.constant 0 : index
    %c0_11 = arith.constant 0 : index
    %13 = vector.load %arg5[%c0_10, %c0_11] : memref<128x512xbf16, #tpu.memory_space<vmem>>, vector<128x512xbf16>
    %c0_12 = arith.constant 0 : index
    %c0_13 = arith.constant 0 : index
    %14 = vector.load %arg10[%c0_12, %c0_13] : memref<8x128xf32, #tpu.memory_space<vmem>>, vector<8x128xf32>
    %c0_14 = arith.constant 0 : index
    %c0_15 = arith.constant 0 : index
    %15 = vector.load %arg11[%c0_14, %c0_15] : memref<8x128xf32, #tpu.memory_space<vmem>>, vector<8x128xf32>
    %c0_i32_16 = arith.constant 0 : i32
    %16 = arith.index_cast %c0_i32_16 : i32 to index
    %c0_17 = arith.constant 0 : index
    %c0_18 = arith.constant 0 : index
    %17 = vector.load %arg9[%16, %c0_17, %c0_18] : memref<8x8x512xf32, #tpu.memory_space<vmem>>, vector<1x8x512xf32>
    %18 = vector.shape_cast %17 : vector<1x8x512xf32> to vector<8x512xf32>
    %19 = arith.truncf %14 : vector<8x128xf32> to vector<8x128xbf16>
    %cst_19 = arith.constant dense<0.000000e+00> : vector<8x512xf32>
    %20 = tpu.matmul %19, %13, %cst_19 {dimension_numbers = #tpu.dot_dimension_numbers<[1], [0], [0], [1], [0, 0, 1, 1], [], []>} : vector<8x128xbf16>, vector<128x512xbf16>, vector<8x512xf32> -> vector<8x512xf32>
    %21 = arith.addf %18, %20 : vector<8x512xf32>
    %22 = vector.extract_strided_slice %21 {offsets = [0, 0], sizes = [8, 128], strides = [1, 1]} : vector<8x512xf32> to vector<8x128xf32>
    %cst_20 = arith.constant 5.000000e-01 : f32
    %23 = vector.broadcast %cst_20 : f32 to vector<8x128xf32>
    %24 = arith.mulf %23, %22 : vector<8x128xf32>
    %25 = math.tanh %24 : vector<8x128xf32>
    %cst_21 = arith.constant 5.000000e-01 : f32
    %26 = vector.broadcast %cst_21 : f32 to vector<8x128xf32>
    %27 = arith.mulf %26, %25 : vector<8x128xf32>
    %cst_22 = arith.constant 5.000000e-01 : f32
    %28 = vector.broadcast %cst_22 : f32 to vector<8x128xf32>
    %29 = arith.addf %27, %28 : vector<8x128xf32>
    %30 = vector.extract_strided_slice %21 {offsets = [0, 128], sizes = [8, 128], strides = [1, 1]} : vector<8x512xf32> to vector<8x128xf32>
    %cst_23 = arith.constant 5.000000e-01 : f32
    %31 = vector.broadcast %cst_23 : f32 to vector<8x128xf32>
    %32 = arith.mulf %31, %30 : vector<8x128xf32>
    %33 = math.tanh %32 : vector<8x128xf32>
    %cst_24 = arith.constant 5.000000e-01 : f32
    %34 = vector.broadcast %cst_24 : f32 to vector<8x128xf32>
    %35 = arith.mulf %34, %33 : vector<8x128xf32>
    %cst_25 = arith.constant 5.000000e-01 : f32
    %36 = vector.broadcast %cst_25 : f32 to vector<8x128xf32>
    %37 = arith.addf %35, %36 : vector<8x128xf32>
    %38 = vector.extract_strided_slice %21 {offsets = [0, 256], sizes = [8, 128], strides = [1, 1]} : vector<8x512xf32> to vector<8x128xf32>
    %39 = math.tanh %38 : vector<8x128xf32>
    %40 = vector.extract_strided_slice %21 {offsets = [0, 384], sizes = [8, 128], strides = [1, 1]} : vector<8x512xf32> to vector<8x128xf32>
    %cst_26 = arith.constant 5.000000e-01 : f32
    %41 = vector.broadcast %cst_26 : f32 to vector<8x128xf32>
    %42 = arith.mulf %41, %40 : vector<8x128xf32>
    %43 = math.tanh %42 : vector<8x128xf32>
    %cst_27 = arith.constant 5.000000e-01 : f32
    %44 = vector.broadcast %cst_27 : f32 to vector<8x128xf32>
    %45 = arith.mulf %44, %43 : vector<8x128xf32>
    %cst_28 = arith.constant 5.000000e-01 : f32
    %46 = vector.broadcast %cst_28 : f32 to vector<8x128xf32>
    %47 = arith.addf %45, %46 : vector<8x128xf32>
    %48 = arith.mulf %37, %15 : vector<8x128xf32>
    %49 = arith.mulf %29, %39 : vector<8x128xf32>
    %50 = arith.addf %48, %49 : vector<8x128xf32>
    %51 = math.tanh %50 : vector<8x128xf32>
    %52 = arith.mulf %47, %51 : vector<8x128xf32>
    %53 = arith.index_cast %c0_i32_16 : i32 to index
    %c0_29 = arith.constant 0 : index
    %c0_30 = arith.constant 0 : index
    %54 = vector.load %arg6[%53, %c0_29, %c0_30] : memref<8x8x128xf32, #tpu.memory_space<vmem>>, vector<1x8x128xf32>
    %55 = vector.shape_cast %54 : vector<1x8x128xf32> to vector<8x128xf32>
    %56 = vector.shape_cast %52 : vector<8x128xf32> to vector<1x8x128xf32>
    tpu.vector_store %arg6[%53, %c0_29, %c0_30], %56 {strides = array<i32>} : memref<8x8x128xf32, #tpu.memory_space<vmem>>, vector<1x8x128xf32>,
    %c1_i32 = arith.constant 1 : i32
    %57 = arith.index_cast %c1_i32 : i32 to index
    %c0_31 = arith.constant 0 : index
    %c0_32 = arith.constant 0 : index
    %58 = vector.load %arg9[%57, %c0_31, %c0_32] : memref<8x8x512xf32, #tpu.memory_space<vmem>>, vector<1x8x512xf32>
    %59 = vector.shape_cast %58 : vector<1x8x512xf32> to vector<8x512xf32>
    %60 = arith.truncf %52 : vector<8x128xf32> to vector<8x128xbf16>
    %cst_33 = arith.constant dense<0.000000e+00> : vector<8x512xf32>
    %61 = tpu.matmul %60, %13, %cst_33 {dimension_numbers = #tpu.dot_dimension_numbers<[1], [0], [0], [1], [0, 0, 1, 1], [], []>} : vector<8x128xbf16>, vector<128x512xbf16>, vector<8x512xf32> -> vector<8x512xf32>
    %62 = arith.addf %59, %61 : vector<8x512xf32>
    %63 = vector.extract_strided_slice %62 {offsets = [0, 0], sizes = [8, 128], strides = [1, 1]} : vector<8x512xf32> to vector<8x128xf32>
    %cst_34 = arith.constant 5.000000e-01 : f32
    %64 = vector.broadcast %cst_34 : f32 to vector<8x128xf32>
    %65 = arith.mulf %64, %63 : vector<8x128xf32>
    %66 = math.tanh %65 : vector<8x128xf32>
    %cst_35 = arith.constant 5.000000e-01 : f32
    %67 = vector.broadcast %cst_35 : f32 to vector<8x128xf32>
    %68 = arith.mulf %67, %66 : vector<8x128xf32>
    %cst_36 = arith.constant 5.000000e-01 : f32
    %69 = vector.broadcast %cst_36 : f32 to vector<8x128xf32>
    %70 = arith.addf %68, %69 : vector<8x128xf32>
    %71 = vector.extract_strided_slice %62 {offsets = [0, 128], sizes = [8, 128], strides = [1, 1]} : vector<8x512xf32> to vector<8x128xf32>
    %cst_37 = arith.constant 5.000000e-01 : f32
    %72 = vector.broadcast %cst_37 : f32 to vector<8x128xf32>
    %73 = arith.mulf %72, %71 : vector<8x128xf32>
    %74 = math.tanh %73 : vector<8x128xf32>
    %cst_38 = arith.constant 5.000000e-01 : f32
    %75 = vector.broadcast %cst_38 : f32 to vector<8x128xf32>
    %76 = arith.mulf %75, %74 : vector<8x128xf32>
    %cst_39 = arith.constant 5.000000e-01 : f32
    %77 = vector.broadcast %cst_39 : f32 to vector<8x128xf32>
    %78 = arith.addf %76, %77 : vector<8x128xf32>
    %79 = vector.extract_strided_slice %62 {offsets = [0, 256], sizes = [8, 128], strides = [1, 1]} : vector<8x512xf32> to vector<8x128xf32>
    %80 = math.tanh %79 : vector<8x128xf32>
    %81 = vector.extract_strided_slice %62 {offsets = [0, 384], sizes = [8, 128], strides = [1, 1]} : vector<8x512xf32> to vector<8x128xf32>
    %cst_40 = arith.constant 5.000000e-01 : f32
    %82 = vector.broadcast %cst_40 : f32 to vector<8x128xf32>
    %83 = arith.mulf %82, %81 : vector<8x128xf32>
    %84 = math.tanh %83 : vector<8x128xf32>
    %cst_41 = arith.constant 5.000000e-01 : f32
    %85 = vector.broadcast %cst_41 : f32 to vector<8x128xf32>
    %86 = arith.mulf %85, %84 : vector<8x128xf32>
    %cst_42 = arith.constant 5.000000e-01 : f32
    %87 = vector.broadcast %cst_42 : f32 to vector<8x128xf32>
    %88 = arith.addf %86, %87 : vector<8x128xf32>
    %89 = arith.mulf %78, %50 : vector<8x128xf32>
    %90 = arith.mulf %70, %80 : vector<8x128xf32>
    %91 = arith.addf %89, %90 : vector<8x128xf32>
    %92 = math.tanh %91 : vector<8x128xf32>
    %93 = arith.mulf %88, %92 : vector<8x128xf32>
    %94 = arith.index_cast %c1_i32 : i32 to index
    %c0_43 = arith.constant 0 : index
    %c0_44 = arith.constant 0 : index
    %95 = vector.load %arg6[%94, %c0_43, %c0_44] : memref<8x8x128xf32, #tpu.memory_space<vmem>>, vector<1x8x128xf32>
    %96 = vector.shape_cast %95 : vector<1x8x128xf32> to vector<8x128xf32>
    %97 = vector.shape_cast %93 : vector<8x128xf32> to vector<1x8x128xf32>
    tpu.vector_store %arg6[%94, %c0_43, %c0_44], %97 {strides = array<i32>} : memref<8x8x128xf32, #tpu.memory_space<vmem>>, vector<1x8x128xf32>,
    %c2_i32 = arith.constant 2 : i32
    %98 = arith.index_cast %c2_i32 : i32 to index
    %c0_45 = arith.constant 0 : index
    %c0_46 = arith.constant 0 : index
    %99 = vector.load %arg9[%98, %c0_45, %c0_46] : memref<8x8x512xf32, #tpu.memory_space<vmem>>, vector<1x8x512xf32>
    %100 = vector.shape_cast %99 : vector<1x8x512xf32> to vector<8x512xf32>
    %101 = arith.truncf %93 : vector<8x128xf32> to vector<8x128xbf16>
    %cst_47 = arith.constant dense<0.000000e+00> : vector<8x512xf32>
    %102 = tpu.matmul %101, %13, %cst_47 {dimension_numbers = #tpu.dot_dimension_numbers<[1], [0], [0], [1], [0, 0, 1, 1], [], []>} : vector<8x128xbf16>, vector<128x512xbf16>, vector<8x512xf32> -> vector<8x512xf32>
    %103 = arith.addf %100, %102 : vector<8x512xf32>
    %104 = vector.extract_strided_slice %103 {offsets = [0, 0], sizes = [8, 128], strides = [1, 1]} : vector<8x512xf32> to vector<8x128xf32>
    %cst_48 = arith.constant 5.000000e-01 : f32
    %105 = vector.broadcast %cst_48 : f32 to vector<8x128xf32>
    %106 = arith.mulf %105, %104 : vector<8x128xf32>
    %107 = math.tanh %106 : vector<8x128xf32>
    %cst_49 = arith.constant 5.000000e-01 : f32
    %108 = vector.broadcast %cst_49 : f32 to vector<8x128xf32>
    %109 = arith.mulf %108, %107 : vector<8x128xf32>
    %cst_50 = arith.constant 5.000000e-01 : f32
    %110 = vector.broadcast %cst_50 : f32 to vector<8x128xf32>
    %111 = arith.addf %109, %110 : vector<8x128xf32>
    %112 = vector.extract_strided_slice %103 {offsets = [0, 128], sizes = [8, 128], strides = [1, 1]} : vector<8x512xf32> to vector<8x128xf32>
    %cst_51 = arith.constant 5.000000e-01 : f32
    %113 = vector.broadcast %cst_51 : f32 to vector<8x128xf32>
    %114 = arith.mulf %113, %112 : vector<8x128xf32>
    %115 = math.tanh %114 : vector<8x128xf32>
    %cst_52 = arith.constant 5.000000e-01 : f32
    %116 = vector.broadcast %cst_52 : f32 to vector<8x128xf32>
    %117 = arith.mulf %116, %115 : vector<8x128xf32>
    %cst_53 = arith.constant 5.000000e-01 : f32
    %118 = vector.broadcast %cst_53 : f32 to vector<8x128xf32>
    %119 = arith.addf %117, %118 : vector<8x128xf32>
    %120 = vector.extract_strided_slice %103 {offsets = [0, 256], sizes = [8, 128], strides = [1, 1]} : vector<8x512xf32> to vector<8x128xf32>
    %121 = math.tanh %120 : vector<8x128xf32>
    %122 = vector.extract_strided_slice %103 {offsets = [0, 384], sizes = [8, 128], strides = [1, 1]} : vector<8x512xf32> to vector<8x128xf32>
    %cst_54 = arith.constant 5.000000e-01 : f32
    %123 = vector.broadcast %cst_54 : f32 to vector<8x128xf32>
    %124 = arith.mulf %123, %122 : vector<8x128xf32>
    %125 = math.tanh %124 : vector<8x128xf32>
    %cst_55 = arith.constant 5.000000e-01 : f32
    %126 = vector.broadcast %cst_55 : f32 to vector<8x128xf32>
    %127 = arith.mulf %126, %125 : vector<8x128xf32>
    %cst_56 = arith.constant 5.000000e-01 : f32
    %128 = vector.broadcast %cst_56 : f32 to vector<8x128xf32>
    %129 = arith.addf %127, %128 : vector<8x128xf32>
    %130 = arith.mulf %119, %91 : vector<8x128xf32>
    %131 = arith.mulf %111, %121 : vector<8x128xf32>
    %132 = arith.addf %130, %131 : vector<8x128xf32>
    %133 = math.tanh %132 : vector<8x128xf32>
    %134 = arith.mulf %129, %133 : vector<8x128xf32>
    %135 = arith.index_cast %c2_i32 : i32 to index
    %c0_57 = arith.constant 0 : index
    %c0_58 = arith.constant 0 : index
    %136 = vector.load %arg6[%135, %c0_57, %c0_58] : memref<8x8x128xf32, #tpu.memory_space<vmem>>, vector<1x8x128xf32>
    %137 = vector.shape_cast %136 : vector<1x8x128xf32> to vector<8x128xf32>
    %138 = vector.shape_cast %134 : vector<8x128xf32> to vector<1x8x128xf32>
    tpu.vector_store %arg6[%135, %c0_57, %c0_58], %138 {strides = array<i32>} : memref<8x8x128xf32, #tpu.memory_space<vmem>>, vector<1x8x128xf32>,
    %c3_i32 = arith.constant 3 : i32
    %139 = arith.index_cast %c3_i32 : i32 to index
    %c0_59 = arith.constant 0 : index
    %c0_60 = arith.constant 0 : index
    %140 = vector.load %arg9[%139, %c0_59, %c0_60] : memref<8x8x512xf32, #tpu.memory_space<vmem>>, vector<1x8x512xf32>
    %141 = vector.shape_cast %140 : vector<1x8x512xf32> to vector<8x512xf32>
    %142 = arith.truncf %134 : vector<8x128xf32> to vector<8x128xbf16>
    %cst_61 = arith.constant dense<0.000000e+00> : vector<8x512xf32>
    %143 = tpu.matmul %142, %13, %cst_61 {dimension_numbers = #tpu.dot_dimension_numbers<[1], [0], [0], [1], [0, 0, 1, 1], [], []>} : vector<8x128xbf16>, vector<128x512xbf16>, vector<8x512xf32> -> vector<8x512xf32>
    %144 = arith.addf %141, %143 : vector<8x512xf32>
    %145 = vector.extract_strided_slice %144 {offsets = [0, 0], sizes = [8, 128], strides = [1, 1]} : vector<8x512xf32> to vector<8x128xf32>
    %cst_62 = arith.constant 5.000000e-01 : f32
    %146 = vector.broadcast %cst_62 : f32 to vector<8x128xf32>
    %147 = arith.mulf %146, %145 : vector<8x128xf32>
    %148 = math.tanh %147 : vector<8x128xf32>
    %cst_63 = arith.constant 5.000000e-01 : f32
    %149 = vector.broadcast %cst_63 : f32 to vector<8x128xf32>
    %150 = arith.mulf %149, %148 : vector<8x128xf32>
    %cst_64 = arith.constant 5.000000e-01 : f32
    %151 = vector.broadcast %cst_64 : f32 to vector<8x128xf32>
    %152 = arith.addf %150, %151 : vector<8x128xf32>
    %153 = vector.extract_strided_slice %144 {offsets = [0, 128], sizes = [8, 128], strides = [1, 1]} : vector<8x512xf32> to vector<8x128xf32>
    %cst_65 = arith.constant 5.000000e-01 : f32
    %154 = vector.broadcast %cst_65 : f32 to vector<8x128xf32>
    %155 = arith.mulf %154, %153 : vector<8x128xf32>
    %156 = math.tanh %155 : vector<8x128xf32>
    %cst_66 = arith.constant 5.000000e-01 : f32
    %157 = vector.broadcast %cst_66 : f32 to vector<8x128xf32>
    %158 = arith.mulf %157, %156 : vector<8x128xf32>
    %cst_67 = arith.constant 5.000000e-01 : f32
    %159 = vector.broadcast %cst_67 : f32 to vector<8x128xf32>
    %160 = arith.addf %158, %159 : vector<8x128xf32>
    %161 = vector.extract_strided_slice %144 {offsets = [0, 256], sizes = [8, 128], strides = [1, 1]} : vector<8x512xf32> to vector<8x128xf32>
    %162 = math.tanh %161 : vector<8x128xf32>
    %163 = vector.extract_strided_slice %144 {offsets = [0, 384], sizes = [8, 128], strides = [1, 1]} : vector<8x512xf32> to vector<8x128xf32>
    %cst_68 = arith.constant 5.000000e-01 : f32
    %164 = vector.broadcast %cst_68 : f32 to vector<8x128xf32>
    %165 = arith.mulf %164, %163 : vector<8x128xf32>
    %166 = math.tanh %165 : vector<8x128xf32>
    %cst_69 = arith.constant 5.000000e-01 : f32
    %167 = vector.broadcast %cst_69 : f32 to vector<8x128xf32>
    %168 = arith.mulf %167, %166 : vector<8x128xf32>
    %cst_70 = arith.constant 5.000000e-01 : f32
    %169 = vector.broadcast %cst_70 : f32 to vector<8x128xf32>
    %170 = arith.addf %168, %169 : vector<8x128xf32>
    %171 = arith.mulf %160, %132 : vector<8x128xf32>
    %172 = arith.mulf %152, %162 : vector<8x128xf32>
    %173 = arith.addf %171, %172 : vector<8x128xf32>
    %174 = math.tanh %173 : vector<8x128xf32>
    %175 = arith.mulf %170, %174 : vector<8x128xf32>
    %176 = arith.index_cast %c3_i32 : i32 to index
    %c0_71 = arith.constant 0 : index
    %c0_72 = arith.constant 0 : index
    %177 = vector.load %arg6[%176, %c0_71, %c0_72] : memref<8x8x128xf32, #tpu.memory_space<vmem>>, vector<1x8x128xf32>
    %178 = vector.shape_cast %177 : vector<1x8x128xf32> to vector<8x128xf32>
    %179 = vector.shape_cast %175 : vector<8x128xf32> to vector<1x8x128xf32>
    tpu.vector_store %arg6[%176, %c0_71, %c0_72], %179 {strides = array<i32>} : memref<8x8x128xf32, #tpu.memory_space<vmem>>, vector<1x8x128xf32>,
    %c4_i32 = arith.constant 4 : i32
    %180 = arith.index_cast %c4_i32 : i32 to index
    %c0_73 = arith.constant 0 : index
    %c0_74 = arith.constant 0 : index
    %181 = vector.load %arg9[%180, %c0_73, %c0_74] : memref<8x8x512xf32, #tpu.memory_space<vmem>>, vector<1x8x512xf32>
    %182 = vector.shape_cast %181 : vector<1x8x512xf32> to vector<8x512xf32>
    %183 = arith.truncf %175 : vector<8x128xf32> to vector<8x128xbf16>
    %cst_75 = arith.constant dense<0.000000e+00> : vector<8x512xf32>
    %184 = tpu.matmul %183, %13, %cst_75 {dimension_numbers = #tpu.dot_dimension_numbers<[1], [0], [0], [1], [0, 0, 1, 1], [], []>} : vector<8x128xbf16>, vector<128x512xbf16>, vector<8x512xf32> -> vector<8x512xf32>
    %185 = arith.addf %182, %184 : vector<8x512xf32>
    %186 = vector.extract_strided_slice %185 {offsets = [0, 0], sizes = [8, 128], strides = [1, 1]} : vector<8x512xf32> to vector<8x128xf32>
    %cst_76 = arith.constant 5.000000e-01 : f32
    %187 = vector.broadcast %cst_76 : f32 to vector<8x128xf32>
    %188 = arith.mulf %187, %186 : vector<8x128xf32>
    %189 = math.tanh %188 : vector<8x128xf32>
    %cst_77 = arith.constant 5.000000e-01 : f32
    %190 = vector.broadcast %cst_77 : f32 to vector<8x128xf32>
    %191 = arith.mulf %190, %189 : vector<8x128xf32>
    %cst_78 = arith.constant 5.000000e-01 : f32
    %192 = vector.broadcast %cst_78 : f32 to vector<8x128xf32>
    %193 = arith.addf %191, %192 : vector<8x128xf32>
    %194 = vector.extract_strided_slice %185 {offsets = [0, 128], sizes = [8, 128], strides = [1, 1]} : vector<8x512xf32> to vector<8x128xf32>
    %cst_79 = arith.constant 5.000000e-01 : f32
    %195 = vector.broadcast %cst_79 : f32 to vector<8x128xf32>
    %196 = arith.mulf %195, %194 : vector<8x128xf32>
    %197 = math.tanh %196 : vector<8x128xf32>
    %cst_80 = arith.constant 5.000000e-01 : f32
    %198 = vector.broadcast %cst_80 : f32 to vector<8x128xf32>
    %199 = arith.mulf %198, %197 : vector<8x128xf32>
    %cst_81 = arith.constant 5.000000e-01 : f32
    %200 = vector.broadcast %cst_81 : f32 to vector<8x128xf32>
    %201 = arith.addf %199, %200 : vector<8x128xf32>
    %202 = vector.extract_strided_slice %185 {offsets = [0, 256], sizes = [8, 128], strides = [1, 1]} : vector<8x512xf32> to vector<8x128xf32>
    %203 = math.tanh %202 : vector<8x128xf32>
    %204 = vector.extract_strided_slice %185 {offsets = [0, 384], sizes = [8, 128], strides = [1, 1]} : vector<8x512xf32> to vector<8x128xf32>
    %cst_82 = arith.constant 5.000000e-01 : f32
    %205 = vector.broadcast %cst_82 : f32 to vector<8x128xf32>
    %206 = arith.mulf %205, %204 : vector<8x128xf32>
    %207 = math.tanh %206 : vector<8x128xf32>
    %cst_83 = arith.constant 5.000000e-01 : f32
    %208 = vector.broadcast %cst_83 : f32 to vector<8x128xf32>
    %209 = arith.mulf %208, %207 : vector<8x128xf32>
    %cst_84 = arith.constant 5.000000e-01 : f32
    %210 = vector.broadcast %cst_84 : f32 to vector<8x128xf32>
    %211 = arith.addf %209, %210 : vector<8x128xf32>
    %212 = arith.mulf %201, %173 : vector<8x128xf32>
    %213 = arith.mulf %193, %203 : vector<8x128xf32>
    %214 = arith.addf %212, %213 : vector<8x128xf32>
    %215 = math.tanh %214 : vector<8x128xf32>
    %216 = arith.mulf %211, %215 : vector<8x128xf32>
    %217 = arith.index_cast %c4_i32 : i32 to index
    %c0_85 = arith.constant 0 : index
    %c0_86 = arith.constant 0 : index
    %218 = vector.load %arg6[%217, %c0_85, %c0_86] : memref<8x8x128xf32, #tpu.memory_space<vmem>>, vector<1x8x128xf32>
    %219 = vector.shape_cast %218 : vector<1x8x128xf32> to vector<8x128xf32>
    %220 = vector.shape_cast %216 : vector<8x128xf32> to vector<1x8x128xf32>
    tpu.vector_store %arg6[%217, %c0_85, %c0_86], %220 {strides = array<i32>} : memref<8x8x128xf32, #tpu.memory_space<vmem>>, vector<1x8x128xf32>,
    %c5_i32 = arith.constant 5 : i32
    %221 = arith.index_cast %c5_i32 : i32 to index
    %c0_87 = arith.constant 0 : index
    %c0_88 = arith.constant 0 : index
    %222 = vector.load %arg9[%221, %c0_87, %c0_88] : memref<8x8x512xf32, #tpu.memory_space<vmem>>, vector<1x8x512xf32>
    %223 = vector.shape_cast %222 : vector<1x8x512xf32> to vector<8x512xf32>
    %224 = arith.truncf %216 : vector<8x128xf32> to vector<8x128xbf16>
    %cst_89 = arith.constant dense<0.000000e+00> : vector<8x512xf32>
    %225 = tpu.matmul %224, %13, %cst_89 {dimension_numbers = #tpu.dot_dimension_numbers<[1], [0], [0], [1], [0, 0, 1, 1], [], []>} : vector<8x128xbf16>, vector<128x512xbf16>, vector<8x512xf32> -> vector<8x512xf32>
    %226 = arith.addf %223, %225 : vector<8x512xf32>
    %227 = vector.extract_strided_slice %226 {offsets = [0, 0], sizes = [8, 128], strides = [1, 1]} : vector<8x512xf32> to vector<8x128xf32>
    %cst_90 = arith.constant 5.000000e-01 : f32
    %228 = vector.broadcast %cst_90 : f32 to vector<8x128xf32>
    %229 = arith.mulf %228, %227 : vector<8x128xf32>
    %230 = math.tanh %229 : vector<8x128xf32>
    %cst_91 = arith.constant 5.000000e-01 : f32
    %231 = vector.broadcast %cst_91 : f32 to vector<8x128xf32>
    %232 = arith.mulf %231, %230 : vector<8x128xf32>
    %cst_92 = arith.constant 5.000000e-01 : f32
    %233 = vector.broadcast %cst_92 : f32 to vector<8x128xf32>
    %234 = arith.addf %232, %233 : vector<8x128xf32>
    %235 = vector.extract_strided_slice %226 {offsets = [0, 128], sizes = [8, 128], strides = [1, 1]} : vector<8x512xf32> to vector<8x128xf32>
    %cst_93 = arith.constant 5.000000e-01 : f32
    %236 = vector.broadcast %cst_93 : f32 to vector<8x128xf32>
    %237 = arith.mulf %236, %235 : vector<8x128xf32>
    %238 = math.tanh %237 : vector<8x128xf32>
    %cst_94 = arith.constant 5.000000e-01 : f32
    %239 = vector.broadcast %cst_94 : f32 to vector<8x128xf32>
    %240 = arith.mulf %239, %238 : vector<8x128xf32>
    %cst_95 = arith.constant 5.000000e-01 : f32
    %241 = vector.broadcast %cst_95 : f32 to vector<8x128xf32>
    %242 = arith.addf %240, %241 : vector<8x128xf32>
    %243 = vector.extract_strided_slice %226 {offsets = [0, 256], sizes = [8, 128], strides = [1, 1]} : vector<8x512xf32> to vector<8x128xf32>
    %244 = math.tanh %243 : vector<8x128xf32>
    %245 = vector.extract_strided_slice %226 {offsets = [0, 384], sizes = [8, 128], strides = [1, 1]} : vector<8x512xf32> to vector<8x128xf32>
    %cst_96 = arith.constant 5.000000e-01 : f32
    %246 = vector.broadcast %cst_96 : f32 to vector<8x128xf32>
    %247 = arith.mulf %246, %245 : vector<8x128xf32>
    %248 = math.tanh %247 : vector<8x128xf32>
    %cst_97 = arith.constant 5.000000e-01 : f32
    %249 = vector.broadcast %cst_97 : f32 to vector<8x128xf32>
    %250 = arith.mulf %249, %248 : vector<8x128xf32>
    %cst_98 = arith.constant 5.000000e-01 : f32
    %251 = vector.broadcast %cst_98 : f32 to vector<8x128xf32>
    %252 = arith.addf %250, %251 : vector<8x128xf32>
    %253 = arith.mulf %242, %214 : vector<8x128xf32>
    %254 = arith.mulf %234, %244 : vector<8x128xf32>
    %255 = arith.addf %253, %254 : vector<8x128xf32>
    %256 = math.tanh %255 : vector<8x128xf32>
    %257 = arith.mulf %252, %256 : vector<8x128xf32>
    %258 = arith.index_cast %c5_i32 : i32 to index
    %c0_99 = arith.constant 0 : index
    %c0_100 = arith.constant 0 : index
    %259 = vector.load %arg6[%258, %c0_99, %c0_100] : memref<8x8x128xf32, #tpu.memory_space<vmem>>, vector<1x8x128xf32>
    %260 = vector.shape_cast %259 : vector<1x8x128xf32> to vector<8x128xf32>
    %261 = vector.shape_cast %257 : vector<8x128xf32> to vector<1x8x128xf32>
    tpu.vector_store %arg6[%258, %c0_99, %c0_100], %261 {strides = array<i32>} : memref<8x8x128xf32, #tpu.memory_space<vmem>>, vector<1x8x128xf32>,
    %c6_i32 = arith.constant 6 : i32
    %262 = arith.index_cast %c6_i32 : i32 to index
    %c0_101 = arith.constant 0 : index
    %c0_102 = arith.constant 0 : index
    %263 = vector.load %arg9[%262, %c0_101, %c0_102] : memref<8x8x512xf32, #tpu.memory_space<vmem>>, vector<1x8x512xf32>
    %264 = vector.shape_cast %263 : vector<1x8x512xf32> to vector<8x512xf32>
    %265 = arith.truncf %257 : vector<8x128xf32> to vector<8x128xbf16>
    %cst_103 = arith.constant dense<0.000000e+00> : vector<8x512xf32>
    %266 = tpu.matmul %265, %13, %cst_103 {dimension_numbers = #tpu.dot_dimension_numbers<[1], [0], [0], [1], [0, 0, 1, 1], [], []>} : vector<8x128xbf16>, vector<128x512xbf16>, vector<8x512xf32> -> vector<8x512xf32>
    %267 = arith.addf %264, %266 : vector<8x512xf32>
    %268 = vector.extract_strided_slice %267 {offsets = [0, 0], sizes = [8, 128], strides = [1, 1]} : vector<8x512xf32> to vector<8x128xf32>
    %cst_104 = arith.constant 5.000000e-01 : f32
    %269 = vector.broadcast %cst_104 : f32 to vector<8x128xf32>
    %270 = arith.mulf %269, %268 : vector<8x128xf32>
    %271 = math.tanh %270 : vector<8x128xf32>
    %cst_105 = arith.constant 5.000000e-01 : f32
    %272 = vector.broadcast %cst_105 : f32 to vector<8x128xf32>
    %273 = arith.mulf %272, %271 : vector<8x128xf32>
    %cst_106 = arith.constant 5.000000e-01 : f32
    %274 = vector.broadcast %cst_106 : f32 to vector<8x128xf32>
    %275 = arith.addf %273, %274 : vector<8x128xf32>
    %276 = vector.extract_strided_slice %267 {offsets = [0, 128], sizes = [8, 128], strides = [1, 1]} : vector<8x512xf32> to vector<8x128xf32>
    %cst_107 = arith.constant 5.000000e-01 : f32
    %277 = vector.broadcast %cst_107 : f32 to vector<8x128xf32>
    %278 = arith.mulf %277, %276 : vector<8x128xf32>
    %279 = math.tanh %278 : vector<8x128xf32>
    %cst_108 = arith.constant 5.000000e-01 : f32
    %280 = vector.broadcast %cst_108 : f32 to vector<8x128xf32>
    %281 = arith.mulf %280, %279 : vector<8x128xf32>
    %cst_109 = arith.constant 5.000000e-01 : f32
    %282 = vector.broadcast %cst_109 : f32 to vector<8x128xf32>
    %283 = arith.addf %281, %282 : vector<8x128xf32>
    %284 = vector.extract_strided_slice %267 {offsets = [0, 256], sizes = [8, 128], strides = [1, 1]} : vector<8x512xf32> to vector<8x128xf32>
    %285 = math.tanh %284 : vector<8x128xf32>
    %286 = vector.extract_strided_slice %267 {offsets = [0, 384], sizes = [8, 128], strides = [1, 1]} : vector<8x512xf32> to vector<8x128xf32>
    %cst_110 = arith.constant 5.000000e-01 : f32
    %287 = vector.broadcast %cst_110 : f32 to vector<8x128xf32>
    %288 = arith.mulf %287, %286 : vector<8x128xf32>
    %289 = math.tanh %288 : vector<8x128xf32>
    %cst_111 = arith.constant 5.000000e-01 : f32
    %290 = vector.broadcast %cst_111 : f32 to vector<8x128xf32>
    %291 = arith.mulf %290, %289 : vector<8x128xf32>
    %cst_112 = arith.constant 5.000000e-01 : f32
    %292 = vector.broadcast %cst_112 : f32 to vector<8x128xf32>
    %293 = arith.addf %291, %292 : vector<8x128xf32>
    %294 = arith.mulf %283, %255 : vector<8x128xf32>
    %295 = arith.mulf %275, %285 : vector<8x128xf32>
    %296 = arith.addf %294, %295 : vector<8x128xf32>
    %297 = math.tanh %296 : vector<8x128xf32>
    %298 = arith.mulf %293, %297 : vector<8x128xf32>
    %299 = arith.index_cast %c6_i32 : i32 to index
    %c0_113 = arith.constant 0 : index
    %c0_114 = arith.constant 0 : index
    %300 = vector.load %arg6[%299, %c0_113, %c0_114] : memref<8x8x128xf32, #tpu.memory_space<vmem>>, vector<1x8x128xf32>
    %301 = vector.shape_cast %300 : vector<1x8x128xf32> to vector<8x128xf32>
    %302 = vector.shape_cast %298 : vector<8x128xf32> to vector<1x8x128xf32>
    tpu.vector_store %arg6[%299, %c0_113, %c0_114], %302 {strides = array<i32>} : memref<8x8x128xf32, #tpu.memory_space<vmem>>, vector<1x8x128xf32>,
    %c7_i32 = arith.constant 7 : i32
    %303 = arith.index_cast %c7_i32 : i32 to index
    %c0_115 = arith.constant 0 : index
    %c0_116 = arith.constant 0 : index
    %304 = vector.load %arg9[%303, %c0_115, %c0_116] : memref<8x8x512xf32, #tpu.memory_space<vmem>>, vector<1x8x512xf32>
    %305 = vector.shape_cast %304 : vector<1x8x512xf32> to vector<8x512xf32>
    %306 = arith.truncf %298 : vector<8x128xf32> to vector<8x128xbf16>
    %cst_117 = arith.constant dense<0.000000e+00> : vector<8x512xf32>
    %307 = tpu.matmul %306, %13, %cst_117 {dimension_numbers = #tpu.dot_dimension_numbers<[1], [0], [0], [1], [0, 0, 1, 1], [], []>} : vector<8x128xbf16>, vector<128x512xbf16>, vector<8x512xf32> -> vector<8x512xf32>
    %308 = arith.addf %305, %307 : vector<8x512xf32>
    %309 = vector.extract_strided_slice %308 {offsets = [0, 0], sizes = [8, 128], strides = [1, 1]} : vector<8x512xf32> to vector<8x128xf32>
    %cst_118 = arith.constant 5.000000e-01 : f32
    %310 = vector.broadcast %cst_118 : f32 to vector<8x128xf32>
    %311 = arith.mulf %310, %309 : vector<8x128xf32>
    %312 = math.tanh %311 : vector<8x128xf32>
    %cst_119 = arith.constant 5.000000e-01 : f32
    %313 = vector.broadcast %cst_119 : f32 to vector<8x128xf32>
    %314 = arith.mulf %313, %312 : vector<8x128xf32>
    %cst_120 = arith.constant 5.000000e-01 : f32
    %315 = vector.broadcast %cst_120 : f32 to vector<8x128xf32>
    %316 = arith.addf %314, %315 : vector<8x128xf32>
    %317 = vector.extract_strided_slice %308 {offsets = [0, 128], sizes = [8, 128], strides = [1, 1]} : vector<8x512xf32> to vector<8x128xf32>
    %cst_121 = arith.constant 5.000000e-01 : f32
    %318 = vector.broadcast %cst_121 : f32 to vector<8x128xf32>
    %319 = arith.mulf %318, %317 : vector<8x128xf32>
    %320 = math.tanh %319 : vector<8x128xf32>
    %cst_122 = arith.constant 5.000000e-01 : f32
    %321 = vector.broadcast %cst_122 : f32 to vector<8x128xf32>
    %322 = arith.mulf %321, %320 : vector<8x128xf32>
    %cst_123 = arith.constant 5.000000e-01 : f32
    %323 = vector.broadcast %cst_123 : f32 to vector<8x128xf32>
    %324 = arith.addf %322, %323 : vector<8x128xf32>
    %325 = vector.extract_strided_slice %308 {offsets = [0, 256], sizes = [8, 128], strides = [1, 1]} : vector<8x512xf32> to vector<8x128xf32>
    %326 = math.tanh %325 : vector<8x128xf32>
    %327 = vector.extract_strided_slice %308 {offsets = [0, 384], sizes = [8, 128], strides = [1, 1]} : vector<8x512xf32> to vector<8x128xf32>
    %cst_124 = arith.constant 5.000000e-01 : f32
    %328 = vector.broadcast %cst_124 : f32 to vector<8x128xf32>
    %329 = arith.mulf %328, %327 : vector<8x128xf32>
    %330 = math.tanh %329 : vector<8x128xf32>
    %cst_125 = arith.constant 5.000000e-01 : f32
    %331 = vector.broadcast %cst_125 : f32 to vector<8x128xf32>
    %332 = arith.mulf %331, %330 : vector<8x128xf32>
    %cst_126 = arith.constant 5.000000e-01 : f32
    %333 = vector.broadcast %cst_126 : f32 to vector<8x128xf32>
    %334 = arith.addf %332, %333 : vector<8x128xf32>
    %335 = arith.mulf %324, %296 : vector<8x128xf32>
    %336 = arith.mulf %316, %326 : vector<8x128xf32>
    %337 = arith.addf %335, %336 : vector<8x128xf32>
    %338 = math.tanh %337 : vector<8x128xf32>
    %339 = arith.mulf %334, %338 : vector<8x128xf32>
    %340 = arith.index_cast %c7_i32 : i32 to index
    %c0_127 = arith.constant 0 : index
    %c0_128 = arith.constant 0 : index
    %341 = vector.load %arg6[%340, %c0_127, %c0_128] : memref<8x8x128xf32, #tpu.memory_space<vmem>>, vector<1x8x128xf32>
    %342 = vector.shape_cast %341 : vector<1x8x128xf32> to vector<8x128xf32>
    %343 = vector.shape_cast %339 : vector<8x128xf32> to vector<1x8x128xf32>
    tpu.vector_store %arg6[%340, %c0_127, %c0_128], %343 {strides = array<i32>} : memref<8x8x128xf32, #tpu.memory_space<vmem>>, vector<1x8x128xf32>,
    %c8_i32 = arith.constant 8 : i32
    %c0_129 = arith.constant 0 : index
    %c0_130 = arith.constant 0 : index
    %344 = vector.load %arg10[%c0_129, %c0_130] : memref<8x128xf32, #tpu.memory_space<vmem>>, vector<8x128xf32>
    tpu.vector_store %arg10[%c0_129, %c0_130], %339 {strides = array<i32>} : memref<8x128xf32, #tpu.memory_space<vmem>>, vector<8x128xf32>,
    %c0_131 = arith.constant 0 : index
    %c0_132 = arith.constant 0 : index
    %345 = vector.load %arg11[%c0_131, %c0_132] : memref<8x128xf32, #tpu.memory_space<vmem>>, vector<8x128xf32>
    tpu.vector_store %arg11[%c0_131, %c0_132], %337 {strides = array<i32>} : memref<8x128xf32, #tpu.memory_space<vmem>>, vector<8x128xf32>,
    %c0_i32_133 = arith.constant 0 : i32
    %346 = arith.cmpi eq, %arg1, %c0_i32_133 : i32
    %347 = arith.extui %346 : i1 to i32
    %c0_i32_134 = arith.constant 0 : i32
    %348 = arith.cmpi ne, %347, %c0_i32_134 : i32
    scf.if %348 {
      %c0_135 = arith.constant 0 : index
      %c0_136 = arith.constant 0 : index
      %349 = vector.load %arg7[%c0_135, %c0_136] : memref<8x128xf32, #tpu.memory_space<vmem>>, vector<8x128xf32>
      tpu.vector_store %arg7[%c0_135, %c0_136], %339 {strides = array<i32>} : memref<8x128xf32, #tpu.memory_space<vmem>>, vector<8x128xf32>,
      %c0_137 = arith.constant 0 : index
      %c0_138 = arith.constant 0 : index
      %350 = vector.load %arg8[%c0_137, %c0_138] : memref<8x128xf32, #tpu.memory_space<vmem>>, vector<8x128xf32>
      tpu.vector_store %arg8[%c0_137, %c0_138], %337 {strides = array<i32>} : memref<8x128xf32, #tpu.memory_space<vmem>>, vector<8x128xf32>,
    } else {
    }
    return
  }
  func.func @transform_0(%arg0: i32, %arg1: i32) -> (i32, i32, i32) {
    %c0_i32 = arith.constant 0 : i32
    %c0_i32_0 = arith.constant 0 : i32
    return %arg1, %arg0, %c0_i32 : i32, i32, i32
  }
  func.func @transform_1(%arg0: i32, %arg1: i32) -> (i32, i32) {
    %c0_i32 = arith.constant 0 : i32
    %c0_i32_0 = arith.constant 0 : i32
    %c0_i32_1 = arith.constant 0 : i32
    return %c0_i32, %c0_i32_0 : i32, i32
  }
  func.func @transform_2(%arg0: i32, %arg1: i32) -> (i32, i32) {
    %c0_i32 = arith.constant 0 : i32
    %c0_i32_0 = arith.constant 0 : i32
    %c0_i32_1 = arith.constant 0 : i32
    return %c0_i32, %c0_i32_0 : i32, i32
  }
  func.func @transform_3(%arg0: i32, %arg1: i32) -> (i32, i32) {
    %c0_i32 = arith.constant 0 : i32
    %c0_i32_0 = arith.constant 0 : i32
    %c0_i32_1 = arith.constant 0 : i32
    return %c0_i32, %c0_i32_0 : i32, i32
  }
  func.func @transform_4(%arg0: i32, %arg1: i32) -> (i32, i32, i32) {
    %c0_i32 = arith.constant 0 : i32
    %c0_i32_0 = arith.constant 0 : i32
    return %arg1, %arg0, %c0_i32 : i32, i32, i32
  }
  func.func @transform_5(%arg0: i32, %arg1: i32) -> (i32, i32) {
    %c0_i32 = arith.constant 0 : i32
    %c0_i32_0 = arith.constant 0 : i32
    return %arg0, %c0_i32 : i32, i32
  }
  func.func @transform_6(%arg0: i32, %arg1: i32) -> (i32, i32) {
    %c0_i32 = arith.constant 0 : i32
    %c0_i32_0 = arith.constant 0 : i32
    return %arg0, %c0_i32 : i32, i32
  }
}

</mosaic_0001>

<llo_original>
// kernel: encoder_forward.3
$region0: #{encoder_forward.3}
  #allocation0 [shape = 'u32[]', space=smem, size = 0x4, offset = 0x4, fixed_abs, tag = 'smem constant byte address 0x4 - core index']
  #allocation1 [shape = 'u32[144,128]{1,0:T(1,128)}', space=vmem, size = 0x12000, scoped, tag = 'internal scratch']
  #allocation2 [shape = 'f32[8,8,512]{2,1,0:T(8,128)}', space=vmem, size = 0x20000, scoped, tag = 'scratch operand']
  #allocation3 [shape = 'f32[8,128]{1,0:T(8,128)}', space=vmem, size = 0x1000, scoped, tag = 'scratch operand']
  #allocation4 [shape = 'f32[8,128]{1,0:T(8,128)}', space=vmem, size = 0x1000, scoped, tag = 'scratch operand']
  %s0 = inlined_call_operand.vmem [shape: bf16[8,8,128], index: 0, kind: input, shape index: {}]
  %s1 = inlined_call_operand.vmem [shape: bf16[128,512], index: 1, kind: input, shape index: {}]
  %s2 = inlined_call_operand.vmem [shape: f32[1,512], index: 2, kind: input, shape index: {}]
  %s3 = inlined_call_operand.vmem [shape: bf16[128,512], index: 3, kind: input, shape index: {}]
  %s4 = inlined_call_operand.vmem [shape: f32[8,8,128], index: 4, kind: output, shape index: {0}]
  %s5 = inlined_call_operand.vmem [shape: f32[8,128], index: 5, kind: output, shape index: {1}]
  %s6 = inlined_call_operand.vmem [shape: f32[8,128], index: 6, kind: output, shape index: {2}]
  %7 = xla_tuple %s4, %s5, %s6
  %s8 = sld [smem:[#allocation0]]
  $region50: #{encoder_forward.3} parent=0
    _
  %s10 = ssub.s32 1, %s8
  %s11 = scalar_select 0, %s10, %s8
  // Predicated region
  $region2: #{encoder_forward.3} parent=0 // pred_check
    _
  $region3: #{encoder_forward.3} parent=0 // pred_check_branch
    %13 = sbr.rel (0) target = $region5
  $region4: #{encoder_forward.3} parent=0 // pred_region
    _
  $region5: #{encoder_forward.3} parent=0 // pred_fallthru
    _
  // Predicated region
  $region6: #{encoder_forward.3} parent=0 // pred_check
    _
  $region7: #{encoder_forward.3} parent=0 // pred_check_branch
    %15 = sbr.rel (0) target = $region9
  $region8: #{encoder_forward.3} parent=0 // pred_region
    _
  $region9: #{encoder_forward.3} parent=0 // pred_fallthru
    _
  // Predicated region
  $region10: #{encoder_forward.3} parent=0 // pred_check
    _
  $region11: #{encoder_forward.3} parent=0 // pred_check_branch
    %17 = sbr.rel (0) target = $region13
  $region12: #{encoder_forward.3} parent=0 // pred_region
    _
  $region13: #{encoder_forward.3} parent=0 // pred_fallthru
    _
  // Predicated region
  $region14: #{encoder_forward.3} parent=0 // pred_check
    _
  $region15: #{encoder_forward.3} parent=0 // pred_check_branch
    %19 = sbr.rel (0) target = $region17
  $region16: #{encoder_forward.3} parent=0 // pred_region
    _
  $region17: #{encoder_forward.3} parent=0 // pred_fallthru
    _
  %p21 = scmp.eq.s32.totalorder 0, 0
  // Predicated region
  $region18: #{encoder_forward.3} parent=0 // pred_check
    %p22 = pneg %p21
  $region19: #{encoder_forward.3} parent=0 // pred_check_branch
    %24 = sbr.rel (%p22) target = $region21
  $region20: #{encoder_forward.3} parent=0 // pred_region
    %25 = vst [vmem:[#allocation3] sm:$0xff] 0.0
    %26 = vst [vmem:[#allocation4] sm:$0xff] 0.0
  $region21: #{encoder_forward.3} parent=0 // pred_fallthru
    _
  %v27 = vld [vmem:[%s0] sm:$0xf]
  %v28 = vld [vmem:[%s0 + $0x4] sm:$0xf]
  %v29 = vld [vmem:[%s0 + $0x8] sm:$0xf]
  %v30 = vld [vmem:[%s0 + $0xc] sm:$0xf]
  %v31 = vld [vmem:[%s0 + $0x10] sm:$0xf]
  %v32 = vld [vmem:[%s0 + $0x14] sm:$0xf]
  %v33 = vld [vmem:[%s0 + $0x18] sm:$0xf]
  %v34 = vld [vmem:[%s0 + $0x1c] sm:$0xf]
  %v35 = vld [vmem:[%s1] sm:$0xff]
  %v36 = vld [vmem:[%s1 + $0x8] sm:$0xff]
  %v37 = vld [vmem:[%s1 + $0x10] sm:$0xff]
  %v38 = vld [vmem:[%s1 + $0x18] sm:$0xff]
  %v39 = vld [vmem:[%s1 + $0x20] sm:$0xff]
  %v40 = vld [vmem:[%s1 + $0x28] sm:$0xff]
  %v41 = vld [vmem:[%s1 + $0x30] sm:$0xff]
  %v42 = vld [vmem:[%s1 + $0x38] sm:$0xff]
  %v43 = vld [vmem:[%s1 + $0x40] sm:$0xff]
  %v44 = vld [vmem:[%s1 + $0x48] sm:$0xff]
  %v45 = vld [vmem:[%s1 + $0x50] sm:$0xff]
  %v46 = vld [vmem:[%s1 + $0x58] sm:$0xff]
  %v47 = vld [vmem:[%s1 + $0x60] sm:$0xff]
  %v48 = vld [vmem:[%s1 + $0x68] sm:$0xff]
  %v49 = vld [vmem:[%s1 + $0x70] sm:$0xff]
  %v50 = vld [vmem:[%s1 + $0x78] sm:$0xff]
  %v51 = vld [vmem:[%s1 + $0x80] sm:$0xff]
  %v52 = vld [vmem:[%s1 + $0x88] sm:$0xff]
  %v53 = vld [vmem:[%s1 + $0x90] sm:$0xff]
  %v54 = vld [vmem:[%s1 + $0x98] sm:$0xff]
  %v55 = vld [vmem:[%s1 + $0xa0] sm:$0xff]
  %v56 = vld [vmem:[%s1 + $0xa8] sm:$0xff]
  %v57 = vld [vmem:[%s1 + $0xb0] sm:$0xff]
  %v58 = vld [vmem:[%s1 + $0xb8] sm:$0xff]
  %v59 = vld [vmem:[%s1 + $0xc0] sm:$0xff]
  %v60 = vld [vmem:[%s1 + $0xc8] sm:$0xff]
  %v61 = vld [vmem:[%s1 + $0xd0] sm:$0xff]
  %v62 = vld [vmem:[%s1 + $0xd8] sm:$0xff]
  %v63 = vld [vmem:[%s1 + $0xe0] sm:$0xff]
  %v64 = vld [vmem:[%s1 + $0xe8] sm:$0xff]
  %v65 = vld [vmem:[%s1 + $0xf0] sm:$0xff]
  %v66 = vld [vmem:[%s1 + $0xf8] sm:$0xff]
  %v75 = vunpack.c.l.b16 %v27
  %v76 = vunpack.c.l.b16 %v28
  %v77 = vunpack.c.l.b16 %v29
  %v78 = vunpack.c.l.b16 %v30
  %v79 = vunpack.c.l.b16 %v31
  %v80 = vunpack.c.l.b16 %v32
  %v81 = vunpack.c.l.b16 %v33
  %v82 = vunpack.c.l.b16 %v34
  %v83 = vpack.c.b16 %v76, %v75
  %v84 = vpack.c.b16 %v78, %v77
  %v85 = vpack.c.b16 %v80, %v79
  %v86 = vpack.c.b16 %v82, %v81
  %v123 = vunpack.c.l.b16 %v35
  %v124 = vunpack.c.h.b16 %v35
  %v125 = vunpack.c.l.b16 %v36
  %v126 = vunpack.c.h.b16 %v36
  %v127 = vunpack.c.l.b16 %v37
  %v128 = vunpack.c.h.b16 %v37
  %v129 = vunpack.c.l.b16 %v38
  %v130 = vunpack.c.h.b16 %v38
  %v131 = vunpack.c.l.b16 %v39
  %v132 = vunpack.c.h.b16 %v39
  %v133 = vunpack.c.l.b16 %v40
  %v134 = vunpack.c.h.b16 %v40
  %v135 = vunpack.c.l.b16 %v41
  %v136 = vunpack.c.h.b16 %v41
  %v137 = vunpack.c.l.b16 %v42
  %v138 = vunpack.c.h.b16 %v42
  %v139 = vunpack.c.l.b16 %v43
  %v140 = vunpack.c.h.b16 %v43
  %v141 = vunpack.c.l.b16 %v44
  %v142 = vunpack.c.h.b16 %v44
  %v143 = vunpack.c.l.b16 %v45
  %v144 = vunpack.c.h.b16 %v45
  %v145 = vunpack.c.l.b16 %v46
  %v146 = vunpack.c.h.b16 %v46
  %v147 = vunpack.c.l.b16 %v47
  %v148 = vunpack.c.h.b16 %v47
  %v149 = vunpack.c.l.b16 %v48
  %v150 = vunpack.c.h.b16 %v48
  %v151 = vunpack.c.l.b16 %v49
  %v152 = vunpack.c.h.b16 %v49
  %v153 = vunpack.c.l.b16 %v50
  %v154 = vunpack.c.h.b16 %v50
  %v155 = vunpack.c.l.b16 %v51
  %v156 = vunpack.c.h.b16 %v51
  %v157 = vunpack.c.l.b16 %v52
  %v158 = vunpack.c.h.b16 %v52
  %v159 = vunpack.c.l.b16 %v53
  %v160 = vunpack.c.h.b16 %v53
  %v161 = vunpack.c.l.b16 %v54
  %v162 = vunpack.c.h.b16 %v54
  %v163 = vunpack.c.l.b16 %v55
  %v164 = vunpack.c.h.b16 %v55
  %v165 = vunpack.c.l.b16 %v56
  %v166 = vunpack.c.h.b16 %v56
  %v167 = vunpack.c.l.b16 %v57
  %v168 = vunpack.c.h.b16 %v57
  %v169 = vunpack.c.l.b16 %v58
  %v170 = vunpack.c.h.b16 %v58
  %v171 = vunpack.c.l.b16 %v59
  %v172 = vunpack.c.h.b16 %v59
  %v173 = vunpack.c.l.b16 %v60
  %v174 = vunpack.c.h.b16 %v60
  %v175 = vunpack.c.l.b16 %v61
  %v176 = vunpack.c.h.b16 %v61
  %v177 = vunpack.c.l.b16 %v62
  %v178 = vunpack.c.h.b16 %v62
  %v179 = vunpack.c.l.b16 %v63
  %v180 = vunpack.c.h.b16 %v63
  %v181 = vunpack.c.l.b16 %v64
  %v182 = vunpack.c.h.b16 %v64
  %v183 = vunpack.c.l.b16 %v65
  %v184 = vunpack.c.h.b16 %v65
  %v185 = vunpack.c.l.b16 %v66
  %v186 = vunpack.c.h.b16 %v66
  %v187 = vpack.c.b16 %v127, %v123
  %v188 = vpack.c.b16 %v128, %v124
  %v189 = vpack.c.b16 %v129, %v125
  %v190 = vpack.c.b16 %v130, %v126
  %v191 = vpack.c.b16 %v135, %v131
  %v192 = vpack.c.b16 %v136, %v132
  %v193 = vpack.c.b16 %v137, %v133
  %v194 = vpack.c.b16 %v138, %v134
  %v195 = vpack.c.b16 %v143, %v139
  %v196 = vpack.c.b16 %v144, %v140
  %v197 = vpack.c.b16 %v145, %v141
  %v198 = vpack.c.b16 %v146, %v142
  %v199 = vpack.c.b16 %v151, %v147
  %v200 = vpack.c.b16 %v152, %v148
  %v201 = vpack.c.b16 %v153, %v149
  %v202 = vpack.c.b16 %v154, %v150
  %v203 = vpack.c.b16 %v159, %v155
  %v204 = vpack.c.b16 %v160, %v156
  %v205 = vpack.c.b16 %v161, %v157
  %v206 = vpack.c.b16 %v162, %v158
  %v207 = vpack.c.b16 %v167, %v163
  %v208 = vpack.c.b16 %v168, %v164
  %v209 = vpack.c.b16 %v169, %v165
  %v210 = vpack.c.b16 %v170, %v166
  %v211 = vpack.c.b16 %v175, %v171
  %v212 = vpack.c.b16 %v176, %v172
  %v213 = vpack.c.b16 %v177, %v173
  %v214 = vpack.c.b16 %v178, %v174
  %v215 = vpack.c.b16 %v183, %v179
  %v216 = vpack.c.b16 %v184, %v180
  %v217 = vpack.c.b16 %v185, %v181
  %v218 = vpack.c.b16 %v186, %v182
  %251 = vmatprep.subr.bf16.mxu0 %v188
  %252 = vmatpush1.bf16.msra.mxu0 %v187
  %253 = vmatprep.subr.bf16.mxu0 %v192
  %254 = vmatpush1.bf16.msra.mxu0 %v191
  %255 = vmatprep.subr.bf16.mxu0 %v196
  %256 = vmatpush1.bf16.msra.mxu0 %v195
  %257 = vmatprep.subr.bf16.mxu0 %v200
  %258 = vmatpush1.bf16.msra.mxu0 %v199
  %259 = vmatprep.subr.bf16.mxu0 %v204
  %260 = vmatpush1.bf16.msra.mxu0 %v203
  %261 = vmatprep.subr.bf16.mxu0 %v208
  %262 = vmatpush1.bf16.msra.mxu0 %v207
  %263 = vmatprep.subr.bf16.mxu0 %v212
  %264 = vmatpush1.bf16.msra.mxu0 %v211
  %265 = vmatprep.subr.bf16.mxu0 %v216
  %266 = vmatpush1.bf16.msra.mxu0 %v215
  %267 = vmatprep.subr.bf16.mxu0 0
  %268 = vmatpush1.bf16.msra.mxu0 0
  %269 = vmatprep.subr.bf16.mxu0 0
  %270 = vmatpush1.bf16.msra.mxu0 0
  %271 = vmatprep.subr.bf16.mxu0 0
  %272 = vmatpush1.bf16.msra.mxu0 0
  %273 = vmatprep.subr.bf16.mxu0 0
  %274 = vmatpush1.bf16.msra.mxu0 0
  %275 = vmatprep.subr.bf16.mxu0 0
  %276 = vmatpush1.bf16.msra.mxu0 0
  %277 = vmatprep.subr.bf16.mxu0 0
  %278 = vmatpush1.bf16.msra.mxu0 0
  %279 = vmatprep.subr.bf16.mxu0 0
  %280 = vmatpush1.bf16.msra.mxu0 0
  %281 = vmatprep.subr.bf16.mxu0 0
  %282 = vmatpush1.bf16.msra.mxu0 0
  %283 = vmatprep.mubr.bf16.mxu0 0
  %284 = vmatmul.mubr.bf16.gmra.mrb[0].mxu0 %v83
  %v285 = vpop.f32.mrb[0].mxu0
  %v286 = vadd.f32 0.0, %v285
  %v287 = vpop.f32.mrb[0].mxu0
  %v288 = vadd.f32 0.0, %v287
  %v289 = vpop.f32.mrb[0].mxu0
  %v290 = vadd.f32 0.0, %v289
  %v291 = vpop.f32.mrb[0].mxu0
  %v292 = vadd.f32 0.0, %v291
  %293 = vmatprep.mubr.bf16.mxu0 0
  %294 = vmatmul.mubr.bf16.gmra.mrb[0].mxu0 %v84
  %v295 = vpop.f32.mrb[0].mxu0
  %v296 = vadd.f32 0.0, %v295
  %v297 = vpop.f32.mrb[0].mxu0
  %v298 = vadd.f32 0.0, %v297
  %v299 = vpop.f32.mrb[0].mxu0
  %v300 = vadd.f32 0.0, %v299
  %v301 = vpop.f32.mrb[0].mxu0
  %v302 = vadd.f32 0.0, %v301
  %303 = vmatprep.mubr.bf16.mxu0 0
  %304 = vmatmul.mubr.bf16.gmra.mrb[0].mxu0 %v85
  %v305 = vpop.f32.mrb[0].mxu0
  %v306 = vadd.f32 0.0, %v305
  %v307 = vpop.f32.mrb[0].mxu0
  %v308 = vadd.f32 0.0, %v307
  %v309 = vpop.f32.mrb[0].mxu0
  %v310 = vadd.f32 0.0, %v309
  %v311 = vpop.f32.mrb[0].mxu0
  %v312 = vadd.f32 0.0, %v311
  %313 = vmatprep.mubr.bf16.mxu0 0
  %314 = vmatmul.mubr.bf16.gmra.mrb[0].mxu0 %v86
  %v315 = vpop.f32.mrb[0].mxu0
  %v316 = vadd.f32 0.0, %v315
  %v317 = vpop.f32.mrb[0].mxu0
  %v318 = vadd.f32 0.0, %v317
  %v319 = vpop.f32.mrb[0].mxu0
  %v320 = vadd.f32 0.0, %v319
  %v321 = vpop.f32.mrb[0].mxu0
  %v322 = vadd.f32 0.0, %v321
  %323 = vdwg.mxu0
  %324 = vmatprep.subr.bf16.mxu0 %v190
  %325 = vmatpush1.bf16.msra.mxu0 %v189
  %326 = vmatprep.subr.bf16.mxu0 %v194
  %327 = vmatpush1.bf16.msra.mxu0 %v193
  %328 = vmatprep.subr.bf16.mxu0 %v198
  %329 = vmatpush1.bf16.msra.mxu0 %v197
  %330 = vmatprep.subr.bf16.mxu0 %v202
  %331 = vmatpush1.bf16.msra.mxu0 %v201
  %332 = vmatprep.subr.bf16.mxu0 %v206
  %333 = vmatpush1.bf16.msra.mxu0 %v205
  %334 = vmatprep.subr.bf16.mxu0 %v210
  %335 = vmatpush1.bf16.msra.mxu0 %v209
  %336 = vmatprep.subr.bf16.mxu0 %v214
  %337 = vmatpush1.bf16.msra.mxu0 %v213
  %338 = vmatprep.subr.bf16.mxu0 %v218
  %339 = vmatpush1.bf16.msra.mxu0 %v217
  %340 = vmatprep.subr.bf16.mxu0 0
  %341 = vmatpush1.bf16.msra.mxu0 0
  %342 = vmatprep.subr.bf16.mxu0 0
  %343 = vmatpush1.bf16.msra.mxu0 0
  %344 = vmatprep.subr.bf16.mxu0 0
  %345 = vmatpush1.bf16.msra.mxu0 0
  %346 = vmatprep.subr.bf16.mxu0 0
  %347 = vmatpush1.bf16.msra.mxu0 0
  %348 = vmatprep.subr.bf16.mxu0 0
  %349 = vmatpush1.bf16.msra.mxu0 0
  %350 = vmatprep.subr.bf16.mxu0 0
  %351 = vmatpush1.bf16.msra.mxu0 0
  %352 = vmatprep.subr.bf16.mxu0 0
  %353 = vmatpush1.bf16.msra.mxu0 0
  %354 = vmatprep.subr.bf16.mxu0 0
  %355 = vmatpush1.bf16.msra.mxu0 0
  %356 = vmatprep.mubr.bf16.mxu0 0
  %357 = vmatmul.mubr.bf16.gmra.mrb[0].mxu0 %v83
  %v358 = vpop.f32.mrb[0].mxu0
  %v359 = vadd.f32 0.0, %v358
  %v360 = vpop.f32.mrb[0].mxu0
  %v361 = vadd.f32 0.0, %v360
  %v362 = vpop.f32.mrb[0].mxu0
  %v363 = vadd.f32 0.0, %v362
  %v364 = vpop.f32.mrb[0].mxu0
  %v365 = vadd.f32 0.0, %v364
  %366 = vmatprep.mubr.bf16.mxu0 0
  %367 = vmatmul.mubr.bf16.gmra.mrb[0].mxu0 %v84
  %v368 = vpop.f32.mrb[0].mxu0
  %v369 = vadd.f32 0.0, %v368
  %v370 = vpop.f32.mrb[0].mxu0
  %v371 = vadd.f32 0.0, %v370
  %v372 = vpop.f32.mrb[0].mxu0
  %v373 = vadd.f32 0.0, %v372
  %v374 = vpop.f32.mrb[0].mxu0
  %v375 = vadd.f32 0.0, %v374
  %376 = vmatprep.mubr.bf16.mxu0 0
  %377 = vmatmul.mubr.bf16.gmra.mrb[0].mxu0 %v85
  %v378 = vpop.f32.mrb[0].mxu0
  %v379 = vadd.f32 0.0, %v378
  %v380 = vpop.f32.mrb[0].mxu0
  %v381 = vadd.f32 0.0, %v380
  %v382 = vpop.f32.mrb[0].mxu0
  %v383 = vadd.f32 0.0, %v382
  %v384 = vpop.f32.mrb[0].mxu0
  %v385 = vadd.f32 0.0, %v384
  %386 = vmatprep.mubr.bf16.mxu0 0
  %387 = vmatmul.mubr.bf16.gmra.mrb[0].mxu0 %v86
  %v388 = vpop.f32.mrb[0].mxu0
  %v389 = vadd.f32 0.0, %v388
  %v390 = vpop.f32.mrb[0].mxu0
  %v391 = vadd.f32 0.0, %v390
  %v392 = vpop.f32.mrb[0].mxu0
  %v393 = vadd.f32 0.0, %v392
  %v394 = vpop.f32.mrb[0].mxu0
  %v395 = vadd.f32 0.0, %v394
  %396 = vdwg.mxu0
  %v397 = vld [vmem:[%s2] sm:$0xf]
  %v399 = vlaneseq
  %v400 = vshrl.u32 %v399, 7
  %v401 = vsub.s32 0, %v400
  %v402 = vrot.slane %v397, %v401
  %v403 = vlaneseq
  %v404 = vshrl.u32 %v403, 7
  %v405 = vsub.s32 1, %v404
  %v406 = vrot.slane %v397, %v405
  %v407 = vlaneseq
  %v408 = vshrl.u32 %v407, 7
  %v409 = vsub.s32 2, %v408
  %v410 = vrot.slane %v397, %v409
  %v411 = vlaneseq
  %v412 = vshrl.u32 %v411, 7
  %v413 = vsub.s32 3, %v412
  %v414 = vrot.slane %v397, %v413
  %v419 = vadd.f32 %v286, %v402
  %v420 = vadd.f32 %v288, %v406
  %v421 = vadd.f32 %v359, %v410
  %v422 = vadd.f32 %v361, %v414
  %v423 = vadd.f32 %v290, %v402
  %v424 = vadd.f32 %v292, %v406
  %v425 = vadd.f32 %v363, %v410
  %v426 = vadd.f32 %v365, %v414
  %v427 = vadd.f32 %v296, %v402
  %v428 = vadd.f32 %v298, %v406
  %v429 = vadd.f32 %v369, %v410
  %v430 = vadd.f32 %v371, %v414
  %v431 = vadd.f32 %v300, %v402
  %v432 = vadd.f32 %v302, %v406
  %v433 = vadd.f32 %v373, %v410
  %v434 = vadd.f32 %v375, %v414
  %v435 = vadd.f32 %v306, %v402
  %v436 = vadd.f32 %v308, %v406
  %v437 = vadd.f32 %v379, %v410
  %v438 = vadd.f32 %v381, %v414
  %v439 = vadd.f32 %v310, %v402
  %v440 = vadd.f32 %v312, %v406
  %v441 = vadd.f32 %v383, %v410
  %v442 = vadd.f32 %v385, %v414
  %v443 = vadd.f32 %v316, %v402
  %v444 = vadd.f32 %v318, %v406
  %v445 = vadd.f32 %v389, %v410
  %v446 = vadd.f32 %v391, %v414
  %v447 = vadd.f32 %v320, %v402
  %v448 = vadd.f32 %v322, %v406
  %v449 = vadd.f32 %v393, %v410
  %v450 = vadd.f32 %v395, %v414
  %451 = vst [vmem:[#allocation2] sm:$0xff] %v419
  %452 = vst [vmem:[#allocation2 + $0x8] sm:$0xff] %v420
  %453 = vst [vmem:[#allocation2 + $0x10] sm:$0xff] %v421
  %454 = vst [vmem:[#allocation2 + $0x18] sm:$0xff] %v422
  %455 = vst [vmem:[#allocation2 + $0x20] sm:$0xff] %v423
  %456 = vst [vmem:[#allocation2 + $0x28] sm:$0xff] %v424
  %457 = vst [vmem:[#allocation2 + $0x30] sm:$0xff] %v425
  %458 = vst [vmem:[#allocation2 + $0x38] sm:$0xff] %v426
  %459 = vst [vmem:[#allocation2 + $0x40] sm:$0xff] %v427
  %460 = vst [vmem:[#allocation2 + $0x48] sm:$0xff] %v428
  %461 = vst [vmem:[#allocation2 + $0x50] sm:$0xff] %v429
  %462 = vst [vmem:[#allocation2 + $0x58] sm:$0xff] %v430
  %463 = vst [vmem:[#allocation2 + $0x60] sm:$0xff] %v431
  %464 = vst [vmem:[#allocation2 + $0x68] sm:$0xff] %v432
  %465 = vst [vmem:[#allocation2 + $0x70] sm:$0xff] %v433
  %466 = vst [vmem:[#allocation2 + $0x78] sm:$0xff] %v434
  %467 = vst [vmem:[#allocation2 + $0x80] sm:$0xff] %v435
  %468 = vst [vmem:[#allocation2 + $0x88] sm:$0xff] %v436
  %469 = vst [vmem:[#allocation2 + $0x90] sm:$0xff] %v437
  %470 = vst [vmem:[#allocation2 + $0x98] sm:$0xff] %v438
  %471 = vst [vmem:[#allocation2 + $0xa0] sm:$0xff] %v439
  %472 = vst [vmem:[#allocation2 + $0xa8] sm:$0xff] %v440
  %473 = vst [vmem:[#allocation2 + $0xb0] sm:$0xff] %v441
  %474 = vst [vmem:[#allocation2 + $0xb8] sm:$0xff] %v442
  %475 = vst [vmem:[#allocation2 + $0xc0] sm:$0xff] %v443
  %476 = vst [vmem:[#allocation2 + $0xc8] sm:$0xff] %v444
  %477 = vst [vmem:[#allocation2 + $0xd0] sm:$0xff] %v445
  %478 = vst [vmem:[#allocation2 + $0xd8] sm:$0xff] %v446
  %479 = vst [vmem:[#allocation2 + $0xe0] sm:$0xff] %v447
  %480 = vst [vmem:[#allocation2 + $0xe8] sm:$0xff] %v448
  %481 = vst [vmem:[#allocation2 + $0xf0] sm:$0xff] %v449
  %482 = vst [vmem:[#allocation2 + $0xf8] sm:$0xff] %v450
  %v483 = vld [vmem:[%s3] sm:$0xff]
  %v484 = vld [vmem:[%s3 + $0x8] sm:$0xff]
  %v485 = vld [vmem:[%s3 + $0x10] sm:$0xff]
  %v486 = vld [vmem:[%s3 + $0x18] sm:$0xff]
  %v487 = vld [vmem:[%s3 + $0x20] sm:$0xff]
  %v488 = vld [vmem:[%s3 + $0x28] sm:$0xff]
  %v489 = vld [vmem:[%s3 + $0x30] sm:$0xff]
  %v490 = vld [vmem:[%s3 + $0x38] sm:$0xff]
  %v491 = vld [vmem:[%s3 + $0x40] sm:$0xff]
  %v492 = vld [vmem:[%s3 + $0x48] sm:$0xff]
  %v493 = vld [vmem:[%s3 + $0x50] sm:$0xff]
  %v494 = vld [vmem:[%s3 + $0x58] sm:$0xff]
  %v495 = vld [vmem:[%s3 + $0x60] sm:$0xff]
  %v496 = vld [vmem:[%s3 + $0x68] sm:$0xff]
  %v497 = vld [vmem:[%s3 + $0x70] sm:$0xff]
  %v498 = vld [vmem:[%s3 + $0x78] sm:$0xff]
  %v499 = vld [vmem:[%s3 + $0x80] sm:$0xff]
  %v500 = vld [vmem:[%s3 + $0x88] sm:$0xff]
  %v501 = vld [vmem:[%s3 + $0x90] sm:$0xff]
  %v502 = vld [vmem:[%s3 + $0x98] sm:$0xff]
  %v503 = vld [vmem:[%s3 + $0xa0] sm:$0xff]
  %v504 = vld [vmem:[%s3 + $0xa8] sm:$0xff]
  %v505 = vld [vmem:[%s3 + $0xb0] sm:$0xff]
  %v506 = vld [vmem:[%s3 + $0xb8] sm:$0xff]
  %v507 = vld [vmem:[%s3 + $0xc0] sm:$0xff]
  %v508 = vld [vmem:[%s3 + $0xc8] sm:$0xff]
  %v509 = vld [vmem:[%s3 + $0xd0] sm:$0xff]
  %v510 = vld [vmem:[%s3 + $0xd8] sm:$0xff]
  %v511 = vld [vmem:[%s3 + $0xe0] sm:$0xff]
  %v512 = vld [vmem:[%s3 + $0xe8] sm:$0xff]
  %v513 = vld [vmem:[%s3 + $0xf0] sm:$0xff]
  %v514 = vld [vmem:[%s3 + $0xf8] sm:$0xff]
  %v515 = vld [vmem:[#allocation3] sm:$0xff]
  %v516 = vld [vmem:[#allocation4] sm:$0xff]
  %v517 = vld [vmem:[#allocation2] sm:$0xff]
  %v518 = vld [vmem:[#allocation2 + $0x8] sm:$0xff]
  %v519 = vld [vmem:[#allocation2 + $0x10] sm:$0xff]
  %v520 = vld [vmem:[#allocation2 + $0x18] sm:$0xff]
  %v521 = vpack.c.bf16 %v515, %v515
  %v554 = vunpack.c.l.b16 %v483
  %v555 = vunpack.c.h.b16 %v483
  %v556 = vunpack.c.l.b16 %v484
  %v557 = vunpack.c.h.b16 %v484
  %v558 = vunpack.c.l.b16 %v485
  %v559 = vunpack.c.h.b16 %v485
  %v560 = vunpack.c.l.b16 %v486
  %v561 = vunpack.c.h.b16 %v486
  %v562 = vunpack.c.l.b16 %v487
  %v563 = vunpack.c.h.b16 %v487
  %v564 = vunpack.c.l.b16 %v488
  %v565 = vunpack.c.h.b16 %v488
  %v566 = vunpack.c.l.b16 %v489
  %v567 = vunpack.c.h.b16 %v489
  %v568 = vunpack.c.l.b16 %v490
  %v569 = vunpack.c.h.b16 %v490
  %v570 = vunpack.c.l.b16 %v491
  %v571 = vunpack.c.h.b16 %v491
  %v572 = vunpack.c.l.b16 %v492
  %v573 = vunpack.c.h.b16 %v492
  %v574 = vunpack.c.l.b16 %v493
  %v575 = vunpack.c.h.b16 %v493
  %v576 = vunpack.c.l.b16 %v494
  %v577 = vunpack.c.h.b16 %v494
  %v578 = vunpack.c.l.b16 %v495
  %v579 = vunpack.c.h.b16 %v495
  %v580 = vunpack.c.l.b16 %v496
  %v581 = vunpack.c.h.b16 %v496
  %v582 = vunpack.c.l.b16 %v497
  %v583 = vunpack.c.h.b16 %v497
  %v584 = vunpack.c.l.b16 %v498
  %v585 = vunpack.c.h.b16 %v498
  %v586 = vunpack.c.l.b16 %v499
  %v587 = vunpack.c.h.b16 %v499
  %v588 = vunpack.c.l.b16 %v500
  %v589 = vunpack.c.h.b16 %v500
  %v590 = vunpack.c.l.b16 %v501
  %v591 = vunpack.c.h.b16 %v501
  %v592 = vunpack.c.l.b16 %v502
  %v593 = vunpack.c.h.b16 %v502
  %v594 = vunpack.c.l.b16 %v503
  %v595 = vunpack.c.h.b16 %v503
  %v596 = vunpack.c.l.b16 %v504
  %v597 = vunpack.c.h.b16 %v504
  %v598 = vunpack.c.l.b16 %v505
  %v599 = vunpack.c.h.b16 %v505
  %v600 = vunpack.c.l.b16 %v506
  %v601 = vunpack.c.h.b16 %v506
  %v602 = vunpack.c.l.b16 %v507
  %v603 = vunpack.c.h.b16 %v507
  %v604 = vunpack.c.l.b16 %v508
  %v605 = vunpack.c.h.b16 %v508
  %v606 = vunpack.c.l.b16 %v509
  %v607 = vunpack.c.h.b16 %v509
  %v608 = vunpack.c.l.b16 %v510
  %v609 = vunpack.c.h.b16 %v510
  %v610 = vunpack.c.l.b16 %v511
  %v611 = vunpack.c.h.b16 %v511
  %v612 = vunpack.c.l.b16 %v512
  %v613 = vunpack.c.h.b16 %v512
  %v614 = vunpack.c.l.b16 %v513
  %v615 = vunpack.c.h.b16 %v513
  %v616 = vunpack.c.l.b16 %v514
  %v617 = vunpack.c.h.b16 %v514
  %v618 = vpack.c.b16 %v558, %v554
  %v619 = vpack.c.b16 %v559, %v555
  %v620 = vpack.c.b16 %v560, %v556
  %v621 = vpack.c.b16 %v561, %v557
  %v622 = vpack.c.b16 %v566, %v562
  %v623 = vpack.c.b16 %v567, %v563
  %v624 = vpack.c.b16 %v568, %v564
  %v625 = vpack.c.b16 %v569, %v565
  %v626 = vpack.c.b16 %v574, %v570
  %v627 = vpack.c.b16 %v575, %v571
  %v628 = vpack.c.b16 %v576, %v572
  %v629 = vpack.c.b16 %v577, %v573
  %v630 = vpack.c.b16 %v582, %v578
  %v631 = vpack.c.b16 %v583, %v579
  %v632 = vpack.c.b16 %v584, %v580
  %v633 = vpack.c.b16 %v585, %v581
  %v634 = vpack.c.b16 %v590, %v586
  %v635 = vpack.c.b16 %v591, %v587
  %v636 = vpack.c.b16 %v592, %v588
  %v637 = vpack.c.b16 %v593, %v589
  %v638 = vpack.c.b16 %v598, %v594
  %v639 = vpack.c.b16 %v599, %v595
  %v640 = vpack.c.b16 %v600, %v596
  %v641 = vpack.c.b16 %v601, %v597
  %v642 = vpack.c.b16 %v606, %v602
  %v643 = vpack.c.b16 %v607, %v603
  %v644 = vpack.c.b16 %v608, %v604
  %v645 = vpack.c.b16 %v609, %v605
  %v646 = vpack.c.b16 %v614, %v610
  %v647 = vpack.c.b16 %v615, %v611
  %v648 = vpack.c.b16 %v616, %v612
  %v649 = vpack.c.b16 %v617, %v613
  %682 = vmatprep.subr.bf16.mxu0 %v619
  %683 = vmatpush1.bf16.msra.mxu0 %v618
  %684 = vmatprep.subr.bf16.mxu0 %v623
  %685 = vmatpush1.bf16.msra.mxu0 %v622
  %686 = vmatprep.subr.bf16.mxu0 %v627
  %687 = vmatpush1.bf16.msra.mxu0 %v626
  %688 = vmatprep.subr.bf16.mxu0 %v631
  %689 = vmatpush1.bf16.msra.mxu0 %v630
  %690 = vmatprep.subr.bf16.mxu0 %v635
  %691 = vmatpush1.bf16.msra.mxu0 %v634
  %692 = vmatprep.subr.bf16.mxu0 %v639
  %693 = vmatpush1.bf16.msra.mxu0 %v638
  %694 = vmatprep.subr.bf16.mxu0 %v643
  %695 = vmatpush1.bf16.msra.mxu0 %v642
  %696 = vmatprep.subr.bf16.mxu0 %v647
  %697 = vmatpush1.bf16.msra.mxu0 %v646
  %698 = vmatprep.subr.bf16.mxu0 0
  %699 = vmatpush1.bf16.msra.mxu0 0
  %700 = vmatprep.subr.bf16.mxu0 0
  %701 = vmatpush1.bf16.msra.mxu0 0
  %702 = vmatprep.subr.bf16.mxu0 0
  %703 = vmatpush1.bf16.msra.mxu0 0
  %704 = vmatprep.subr.bf16.mxu0 0
  %705 = vmatpush1.bf16.msra.mxu0 0
  %706 = vmatprep.subr.bf16.mxu0 0
  %707 = vmatpush1.bf16.msra.mxu0 0
  %708 = vmatprep.subr.bf16.mxu0 0
  %709 = vmatpush1.bf16.msra.mxu0 0
  %710 = vmatprep.subr.bf16.mxu0 0
  %711 = vmatpush1.bf16.msra.mxu0 0
  %712 = vmatprep.subr.bf16.mxu0 0
  %713 = vmatpush1.bf16.msra.mxu0 0
  %714 = vmatprep.mubr.bf16.mxu0 0
  %715 = vmatmul.mubr.bf16.gmra.mrb[0].mxu0 %v521
  %v716 = vpop.f32.mrb[0].mxu0
  %v717 = vadd.f32 0.0, %v716
  %v718 = vpop.f32.mrb[0].mxu0
  %v719 = vadd.f32 0.0, %v718
  %v720 = vpop.f32.mrb[0].mxu0
  %v721 = vpop.f32.mrb[0].mxu0
  %722 = vdwg.mxu0
  %723 = vmatprep.subr.bf16.mxu0 %v621
  %724 = vmatpush1.bf16.msra.mxu0 %v620
  %725 = vmatprep.subr.bf16.mxu0 %v625
  %726 = vmatpush1.bf16.msra.mxu0 %v624
  %727 = vmatprep.subr.bf16.mxu0 %v629
  %728 = vmatpush1.bf16.msra.mxu0 %v628
  %729 = vmatprep.subr.bf16.mxu0 %v633
  %730 = vmatpush1.bf16.msra.mxu0 %v632
  %731 = vmatprep.subr.bf16.mxu0 %v637
  %732 = vmatpush1.bf16.msra.mxu0 %v636
  %733 = vmatprep.subr.bf16.mxu0 %v641
  %734 = vmatpush1.bf16.msra.mxu0 %v640
  %735 = vmatprep.subr.bf16.mxu0 %v645
  %736 = vmatpush1.bf16.msra.mxu0 %v644
  %737 = vmatprep.subr.bf16.mxu0 %v649
  %738 = vmatpush1.bf16.msra.mxu0 %v648
  %739 = vmatprep.subr.bf16.mxu0 0
  %740 = vmatpush1.bf16.msra.mxu0 0
  %741 = vmatprep.subr.bf16.mxu0 0
  %742 = vmatpush1.bf16.msra.mxu0 0
  %743 = vmatprep.subr.bf16.mxu0 0
  %744 = vmatpush1.bf16.msra.mxu0 0
  %745 = vmatprep.subr.bf16.mxu0 0
  %746 = vmatpush1.bf16.msra.mxu0 0
  %747 = vmatprep.subr.bf16.mxu0 0
  %748 = vmatpush1.bf16.msra.mxu0 0
  %749 = vmatprep.subr.bf16.mxu0 0
  %750 = vmatpush1.bf16.msra.mxu0 0
  %751 = vmatprep.subr.bf16.mxu0 0
  %752 = vmatpush1.bf16.msra.mxu0 0
  %753 = vmatprep.subr.bf16.mxu0 0
  %754 = vmatpush1.bf16.msra.mxu0 0
  %755 = vmatprep.mubr.bf16.mxu0 0
  %756 = vmatmul.mubr.bf16.gmra.mrb[0].mxu0 %v521
  %v757 = vpop.f32.mrb[0].mxu0
  %v758 = vadd.f32 0.0, %v757
  %v759 = vpop.f32.mrb[0].mxu0
  %v760 = vadd.f32 0.0, %v759
  %v761 = vpop.f32.mrb[0].mxu0
  %v762 = vpop.f32.mrb[0].mxu0
  %763 = vdwg.mxu0
  %v764 = vadd.f32 %v517, %v717
  %v765 = vadd.f32 %v518, %v719
  %v766 = vadd.f32 %v519, %v758
  %v767 = vadd.f32 %v520, %v760
  %v768 = vmul.f32 %v764, 0.5
  %v769 = vtanh.pop %v768
  %v770 = vmul.f32 %v769, 0.5
  %v771 = vadd.f32 %v770, 0.5
  %v772 = vmul.f32 %v765, 0.5
  %v773 = vtanh.pop %v772
  %v774 = vmul.f32 %v773, 0.5
  %v775 = vadd.f32 %v774, 0.5
  %v776 = vtanh.pop %v766
  %v777 = vmul.f32 %v767, 0.5
  %v778 = vtanh.pop %v777
  %v779 = vmul.f32 %v778, 0.5
  %v780 = vadd.f32 %v779, 0.5
  %v781 = vmul.f32 %v775, %v516
  %v782 = vmul.f32 %v771, %v776
  %v783 = vadd.f32 %v781, %v782
  %v784 = vtanh.pop %v783
  %v785 = vmul.f32 %v780, %v784
  %786 = vst [vmem:[%s4] sm:$0xff] %v785
  %s787 = scalar_lea.vmem [#allocation2], 32
  %v788 = vld [vmem:[%s787] sm:$0xff]
  %v789 = vld [vmem:[%s787 + $0x8] sm:$0xff]
  %v790 = vld [vmem:[%s787 + $0x10] sm:$0xff]
  %v791 = vld [vmem:[%s787 + $0x18] sm:$0xff]
  %v792 = vpack.c.bf16 %v785, %v785
  %793 = vmatprep.subr.bf16.mxu0 %v619
  %794 = vmatpush1.bf16.msra.mxu0 %v618
  %795 = vmatprep.subr.bf16.mxu0 %v623
  %796 = vmatpush1.bf16.msra.mxu0 %v622
  %797 = vmatprep.subr.bf16.mxu0 %v627
  %798 = vmatpush1.bf16.msra.mxu0 %v626
  %799 = vmatprep.subr.bf16.mxu0 %v631
  %800 = vmatpush1.bf16.msra.mxu0 %v630
  %801 = vmatprep.subr.bf16.mxu0 %v635
  %802 = vmatpush1.bf16.msra.mxu0 %v634
  %803 = vmatprep.subr.bf16.mxu0 %v639
  %804 = vmatpush1.bf16.msra.mxu0 %v638
  %805 = vmatprep.subr.bf16.mxu0 %v643
  %806 = vmatpush1.bf16.msra.mxu0 %v642
  %807 = vmatprep.subr.bf16.mxu0 %v647
  %808 = vmatpush1.bf16.msra.mxu0 %v646
  %809 = vmatprep.subr.bf16.mxu0 0
  %810 = vmatpush1.bf16.msra.mxu0 0
  %811 = vmatprep.subr.bf16.mxu0 0
  %812 = vmatpush1.bf16.msra.mxu0 0
  %813 = vmatprep.subr.bf16.mxu0 0
  %814 = vmatpush1.bf16.msra.mxu0 0
  %815 = vmatprep.subr.bf16.mxu0 0
  %816 = vmatpush1.bf16.msra.mxu0 0
  %817 = vmatprep.subr.bf16.mxu0 0
  %818 = vmatpush1.bf16.msra.mxu0 0
  %819 = vmatprep.subr.bf16.mxu0 0
  %820 = vmatpush1.bf16.msra.mxu0 0
  %821 = vmatprep.subr.bf16.mxu0 0
  %822 = vmatpush1.bf16.msra.mxu0 0
  %823 = vmatprep.subr.bf16.mxu0 0
  %824 = vmatpush1.bf16.msra.mxu0 0
  %825 = vmatprep.mubr.bf16.mxu0 0
  %826 = vmatmul.mubr.bf16.gmra.mrb[0].mxu0 %v792
  %v827 = vpop.f32.mrb[0].mxu0
  %v828 = vadd.f32 0.0, %v827
  %v829 = vpop.f32.mrb[0].mxu0
  %v830 = vadd.f32 0.0, %v829
  %v831 = vpop.f32.mrb[0].mxu0
  %v832 = vpop.f32.mrb[0].mxu0
  %833 = vdwg.mxu0
  %834 = vmatprep.subr.bf16.mxu0 %v621
  %835 = vmatpush1.bf16.msra.mxu0 %v620
  %836 = vmatprep.subr.bf16.mxu0 %v625
  %837 = vmatpush1.bf16.msra.mxu0 %v624
  %838 = vmatprep.subr.bf16.mxu0 %v629
  %839 = vmatpush1.bf16.msra.mxu0 %v628
  %840 = vmatprep.subr.bf16.mxu0 %v633
  %841 = vmatpush1.bf16.msra.mxu0 %v632
  %842 = vmatprep.subr.bf16.mxu0 %v637
  %843 = vmatpush1.bf16.msra.mxu0 %v636
  %844 = vmatprep.subr.bf16.mxu0 %v641
  %845 = vmatpush1.bf16.msra.mxu0 %v640
  %846 = vmatprep.subr.bf16.mxu0 %v645
  %847 = vmatpush1.bf16.msra.mxu0 %v644
  %848 = vmatprep.subr.bf16.mxu0 %v649
  %849 = vmatpush1.bf16.msra.mxu0 %v648
  %850 = vmatprep.subr.bf16.mxu0 0
  %851 = vmatpush1.bf16.msra.mxu0 0
  %852 = vmatprep.subr.bf16.mxu0 0
  %853 = vmatpush1.bf16.msra.mxu0 0
  %854 = vmatprep.subr.bf16.mxu0 0
  %855 = vmatpush1.bf16.msra.mxu0 0
  %856 = vmatprep.subr.bf16.mxu0 0
  %857 = vmatpush1.bf16.msra.mxu0 0
  %858 = vmatprep.subr.bf16.mxu0 0
  %859 = vmatpush1.bf16.msra.mxu0 0
  %860 = vmatprep.subr.bf16.mxu0 0
  %861 = vmatpush1.bf16.msra.mxu0 0
  %862 = vmatprep.subr.bf16.mxu0 0
  %863 = vmatpush1.bf16.msra.mxu0 0
  %864 = vmatprep.subr.bf16.mxu0 0
  %865 = vmatpush1.bf16.msra.mxu0 0
  %866 = vmatprep.mubr.bf16.mxu0 0
  %867 = vmatmul.mubr.bf16.gmra.mrb[0].mxu0 %v792
  %v868 = vpop.f32.mrb[0].mxu0
  %v869 = vadd.f32 0.0, %v868
  %v870 = vpop.f32.mrb[0].mxu0
  %v871 = vadd.f32 0.0, %v870
  %v872 = vpop.f32.mrb[0].mxu0
  %v873 = vpop.f32.mrb[0].mxu0
  %874 = vdwg.mxu0
  %v875 = vadd.f32 %v788, %v828
  %v876 = vadd.f32 %v789, %v830
  %v877 = vadd.f32 %v790, %v869
  %v878 = vadd.f32 %v791, %v871
  %v879 = vmul.f32 %v875, 0.5
  %v880 = vtanh.pop %v879
  %v881 = vmul.f32 %v880, 0.5
  %v882 = vadd.f32 %v881, 0.5
  %v883 = vmul.f32 %v876, 0.5
  %v884 = vtanh.pop %v883
  %v885 = vmul.f32 %v884, 0.5
  %v886 = vadd.f32 %v885, 0.5
  %v887 = vtanh.pop %v877
  %v888 = vmul.f32 %v878, 0.5
  %v889 = vtanh.pop %v888
  %v890 = vmul.f32 %v889, 0.5
  %v891 = vadd.f32 %v890, 0.5
  %v892 = vmul.f32 %v886, %v783
  %v893 = vmul.f32 %v882, %v887
  %v894 = vadd.f32 %v892, %v893
  %v895 = vtanh.pop %v894
  %v896 = vmul.f32 %v891, %v895
  %s897 = scalar_lea.vmem %s4, 8
  %898 = vst [vmem:[%s897] sm:$0xff] %v896
  %s899 = scalar_lea.vmem [#allocation2], 64
  %v900 = vld [vmem:[%s899] sm:$0xff]
  %v901 = vld [vmem:[%s899 + $0x8] sm:$0xff]
  %v902 = vld [vmem:[%s899 + $0x10] sm:$0xff]
  %v903 = vld [vmem:[%s899 + $0x18] sm:$0xff]
  %v904 = vpack.c.bf16 %v896, %v896
  %905 = vmatprep.subr.bf16.mxu0 %v619
  %906 = vmatpush1.bf16.msra.mxu0 %v618
  %907 = vmatprep.subr.bf16.mxu0 %v623
  %908 = vmatpush1.bf16.msra.mxu0 %v622
  %909 = vmatprep.subr.bf16.mxu0 %v627
  %910 = vmatpush1.bf16.msra.mxu0 %v626
  %911 = vmatprep.subr.bf16.mxu0 %v631
  %912 = vmatpush1.bf16.msra.mxu0 %v630
  %913 = vmatprep.subr.bf16.mxu0 %v635
  %914 = vmatpush1.bf16.msra.mxu0 %v634
  %915 = vmatprep.subr.bf16.mxu0 %v639
  %916 = vmatpush1.bf16.msra.mxu0 %v638
  %917 = vmatprep.subr.bf16.mxu0 %v643
  %918 = vmatpush1.bf16.msra.mxu0 %v642
  %919 = vmatprep.subr.bf16.mxu0 %v647
  %920 = vmatpush1.bf16.msra.mxu0 %v646
  %921 = vmatprep.subr.bf16.mxu0 0
  %922 = vmatpush1.bf16.msra.mxu0 0
  %923 = vmatprep.subr.bf16.mxu0 0
  %924 = vmatpush1.bf16.msra.mxu0 0
  %925 = vmatprep.subr.bf16.mxu0 0
  %926 = vmatpush1.bf16.msra.mxu0 0
  %927 = vmatprep.subr.bf16.mxu0 0
  %928 = vmatpush1.bf16.msra.mxu0 0
  %929 = vmatprep.subr.bf16.mxu0 0
  %930 = vmatpush1.bf16.msra.mxu0 0
  %931 = vmatprep.subr.bf16.mxu0 0
  %932 = vmatpush1.bf16.msra.mxu0 0
  %933 = vmatprep.subr.bf16.mxu0 0
  %934 = vmatpush1.bf16.msra.mxu0 0
  %935 = vmatprep.subr.bf16.mxu0 0
  %936 = vmatpush1.bf16.msra.mxu0 0
  %937 = vmatprep.mubr.bf16.mxu0 0
  %938 = vmatmul.mubr.bf16.gmra.mrb[0].mxu0 %v904
  %v939 = vpop.f32.mrb[0].mxu0
  %v940 = vadd.f32 0.0, %v939
  %v941 = vpop.f32.mrb[0].mxu0
  %v942 = vadd.f32 0.0, %v941
  %v943 = vpop.f32.mrb[0].mxu0
  %v944 = vpop.f32.mrb[0].mxu0
  %945 = vdwg.mxu0
  %946 = vmatprep.subr.bf16.mxu0 %v621
  %947 = vmatpush1.bf16.msra.mxu0 %v620
  %948 = vmatprep.subr.bf16.mxu0 %v625
  %949 = vmatpush1.bf16.msra.mxu0 %v624
  %950 = vmatprep.subr.bf16.mxu0 %v629
  %951 = vmatpush1.bf16.msra.mxu0 %v628
  %952 = vmatprep.subr.bf16.mxu0 %v633
  %953 = vmatpush1.bf16.msra.mxu0 %v632
  %954 = vmatprep.subr.bf16.mxu0 %v637
  %955 = vmatpush1.bf16.msra.mxu0 %v636
  %956 = vmatprep.subr.bf16.mxu0 %v641
  %957 = vmatpush1.bf16.msra.mxu0 %v640
  %958 = vmatprep.subr.bf16.mxu0 %v645
  %959 = vmatpush1.bf16.msra.mxu0 %v644
  %960 = vmatprep.subr.bf16.mxu0 %v649
  %961 = vmatpush1.bf16.msra.mxu0 %v648
  %962 = vmatprep.subr.bf16.mxu0 0
  %963 = vmatpush1.bf16.msra.mxu0 0
  %964 = vmatprep.subr.bf16.mxu0 0
  %965 = vmatpush1.bf16.msra.mxu0 0
  %966 = vmatprep.subr.bf16.mxu0 0
  %967 = vmatpush1.bf16.msra.mxu0 0
  %968 = vmatprep.subr.bf16.mxu0 0
  %969 = vmatpush1.bf16.msra.mxu0 0
  %970 = vmatprep.subr.bf16.mxu0 0
  %971 = vmatpush1.bf16.msra.mxu0 0
  %972 = vmatprep.subr.bf16.mxu0 0
  %973 = vmatpush1.bf16.msra.mxu0 0
  %974 = vmatprep.subr.bf16.mxu0 0
  %975 = vmatpush1.bf16.msra.mxu0 0
  %976 = vmatprep.subr.bf16.mxu0 0
  %977 = vmatpush1.bf16.msra.mxu0 0
  %978 = vmatprep.mubr.bf16.mxu0 0
  %979 = vmatmul.mubr.bf16.gmra.mrb[0].mxu0 %v904
  %v980 = vpop.f32.mrb[0].mxu0
  %v981 = vadd.f32 0.0, %v980
  %v982 = vpop.f32.mrb[0].mxu0
  %v983 = vadd.f32 0.0, %v982
  %v984 = vpop.f32.mrb[0].mxu0
  %v985 = vpop.f32.mrb[0].mxu0
  %986 = vdwg.mxu0
  %v987 = vadd.f32 %v900, %v940
  %v988 = vadd.f32 %v901, %v942
  %v989 = vadd.f32 %v902, %v981
  %v990 = vadd.f32 %v903, %v983
  %v991 = vmul.f32 %v987, 0.5
  %v992 = vtanh.pop %v991
  %v993 = vmul.f32 %v992, 0.5
  %v994 = vadd.f32 %v993, 0.5
  %v995 = vmul.f32 %v988, 0.5
  %v996 = vtanh.pop %v995
  %v997 = vmul.f32 %v996, 0.5
  %v998 = vadd.f32 %v997, 0.5
  %v999 = vtanh.pop %v989
  %v1000 = vmul.f32 %v990, 0.5
  %v1001 = vtanh.pop %v1000
  %v1002 = vmul.f32 %v1001, 0.5
  %v1003 = vadd.f32 %v1002, 0.5
  %v1004 = vmul.f32 %v998, %v894
  %v1005 = vmul.f32 %v994, %v999
  %v1006 = vadd.f32 %v1004, %v1005
  %v1007 = vtanh.pop %v1006
  %v1008 = vmul.f32 %v1003, %v1007
  %s1009 = scalar_lea.vmem %s4, 16
  %1010 = vst [vmem:[%s1009] sm:$0xff] %v1008
  %s1011 = scalar_lea.vmem [#allocation2], 96
  %v1012 = vld [vmem:[%s1011] sm:$0xff]
  %v1013 = vld [vmem:[%s1011 + $0x8] sm:$0xff]
  %v1014 = vld [vmem:[%s1011 + $0x10] sm:$0xff]
  %v1015 = vld [vmem:[%s1011 + $0x18] sm:$0xff]
  %v1016 = vpack.c.bf16 %v1008, %v1008
  %1017 = vmatprep.subr.bf16.mxu0 %v619
  %1018 = vmatpush1.bf16.msra.mxu0 %v618
  %1019 = vmatprep.subr.bf16.mxu0 %v623
  %1020 = vmatpush1.bf16.msra.mxu0 %v622
  %1021 = vmatprep.subr.bf16.mxu0 %v627
  %1022 = vmatpush1.bf16.msra.mxu0 %v626
  %1023 = vmatprep.subr.bf16.mxu0 %v631
  %1024 = vmatpush1.bf16.msra.mxu0 %v630
  %1025 = vmatprep.subr.bf16.mxu0 %v635
  %1026 = vmatpush1.bf16.msra.mxu0 %v634
  %1027 = vmatprep.subr.bf16.mxu0 %v639
  %1028 = vmatpush1.bf16.msra.mxu0 %v638
  %1029 = vmatprep.subr.bf16.mxu0 %v643
  %1030 = vmatpush1.bf16.msra.mxu0 %v642
  %1031 = vmatprep.subr.bf16.mxu0 %v647
  %1032 = vmatpush1.bf16.msra.mxu0 %v646
  %1033 = vmatprep.subr.bf16.mxu0 0
  %1034 = vmatpush1.bf16.msra.mxu0 0
  %1035 = vmatprep.subr.bf16.mxu0 0
  %1036 = vmatpush1.bf16.msra.mxu0 0
  %1037 = vmatprep.subr.bf16.mxu0 0
  %1038 = vmatpush1.bf16.msra.mxu0 0
  %1039 = vmatprep.subr.bf16.mxu0 0
  %1040 = vmatpush1.bf16.msra.mxu0 0
  %1041 = vmatprep.subr.bf16.mxu0 0
  %1042 = vmatpush1.bf16.msra.mxu0 0
  %1043 = vmatprep.subr.bf16.mxu0 0
  %1044 = vmatpush1.bf16.msra.mxu0 0
  %1045 = vmatprep.subr.bf16.mxu0 0
  %1046 = vmatpush1.bf16.msra.mxu0 0
  %1047 = vmatprep.subr.bf16.mxu0 0
  %1048 = vmatpush1.bf16.msra.mxu0 0
  %1049 = vmatprep.mubr.bf16.mxu0 0
  %1050 = vmatmul.mubr.bf16.gmra.mrb[0].mxu0 %v1016
  %v1051 = vpop.f32.mrb[0].mxu0
  %v1052 = vadd.f32 0.0, %v1051
  %v1053 = vpop.f32.mrb[0].mxu0
  %v1054 = vadd.f32 0.0, %v1053
  %v1055 = vpop.f32.mrb[0].mxu0
  %v1056 = vpop.f32.mrb[0].mxu0
  %1057 = vdwg.mxu0
  %1058 = vmatprep.subr.bf16.mxu0 %v621
  %1059 = vmatpush1.bf16.msra.mxu0 %v620
  %1060 = vmatprep.subr.bf16.mxu0 %v625
  %1061 = vmatpush1.bf16.msra.mxu0 %v624
  %1062 = vmatprep.subr.bf16.mxu0 %v629
  %1063 = vmatpush1.bf16.msra.mxu0 %v628
  %1064 = vmatprep.subr.bf16.mxu0 %v633
  %1065 = vmatpush1.bf16.msra.mxu0 %v632
  %1066 = vmatprep.subr.bf16.mxu0 %v637
  %1067 = vmatpush1.bf16.msra.mxu0 %v636
  %1068 = vmatprep.subr.bf16.mxu0 %v641
  %1069 = vmatpush1.bf16.msra.mxu0 %v640
  %1070 = vmatprep.subr.bf16.mxu0 %v645
  %1071 = vmatpush1.bf16.msra.mxu0 %v644
  %1072 = vmatprep.subr.bf16.mxu0 %v649
  %1073 = vmatpush1.bf16.msra.mxu0 %v648
  %1074 = vmatprep.subr.bf16.mxu0 0
  %1075 = vmatpush1.bf16.msra.mxu0 0
  %1076 = vmatprep.subr.bf16.mxu0 0
  %1077 = vmatpush1.bf16.msra.mxu0 0
  %1078 = vmatprep.subr.bf16.mxu0 0
  %1079 = vmatpush1.bf16.msra.mxu0 0
  %1080 = vmatprep.subr.bf16.mxu0 0
  %1081 = vmatpush1.bf16.msra.mxu0 0
  %1082 = vmatprep.subr.bf16.mxu0 0
  %1083 = vmatpush1.bf16.msra.mxu0 0
  %1084 = vmatprep.subr.bf16.mxu0 0
  %1085 = vmatpush1.bf16.msra.mxu0 0
  %1086 = vmatprep.subr.bf16.mxu0 0
  %1087 = vmatpush1.bf16.msra.mxu0 0
  %1088 = vmatprep.subr.bf16.mxu0 0
  %1089 = vmatpush1.bf16.msra.mxu0 0
  %1090 = vmatprep.mubr.bf16.mxu0 0
  %1091 = vmatmul.mubr.bf16.gmra.mrb[0].mxu0 %v1016
  %v1092 = vpop.f32.mrb[0].mxu0
  %v1093 = vadd.f32 0.0, %v1092
  %v1094 = vpop.f32.mrb[0].mxu0
  %v1095 = vadd.f32 0.0, %v1094
  %v1096 = vpop.f32.mrb[0].mxu0
  %v1097 = vpop.f32.mrb[0].mxu0
  %1098 = vdwg.mxu0
  %v1099 = vadd.f32 %v1012, %v1052
  %v1100 = vadd.f32 %v1013, %v1054
  %v1101 = vadd.f32 %v1014, %v1093
  %v1102 = vadd.f32 %v1015, %v1095
  %v1103 = vmul.f32 %v1099, 0.5
  %v1104 = vtanh.pop %v1103
  %v1105 = vmul.f32 %v1104, 0.5
  %v1106 = vadd.f32 %v1105, 0.5
  %v1107 = vmul.f32 %v1100, 0.5
  %v1108 = vtanh.pop %v1107
  %v1109 = vmul.f32 %v1108, 0.5
  %v1110 = vadd.f32 %v1109, 0.5
  %v1111 = vtanh.pop %v1101
  %v1112 = vmul.f32 %v1102, 0.5
  %v1113 = vtanh.pop %v1112
  %v1114 = vmul.f32 %v1113, 0.5
  %v1115 = vadd.f32 %v1114, 0.5
  %v1116 = vmul.f32 %v1110, %v1006
  %v1117 = vmul.f32 %v1106, %v1111
  %v1118 = vadd.f32 %v1116, %v1117
  %v1119 = vtanh.pop %v1118
  %v1120 = vmul.f32 %v1115, %v1119
  %s1121 = scalar_lea.vmem %s4, 24
  %1122 = vst [vmem:[%s1121] sm:$0xff] %v1120
  %s1123 = scalar_lea.vmem [#allocation2], 128
  %v1124 = vld [vmem:[%s1123] sm:$0xff]
  %v1125 = vld [vmem:[%s1123 + $0x8] sm:$0xff]
  %v1126 = vld [vmem:[%s1123 + $0x10] sm:$0xff]
  %v1127 = vld [vmem:[%s1123 + $0x18] sm:$0xff]
  %v1128 = vpack.c.bf16 %v1120, %v1120
  %1129 = vmatprep.subr.bf16.mxu0 %v619
  %1130 = vmatpush1.bf16.msra.mxu0 %v618
  %1131 = vmatprep.subr.bf16.mxu0 %v623
  %1132 = vmatpush1.bf16.msra.mxu0 %v622
  %1133 = vmatprep.subr.bf16.mxu0 %v627
  %1134 = vmatpush1.bf16.msra.mxu0 %v626
  %1135 = vmatprep.subr.bf16.mxu0 %v631
  %1136 = vmatpush1.bf16.msra.mxu0 %v630
  %1137 = vmatprep.subr.bf16.mxu0 %v635
  %1138 = vmatpush1.bf16.msra.mxu0 %v634
  %1139 = vmatprep.subr.bf16.mxu0 %v639
  %1140 = vmatpush1.bf16.msra.mxu0 %v638
  %1141 = vmatprep.subr.bf16.mxu0 %v643
  %1142 = vmatpush1.bf16.msra.mxu0 %v642
  %1143 = vmatprep.subr.bf16.mxu0 %v647
  %1144 = vmatpush1.bf16.msra.mxu0 %v646
  %1145 = vmatprep.subr.bf16.mxu0 0
  %1146 = vmatpush1.bf16.msra.mxu0 0
  %1147 = vmatprep.subr.bf16.mxu0 0
  %1148 = vmatpush1.bf16.msra.mxu0 0
  %1149 = vmatprep.subr.bf16.mxu0 0
  %1150 = vmatpush1.bf16.msra.mxu0 0
  %1151 = vmatprep.subr.bf16.mxu0 0
  %1152 = vmatpush1.bf16.msra.mxu0 0
  %1153 = vmatprep.subr.bf16.mxu0 0
  %1154 = vmatpush1.bf16.msra.mxu0 0
  %1155 = vmatprep.subr.bf16.mxu0 0
  %1156 = vmatpush1.bf16.msra.mxu0 0
  %1157 = vmatprep.subr.bf16.mxu0 0
  %1158 = vmatpush1.bf16.msra.mxu0 0
  %1159 = vmatprep.subr.bf16.mxu0 0
  %1160 = vmatpush1.bf16.msra.mxu0 0
  %1161 = vmatprep.mubr.bf16.mxu0 0
  %1162 = vmatmul.mubr.bf16.gmra.mrb[0].mxu0 %v1128
  %v1163 = vpop.f32.mrb[0].mxu0
  %v1164 = vadd.f32 0.0, %v1163
  %v1165 = vpop.f32.mrb[0].mxu0
  %v1166 = vadd.f32 0.0, %v1165
  %v1167 = vpop.f32.mrb[0].mxu0
  %v1168 = vpop.f32.mrb[0].mxu0
  %1169 = vdwg.mxu0
  %1170 = vmatprep.subr.bf16.mxu0 %v621
  %1171 = vmatpush1.bf16.msra.mxu0 %v620
  %1172 = vmatprep.subr.bf16.mxu0 %v625
  %1173 = vmatpush1.bf16.msra.mxu0 %v624
  %1174 = vmatprep.subr.bf16.mxu0 %v629
  %1175 = vmatpush1.bf16.msra.mxu0 %v628
  %1176 = vmatprep.subr.bf16.mxu0 %v633
  %1177 = vmatpush1.bf16.msra.mxu0 %v632
  %1178 = vmatprep.subr.bf16.mxu0 %v637
  %1179 = vmatpush1.bf16.msra.mxu0 %v636
  %1180 = vmatprep.subr.bf16.mxu0 %v641
  %1181 = vmatpush1.bf16.msra.mxu0 %v640
  %1182 = vmatprep.subr.bf16.mxu0 %v645
  %1183 = vmatpush1.bf16.msra.mxu0 %v644
  %1184 = vmatprep.subr.bf16.mxu0 %v649
  %1185 = vmatpush1.bf16.msra.mxu0 %v648
  %1186 = vmatprep.subr.bf16.mxu0 0
  %1187 = vmatpush1.bf16.msra.mxu0 0
  %1188 = vmatprep.subr.bf16.mxu0 0
  %1189 = vmatpush1.bf16.msra.mxu0 0
  %1190 = vmatprep.subr.bf16.mxu0 0
  %1191 = vmatpush1.bf16.msra.mxu0 0
  %1192 = vmatprep.subr.bf16.mxu0 0
  %1193 = vmatpush1.bf16.msra.mxu0 0
  %1194 = vmatprep.subr.bf16.mxu0 0
  %1195 = vmatpush1.bf16.msra.mxu0 0
  %1196 = vmatprep.subr.bf16.mxu0 0
  %1197 = vmatpush1.bf16.msra.mxu0 0
  %1198 = vmatprep.subr.bf16.mxu0 0
  %1199 = vmatpush1.bf16.msra.mxu0 0
  %1200 = vmatprep.subr.bf16.mxu0 0
  %1201 = vmatpush1.bf16.msra.mxu0 0
  %1202 = vmatprep.mubr.bf16.mxu0 0
  %1203 = vmatmul.mubr.bf16.gmra.mrb[0].mxu0 %v1128
  %v1204 = vpop.f32.mrb[0].mxu0
  %v1205 = vadd.f32 0.0, %v1204
  %v1206 = vpop.f32.mrb[0].mxu0
  %v1207 = vadd.f32 0.0, %v1206
  %v1208 = vpop.f32.mrb[0].mxu0
  %v1209 = vpop.f32.mrb[0].mxu0
  %1210 = vdwg.mxu0
  %v1211 = vadd.f32 %v1124, %v1164
  %v1212 = vadd.f32 %v1125, %v1166
  %v1213 = vadd.f32 %v1126, %v1205
  %v1214 = vadd.f32 %v1127, %v1207
  %v1215 = vmul.f32 %v1211, 0.5
  %v1216 = vtanh.pop %v1215
  %v1217 = vmul.f32 %v1216, 0.5
  %v1218 = vadd.f32 %v1217, 0.5
  %v1219 = vmul.f32 %v1212, 0.5
  %v1220 = vtanh.pop %v1219
  %v1221 = vmul.f32 %v1220, 0.5
  %v1222 = vadd.f32 %v1221, 0.5
  %v1223 = vtanh.pop %v1213
  %v1224 = vmul.f32 %v1214, 0.5
  %v1225 = vtanh.pop %v1224
  %v1226 = vmul.f32 %v1225, 0.5
  %v1227 = vadd.f32 %v1226, 0.5
  %v1228 = vmul.f32 %v1222, %v1118
  %v1229 = vmul.f32 %v1218, %v1223
  %v1230 = vadd.f32 %v1228, %v1229
  %v1231 = vtanh.pop %v1230
  %v1232 = vmul.f32 %v1227, %v1231
  %s1233 = scalar_lea.vmem %s4, 32
  %1234 = vst [vmem:[%s1233] sm:$0xff] %v1232
  %s1235 = scalar_lea.vmem [#allocation2], 160
  %v1236 = vld [vmem:[%s1235] sm:$0xff]
  %v1237 = vld [vmem:[%s1235 + $0x8] sm:$0xff]
  %v1238 = vld [vmem:[%s1235 + $0x10] sm:$0xff]
  %v1239 = vld [vmem:[%s1235 + $0x18] sm:$0xff]
  %v1240 = vpack.c.bf16 %v1232, %v1232
  %1241 = vmatprep.subr.bf16.mxu0 %v619
  %1242 = vmatpush1.bf16.msra.mxu0 %v618
  %1243 = vmatprep.subr.bf16.mxu0 %v623
  %1244 = vmatpush1.bf16.msra.mxu0 %v622
  %1245 = vmatprep.subr.bf16.mxu0 %v627
  %1246 = vmatpush1.bf16.msra.mxu0 %v626
  %1247 = vmatprep.subr.bf16.mxu0 %v631
  %1248 = vmatpush1.bf16.msra.mxu0 %v630
  %1249 = vmatprep.subr.bf16.mxu0 %v635
  %1250 = vmatpush1.bf16.msra.mxu0 %v634
  %1251 = vmatprep.subr.bf16.mxu0 %v639
  %1252 = vmatpush1.bf16.msra.mxu0 %v638
  %1253 = vmatprep.subr.bf16.mxu0 %v643
  %1254 = vmatpush1.bf16.msra.mxu0 %v642
  %1255 = vmatprep.subr.bf16.mxu0 %v647
  %1256 = vmatpush1.bf16.msra.mxu0 %v646
  %1257 = vmatprep.subr.bf16.mxu0 0
  %1258 = vmatpush1.bf16.msra.mxu0 0
  %1259 = vmatprep.subr.bf16.mxu0 0
  %1260 = vmatpush1.bf16.msra.mxu0 0
  %1261 = vmatprep.subr.bf16.mxu0 0
  %1262 = vmatpush1.bf16.msra.mxu0 0
  %1263 = vmatprep.subr.bf16.mxu0 0
  %1264 = vmatpush1.bf16.msra.mxu0 0
  %1265 = vmatprep.subr.bf16.mxu0 0
  %1266 = vmatpush1.bf16.msra.mxu0 0
  %1267 = vmatprep.subr.bf16.mxu0 0
  %1268 = vmatpush1.bf16.msra.mxu0 0
  %1269 = vmatprep.subr.bf16.mxu0 0
  %1270 = vmatpush1.bf16.msra.mxu0 0
  %1271 = vmatprep.subr.bf16.mxu0 0
  %1272 = vmatpush1.bf16.msra.mxu0 0
  %1273 = vmatprep.mubr.bf16.mxu0 0
  %1274 = vmatmul.mubr.bf16.gmra.mrb[0].mxu0 %v1240
  %v1275 = vpop.f32.mrb[0].mxu0
  %v1276 = vadd.f32 0.0, %v1275
  %v1277 = vpop.f32.mrb[0].mxu0
  %v1278 = vadd.f32 0.0, %v1277
  %v1279 = vpop.f32.mrb[0].mxu0
  %v1280 = vpop.f32.mrb[0].mxu0
  %1281 = vdwg.mxu0
  %1282 = vmatprep.subr.bf16.mxu0 %v621
  %1283 = vmatpush1.bf16.msra.mxu0 %v620
  %1284 = vmatprep.subr.bf16.mxu0 %v625
  %1285 = vmatpush1.bf16.msra.mxu0 %v624
  %1286 = vmatprep.subr.bf16.mxu0 %v629
  %1287 = vmatpush1.bf16.msra.mxu0 %v628
  %1288 = vmatprep.subr.bf16.mxu0 %v633
  %1289 = vmatpush1.bf16.msra.mxu0 %v632
  %1290 = vmatprep.subr.bf16.mxu0 %v637
  %1291 = vmatpush1.bf16.msra.mxu0 %v636
  %1292 = vmatprep.subr.bf16.mxu0 %v641
  %1293 = vmatpush1.bf16.msra.mxu0 %v640
  %1294 = vmatprep.subr.bf16.mxu0 %v645
  %1295 = vmatpush1.bf16.msra.mxu0 %v644
  %1296 = vmatprep.subr.bf16.mxu0 %v649
  %1297 = vmatpush1.bf16.msra.mxu0 %v648
  %1298 = vmatprep.subr.bf16.mxu0 0
  %1299 = vmatpush1.bf16.msra.mxu0 0
  %1300 = vmatprep.subr.bf16.mxu0 0
  %1301 = vmatpush1.bf16.msra.mxu0 0
  %1302 = vmatprep.subr.bf16.mxu0 0
  %1303 = vmatpush1.bf16.msra.mxu0 0
  %1304 = vmatprep.subr.bf16.mxu0 0
  %1305 = vmatpush1.bf16.msra.mxu0 0
  %1306 = vmatprep.subr.bf16.mxu0 0
  %1307 = vmatpush1.bf16.msra.mxu0 0
  %1308 = vmatprep.subr.bf16.mxu0 0
  %1309 = vmatpush1.bf16.msra.mxu0 0
  %1310 = vmatprep.subr.bf16.mxu0 0
  %1311 = vmatpush1.bf16.msra.mxu0 0
  %1312 = vmatprep.subr.bf16.mxu0 0
  %1313 = vmatpush1.bf16.msra.mxu0 0
  %1314 = vmatprep.mubr.bf16.mxu0 0
  %1315 = vmatmul.mubr.bf16.gmra.mrb[0].mxu0 %v1240
  %v1316 = vpop.f32.mrb[0].mxu0
  %v1317 = vadd.f32 0.0, %v1316
  %v1318 = vpop.f32.mrb[0].mxu0
  %v1319 = vadd.f32 0.0, %v1318
  %v1320 = vpop.f32.mrb[0].mxu0
  %v1321 = vpop.f32.mrb[0].mxu0
  %1322 = vdwg.mxu0
  %v1323 = vadd.f32 %v1236, %v1276
  %v1324 = vadd.f32 %v1237, %v1278
  %v1325 = vadd.f32 %v1238, %v1317
  %v1326 = vadd.f32 %v1239, %v1319
  %v1327 = vmul.f32 %v1323, 0.5
  %v1328 = vtanh.pop %v1327
  %v1329 = vmul.f32 %v1328, 0.5
  %v1330 = vadd.f32 %v1329, 0.5
  %v1331 = vmul.f32 %v1324, 0.5
  %v1332 = vtanh.pop %v1331
  %v1333 = vmul.f32 %v1332, 0.5
  %v1334 = vadd.f32 %v1333, 0.5
  %v1335 = vtanh.pop %v1325
  %v1336 = vmul.f32 %v1326, 0.5
  %v1337 = vtanh.pop %v1336
  %v1338 = vmul.f32 %v1337, 0.5
  %v1339 = vadd.f32 %v1338, 0.5
  %v1340 = vmul.f32 %v1334, %v1230
  %v1341 = vmul.f32 %v1330, %v1335
  %v1342 = vadd.f32 %v1340, %v1341
  %v1343 = vtanh.pop %v1342
  %v1344 = vmul.f32 %v1339, %v1343
  %s1345 = scalar_lea.vmem %s4, 40
  %1346 = vst [vmem:[%s1345] sm:$0xff] %v1344
  %s1347 = scalar_lea.vmem [#allocation2], 192
  %v1348 = vld [vmem:[%s1347] sm:$0xff]
  %v1349 = vld [vmem:[%s1347 + $0x8] sm:$0xff]
  %v1350 = vld [vmem:[%s1347 + $0x10] sm:$0xff]
  %v1351 = vld [vmem:[%s1347 + $0x18] sm:$0xff]
  %v1352 = vpack.c.bf16 %v1344, %v1344
  %1353 = vmatprep.subr.bf16.mxu0 %v619
  %1354 = vmatpush1.bf16.msra.mxu0 %v618
  %1355 = vmatprep.subr.bf16.mxu0 %v623
  %1356 = vmatpush1.bf16.msra.mxu0 %v622
  %1357 = vmatprep.subr.bf16.mxu0 %v627
  %1358 = vmatpush1.bf16.msra.mxu0 %v626
  %1359 = vmatprep.subr.bf16.mxu0 %v631
  %1360 = vmatpush1.bf16.msra.mxu0 %v630
  %1361 = vmatprep.subr.bf16.mxu0 %v635
  %1362 = vmatpush1.bf16.msra.mxu0 %v634
  %1363 = vmatprep.subr.bf16.mxu0 %v639
  %1364 = vmatpush1.bf16.msra.mxu0 %v638
  %1365 = vmatprep.subr.bf16.mxu0 %v643
  %1366 = vmatpush1.bf16.msra.mxu0 %v642
  %1367 = vmatprep.subr.bf16.mxu0 %v647
  %1368 = vmatpush1.bf16.msra.mxu0 %v646
  %1369 = vmatprep.subr.bf16.mxu0 0
  %1370 = vmatpush1.bf16.msra.mxu0 0
  %1371 = vmatprep.subr.bf16.mxu0 0
  %1372 = vmatpush1.bf16.msra.mxu0 0
  %1373 = vmatprep.subr.bf16.mxu0 0
  %1374 = vmatpush1.bf16.msra.mxu0 0
  %1375 = vmatprep.subr.bf16.mxu0 0
  %1376 = vmatpush1.bf16.msra.mxu0 0
  %1377 = vmatprep.subr.bf16.mxu0 0
  %1378 = vmatpush1.bf16.msra.mxu0 0
  %1379 = vmatprep.subr.bf16.mxu0 0
  %1380 = vmatpush1.bf16.msra.mxu0 0
  %1381 = vmatprep.subr.bf16.mxu0 0
  %1382 = vmatpush1.bf16.msra.mxu0 0
  %1383 = vmatprep.subr.bf16.mxu0 0
  %1384 = vmatpush1.bf16.msra.mxu0 0
  %1385 = vmatprep.mubr.bf16.mxu0 0
  %1386 = vmatmul.mubr.bf16.gmra.mrb[0].mxu0 %v1352
  %v1387 = vpop.f32.mrb[0].mxu0
  %v1388 = vadd.f32 0.0, %v1387
  %v1389 = vpop.f32.mrb[0].mxu0
  %v1390 = vadd.f32 0.0, %v1389
  %v1391 = vpop.f32.mrb[0].mxu0
  %v1392 = vpop.f32.mrb[0].mxu0
  %1393 = vdwg.mxu0
  %1394 = vmatprep.subr.bf16.mxu0 %v621
  %1395 = vmatpush1.bf16.msra.mxu0 %v620
  %1396 = vmatprep.subr.bf16.mxu0 %v625
  %1397 = vmatpush1.bf16.msra.mxu0 %v624
  %1398 = vmatprep.subr.bf16.mxu0 %v629
  %1399 = vmatpush1.bf16.msra.mxu0 %v628
  %1400 = vmatprep.subr.bf16.mxu0 %v633
  %1401 = vmatpush1.bf16.msra.mxu0 %v632
  %1402 = vmatprep.subr.bf16.mxu0 %v637
  %1403 = vmatpush1.bf16.msra.mxu0 %v636
  %1404 = vmatprep.subr.bf16.mxu0 %v641
  %1405 = vmatpush1.bf16.msra.mxu0 %v640
  %1406 = vmatprep.subr.bf16.mxu0 %v645
  %1407 = vmatpush1.bf16.msra.mxu0 %v644
  %1408 = vmatprep.subr.bf16.mxu0 %v649
  %1409 = vmatpush1.bf16.msra.mxu0 %v648
  %1410 = vmatprep.subr.bf16.mxu0 0
  %1411 = vmatpush1.bf16.msra.mxu0 0
  %1412 = vmatprep.subr.bf16.mxu0 0
  %1413 = vmatpush1.bf16.msra.mxu0 0
  %1414 = vmatprep.subr.bf16.mxu0 0
  %1415 = vmatpush1.bf16.msra.mxu0 0
  %1416 = vmatprep.subr.bf16.mxu0 0
  %1417 = vmatpush1.bf16.msra.mxu0 0
  %1418 = vmatprep.subr.bf16.mxu0 0
  %1419 = vmatpush1.bf16.msra.mxu0 0
  %1420 = vmatprep.subr.bf16.mxu0 0
  %1421 = vmatpush1.bf16.msra.mxu0 0
  %1422 = vmatprep.subr.bf16.mxu0 0
  %1423 = vmatpush1.bf16.msra.mxu0 0
  %1424 = vmatprep.subr.bf16.mxu0 0
  %1425 = vmatpush1.bf16.msra.mxu0 0
  %1426 = vmatprep.mubr.bf16.mxu0 0
  %1427 = vmatmul.mubr.bf16.gmra.mrb[0].mxu0 %v1352
  %v1428 = vpop.f32.mrb[0].mxu0
  %v1429 = vadd.f32 0.0, %v1428
  %v1430 = vpop.f32.mrb[0].mxu0
  %v1431 = vadd.f32 0.0, %v1430
  %v1432 = vpop.f32.mrb[0].mxu0
  %v1433 = vpop.f32.mrb[0].mxu0
  %1434 = vdwg.mxu0
  %v1435 = vadd.f32 %v1348, %v1388
  %v1436 = vadd.f32 %v1349, %v1390
  %v1437 = vadd.f32 %v1350, %v1429
  %v1438 = vadd.f32 %v1351, %v1431
  %v1439 = vmul.f32 %v1435, 0.5
  %v1440 = vtanh.pop %v1439
  %v1441 = vmul.f32 %v1440, 0.5
  %v1442 = vadd.f32 %v1441, 0.5
  %v1443 = vmul.f32 %v1436, 0.5
  %v1444 = vtanh.pop %v1443
  %v1445 = vmul.f32 %v1444, 0.5
  %v1446 = vadd.f32 %v1445, 0.5
  %v1447 = vtanh.pop %v1437
  %v1448 = vmul.f32 %v1438, 0.5
  %v1449 = vtanh.pop %v1448
  %v1450 = vmul.f32 %v1449, 0.5
  %v1451 = vadd.f32 %v1450, 0.5
  %v1452 = vmul.f32 %v1446, %v1342
  %v1453 = vmul.f32 %v1442, %v1447
  %v1454 = vadd.f32 %v1452, %v1453
  %v1455 = vtanh.pop %v1454
  %v1456 = vmul.f32 %v1451, %v1455
  %s1457 = scalar_lea.vmem %s4, 48
  %1458 = vst [vmem:[%s1457] sm:$0xff] %v1456
  %s1459 = scalar_lea.vmem [#allocation2], 224
  %v1460 = vld [vmem:[%s1459] sm:$0xff]
  %v1461 = vld [vmem:[%s1459 + $0x8] sm:$0xff]
  %v1462 = vld [vmem:[%s1459 + $0x10] sm:$0xff]
  %v1463 = vld [vmem:[%s1459 + $0x18] sm:$0xff]
  %v1464 = vpack.c.bf16 %v1456, %v1456
  %1465 = vmatprep.subr.bf16.mxu0 %v619
  %1466 = vmatpush1.bf16.msra.mxu0 %v618
  %1467 = vmatprep.subr.bf16.mxu0 %v623
  %1468 = vmatpush1.bf16.msra.mxu0 %v622
  %1469 = vmatprep.subr.bf16.mxu0 %v627
  %1470 = vmatpush1.bf16.msra.mxu0 %v626
  %1471 = vmatprep.subr.bf16.mxu0 %v631
  %1472 = vmatpush1.bf16.msra.mxu0 %v630
  %1473 = vmatprep.subr.bf16.mxu0 %v635
  %1474 = vmatpush1.bf16.msra.mxu0 %v634
  %1475 = vmatprep.subr.bf16.mxu0 %v639
  %1476 = vmatpush1.bf16.msra.mxu0 %v638
  %1477 = vmatprep.subr.bf16.mxu0 %v643
  %1478 = vmatpush1.bf16.msra.mxu0 %v642
  %1479 = vmatprep.subr.bf16.mxu0 %v647
  %1480 = vmatpush1.bf16.msra.mxu0 %v646
  %1481 = vmatprep.subr.bf16.mxu0 0
  %1482 = vmatpush1.bf16.msra.mxu0 0
  %1483 = vmatprep.subr.bf16.mxu0 0
  %1484 = vmatpush1.bf16.msra.mxu0 0
  %1485 = vmatprep.subr.bf16.mxu0 0
  %1486 = vmatpush1.bf16.msra.mxu0 0
  %1487 = vmatprep.subr.bf16.mxu0 0
  %1488 = vmatpush1.bf16.msra.mxu0 0
  %1489 = vmatprep.subr.bf16.mxu0 0
  %1490 = vmatpush1.bf16.msra.mxu0 0
  %1491 = vmatprep.subr.bf16.mxu0 0
  %1492 = vmatpush1.bf16.msra.mxu0 0
  %1493 = vmatprep.subr.bf16.mxu0 0
  %1494 = vmatpush1.bf16.msra.mxu0 0
  %1495 = vmatprep.subr.bf16.mxu0 0
  %1496 = vmatpush1.bf16.msra.mxu0 0
  %1497 = vmatprep.mubr.bf16.mxu0 0
  %1498 = vmatmul.mubr.bf16.gmra.mrb[0].mxu0 %v1464
  %v1499 = vpop.f32.mrb[0].mxu0
  %v1500 = vadd.f32 0.0, %v1499
  %v1501 = vpop.f32.mrb[0].mxu0
  %v1502 = vadd.f32 0.0, %v1501
  %v1503 = vpop.f32.mrb[0].mxu0
  %v1504 = vpop.f32.mrb[0].mxu0
  %1505 = vdwg.mxu0
  %1506 = vmatprep.subr.bf16.mxu0 %v621
  %1507 = vmatpush1.bf16.msra.mxu0 %v620
  %1508 = vmatprep.subr.bf16.mxu0 %v625
  %1509 = vmatpush1.bf16.msra.mxu0 %v624
  %1510 = vmatprep.subr.bf16.mxu0 %v629
  %1511 = vmatpush1.bf16.msra.mxu0 %v628
  %1512 = vmatprep.subr.bf16.mxu0 %v633
  %1513 = vmatpush1.bf16.msra.mxu0 %v632
  %1514 = vmatprep.subr.bf16.mxu0 %v637
  %1515 = vmatpush1.bf16.msra.mxu0 %v636
  %1516 = vmatprep.subr.bf16.mxu0 %v641
  %1517 = vmatpush1.bf16.msra.mxu0 %v640
  %1518 = vmatprep.subr.bf16.mxu0 %v645
  %1519 = vmatpush1.bf16.msra.mxu0 %v644
  %1520 = vmatprep.subr.bf16.mxu0 %v649
  %1521 = vmatpush1.bf16.msra.mxu0 %v648
  %1522 = vmatprep.subr.bf16.mxu0 0
  %1523 = vmatpush1.bf16.msra.mxu0 0
  %1524 = vmatprep.subr.bf16.mxu0 0
  %1525 = vmatpush1.bf16.msra.mxu0 0
  %1526 = vmatprep.subr.bf16.mxu0 0
  %1527 = vmatpush1.bf16.msra.mxu0 0
  %1528 = vmatprep.subr.bf16.mxu0 0
  %1529 = vmatpush1.bf16.msra.mxu0 0
  %1530 = vmatprep.subr.bf16.mxu0 0
  %1531 = vmatpush1.bf16.msra.mxu0 0
  %1532 = vmatprep.subr.bf16.mxu0 0
  %1533 = vmatpush1.bf16.msra.mxu0 0
  %1534 = vmatprep.subr.bf16.mxu0 0
  %1535 = vmatpush1.bf16.msra.mxu0 0
  %1536 = vmatprep.subr.bf16.mxu0 0
  %1537 = vmatpush1.bf16.msra.mxu0 0
  %1538 = vmatprep.mubr.bf16.mxu0 0
  %1539 = vmatmul.mubr.bf16.gmra.mrb[0].mxu0 %v1464
  %v1540 = vpop.f32.mrb[0].mxu0
  %v1541 = vadd.f32 0.0, %v1540
  %v1542 = vpop.f32.mrb[0].mxu0
  %v1543 = vadd.f32 0.0, %v1542
  %v1544 = vpop.f32.mrb[0].mxu0
  %v1545 = vpop.f32.mrb[0].mxu0
  %1546 = vdwg.mxu0
  %v1547 = vadd.f32 %v1460, %v1500
  %v1548 = vadd.f32 %v1461, %v1502
  %v1549 = vadd.f32 %v1462, %v1541
  %v1550 = vadd.f32 %v1463, %v1543
  %v1551 = vmul.f32 %v1547, 0.5
  %v1552 = vtanh.pop %v1551
  %v1553 = vmul.f32 %v1552, 0.5
  %v1554 = vadd.f32 %v1553, 0.5
  %v1555 = vmul.f32 %v1548, 0.5
  %v1556 = vtanh.pop %v1555
  %v1557 = vmul.f32 %v1556, 0.5
  %v1558 = vadd.f32 %v1557, 0.5
  %v1559 = vtanh.pop %v1549
  %v1560 = vmul.f32 %v1550, 0.5
  %v1561 = vtanh.pop %v1560
  %v1562 = vmul.f32 %v1561, 0.5
  %v1563 = vadd.f32 %v1562, 0.5
  %v1564 = vmul.f32 %v1558, %v1454
  %v1565 = vmul.f32 %v1554, %v1559
  %v1566 = vadd.f32 %v1564, %v1565
  %v1567 = vtanh.pop %v1566
  %v1568 = vmul.f32 %v1563, %v1567
  %s1569 = scalar_lea.vmem %s4, 56
  %1570 = vst [vmem:[%s1569] sm:$0xff] %v1568
  %1571 = vst [vmem:[#allocation3] sm:$0xff] %v1568
  %1572 = vst [vmem:[#allocation4] sm:$0xff] %v1566
  // Predicated region
  $region22: #{encoder_forward.3} parent=0 // pred_check
    %p1573 = pneg %p21
  $region23: #{encoder_forward.3} parent=0 // pred_check_branch
    %1575 = sbr.rel (%p1573) target = $region25
  $region24: #{encoder_forward.3} parent=0 // pred_region
    %1576 = vst [vmem:[%s5] sm:$0xff] %v1568
    %1577 = vst [vmem:[%s6] sm:$0xff] %v1566
  $region25: #{encoder_forward.3} parent=0 // pred_fallthru
    _
  // Predicated region
  $region26: #{encoder_forward.3} parent=0 // pred_check
    _
  $region27: #{encoder_forward.3} parent=0 // pred_check_branch
    %1579 = sbr.rel (0) target = $region29
  $region28: #{encoder_forward.3} parent=0 // pred_region
    _
  $region29: #{encoder_forward.3} parent=0 // pred_fallthru
    _
  // Predicated region
  $region30: #{encoder_forward.3} parent=0 // pred_check
    _
  $region31: #{encoder_forward.3} parent=0 // pred_check_branch
    %1581 = sbr.rel (0) target = $region33
  $region32: #{encoder_forward.3} parent=0 // pred_region
    _
  $region33: #{encoder_forward.3} parent=0 // pred_fallthru
    _
  // Predicated region
  $region34: #{encoder_forward.3} parent=0 // pred_check
    _
  $region35: #{encoder_forward.3} parent=0 // pred_check_branch
    %1583 = sbr.rel (0) target = $region37
  $region36: #{encoder_forward.3} parent=0 // pred_region
    _
  $region37: #{encoder_forward.3} parent=0 // pred_fallthru
    _
  // Predicated region
  $region38: #{encoder_forward.3} parent=0 // pred_check
    _
  $region39: #{encoder_forward.3} parent=0 // pred_check_branch
    %1585 = sbr.rel (0) target = $region41
  $region40: #{encoder_forward.3} parent=0 // pred_region
    _
  $region41: #{encoder_forward.3} parent=0 // pred_fallthru
    _
  // Predicated region
  $region42: #{encoder_forward.3} parent=0 // pred_check
    _
  $region43: #{encoder_forward.3} parent=0 // pred_check_branch
    %1587 = sbr.rel (0) target = $region45
  $region44: #{encoder_forward.3} parent=0 // pred_region
    _
  $region45: #{encoder_forward.3} parent=0 // pred_fallthru
    _
  // Predicated region
  $region46: #{encoder_forward.3} parent=0 // pred_check
    _
  $region47: #{encoder_forward.3} parent=0 // pred_check_branch
    %1589 = sbr.rel (0) target = $region49
  $region48: #{encoder_forward.3} parent=0 // pred_region
    _
  $region49: #{encoder_forward.3} parent=0 // pred_fallthru
    _

// kernel: encoder_forward.2
$region0: #{encoder_forward.2}
  #allocation0 [shape = 'u32[]', space=smem, size = 0x4, offset = 0x4, fixed_abs, tag = 'smem constant byte address 0x4 - core index']
  #allocation1 [shape = 'u32[144,128]{1,0:T(1,128)}', space=vmem, size = 0x12000, scoped, tag = 'internal scratch']
  #allocation2 [shape = 'f32[8,8,512]{2,1,0:T(8,128)}', space=vmem, size = 0x20000, scoped, tag = 'scratch operand']
  #allocation3 [shape = 'f32[8,128]{1,0:T(8,128)}', space=vmem, size = 0x1000, scoped, tag = 'scratch operand']
  #allocation4 [shape = 'f32[8,128]{1,0:T(8,128)}', space=vmem, size = 0x1000, scoped, tag = 'scratch operand']
  %s0 = inlined_call_operand.vmem [shape: f32[8,8,16], index: 0, kind: input, shape index: {}]
  %s1 = inlined_call_operand.vmem [shape: bf16[16,512], index: 1, kind: input, shape index: {}]
  %s2 = inlined_call_operand.vmem [shape: f32[1,512], index: 2, kind: input, shape index: {}]
  %s3 = inlined_call_operand.vmem [shape: bf16[128,512], index: 3, kind: input, shape index: {}]
  %s4 = inlined_call_operand.vmem [shape: bf16[8,8,128], index: 4, kind: output, shape index: {0}]
  %s5 = inlined_call_operand.vmem [shape: f32[8,128], index: 5, kind: output, shape index: {1}]
  %s6 = inlined_call_operand.vmem [shape: f32[8,128], index: 6, kind: output, shape index: {2}]
  %7 = xla_tuple %s4, %s5, %s6
  %s8 = sld [smem:[#allocation0]]
  $region50: #{encoder_forward.2} parent=0
    _
  %s10 = ssub.s32 1, %s8
  %s11 = scalar_select 0, %s10, %s8
  // Predicated region
  $region2: #{encoder_forward.2} parent=0 // pred_check
    _
  $region3: #{encoder_forward.2} parent=0 // pred_check_branch
    %13 = sbr.rel (0) target = $region5
  $region4: #{encoder_forward.2} parent=0 // pred_region
    _
  $region5: #{encoder_forward.2} parent=0 // pred_fallthru
    _
  // Predicated region
  $region6: #{encoder_forward.2} parent=0 // pred_check
    _
  $region7: #{encoder_forward.2} parent=0 // pred_check_branch
    %15 = sbr.rel (0) target = $region9
  $region8: #{encoder_forward.2} parent=0 // pred_region
    _
  $region9: #{encoder_forward.2} parent=0 // pred_fallthru
    _
  // Predicated region
  $region10: #{encoder_forward.2} parent=0 // pred_check
    _
  $region11: #{encoder_forward.2} parent=0 // pred_check_branch
    %17 = sbr.rel (0) target = $region13
  $region12: #{encoder_forward.2} parent=0 // pred_region
    _
  $region13: #{encoder_forward.2} parent=0 // pred_fallthru
    _
  // Predicated region
  $region14: #{encoder_forward.2} parent=0 // pred_check
    _
  $region15: #{encoder_forward.2} parent=0 // pred_check_branch
    %19 = sbr.rel (0) target = $region17
  $region16: #{encoder_forward.2} parent=0 // pred_region
    _
  $region17: #{encoder_forward.2} parent=0 // pred_fallthru
    _
  %p21 = scmp.eq.s32.totalorder 0, 0
  // Predicated region
  $region18: #{encoder_forward.2} parent=0 // pred_check
    %p22 = pneg %p21
  $region19: #{encoder_forward.2} parent=0 // pred_check_branch
    %24 = sbr.rel (%p22) target = $region21
  $region20: #{encoder_forward.2} parent=0 // pred_region
    %25 = vst [vmem:[#allocation3] sm:$0xff] 0.0
    %26 = vst [vmem:[#allocation4] sm:$0xff] 0.0
  $region21: #{encoder_forward.2} parent=0 // pred_fallthru
    _
  %v27 = vld [vmem:[%s0] sm:$0xff]
  %v28 = vld [vmem:[%s0 + $0x8] sm:$0xff]
  %v29 = vld [vmem:[%s0 + $0x10] sm:$0xff]
  %v30 = vld [vmem:[%s0 + $0x18] sm:$0xff]
  %v31 = vld [vmem:[%s0 + $0x20] sm:$0xff]
  %v32 = vld [vmem:[%s0 + $0x28] sm:$0xff]
  %v33 = vld [vmem:[%s0 + $0x30] sm:$0xff]
  %v34 = vld [vmem:[%s0 + $0x38] sm:$0xff]
  %v35 = vpack.c.bf16 %v27, %v27
  %v36 = vpack.c.bf16 %v28, %v28
  %v37 = vpack.c.bf16 %v29, %v29
  %v38 = vpack.c.bf16 %v30, %v30
  %v39 = vpack.c.bf16 %v31, %v31
  %v40 = vpack.c.bf16 %v32, %v32
  %v41 = vpack.c.bf16 %v33, %v33
  %v42 = vpack.c.bf16 %v34, %v34
  %v43 = vld [vmem:[%s1] sm:$0xff]
  %v44 = vld [vmem:[%s1 + $0x8] sm:$0xff]
  %v45 = vld [vmem:[%s1 + $0x10] sm:$0xff]
  %v46 = vld [vmem:[%s1 + $0x18] sm:$0xff]
  %v55 = vunpack.c.l.b16 %v35
  %v56 = vunpack.c.l.b16 %v36
  %v57 = vunpack.c.l.b16 %v37
  %v58 = vunpack.c.l.b16 %v38
  %v59 = vunpack.c.l.b16 %v39
  %v60 = vunpack.c.l.b16 %v40
  %v61 = vunpack.c.l.b16 %v41
  %v62 = vunpack.c.l.b16 %v42
  %v63 = vpack.c.b16 %v56, %v55
  %v64 = vpack.c.b16 %v58, %v57
  %v65 = vpack.c.b16 %v60, %v59
  %v66 = vpack.c.b16 %v62, %v61
  %v71 = vunpack.c.l.b16 %v43
  %v72 = vunpack.c.h.b16 %v43
  %v73 = vunpack.c.l.b16 %v44
  %v74 = vunpack.c.h.b16 %v44
  %v75 = vunpack.c.l.b16 %v45
  %v76 = vunpack.c.h.b16 %v45
  %v77 = vunpack.c.l.b16 %v46
  %v78 = vunpack.c.h.b16 %v46
  %v79 = vpack.c.b16 %v75, %v71
  %v80 = vpack.c.b16 %v76, %v72
  %v81 = vpack.c.b16 %v77, %v73
  %v82 = vpack.c.b16 %v78, %v74
  %vm87 = vcmask 130048
  %v89 = vsel %vm87, %v63, 0
  %v92 = vsel %vm87, %v64, 0
  %v95 = vsel %vm87, %v65, 0
  %v98 = vsel %vm87, %v66, 0
  %100 = vmatprep.subr.bf16.mxu0 %v80
  %101 = vmatpush1.bf16.msra.mxu0 %v79
  %102 = vmatprep.subr.bf16.mxu0 0
  %103 = vmatpush1.bf16.msra.mxu0 0
  %104 = vmatprep.subr.bf16.mxu0 0
  %105 = vmatpush1.bf16.msra.mxu0 0
  %106 = vmatprep.subr.bf16.mxu0 0
  %107 = vmatpush1.bf16.msra.mxu0 0
  %108 = vmatprep.subr.bf16.mxu0 0
  %109 = vmatpush1.bf16.msra.mxu0 0
  %110 = vmatprep.subr.bf16.mxu0 0
  %111 = vmatpush1.bf16.msra.mxu0 0
  %112 = vmatprep.subr.bf16.mxu0 0
  %113 = vmatpush1.bf16.msra.mxu0 0
  %114 = vmatprep.subr.bf16.mxu0 0
  %115 = vmatpush1.bf16.msra.mxu0 0
  %116 = vmatprep.subr.bf16.mxu0 0
  %117 = vmatpush1.bf16.msra.mxu0 0
  %118 = vmatprep.subr.bf16.mxu0 0
  %119 = vmatpush1.bf16.msra.mxu0 0
  %120 = vmatprep.subr.bf16.mxu0 0
  %121 = vmatpush1.bf16.msra.mxu0 0
  %122 = vmatprep.subr.bf16.mxu0 0
  %123 = vmatpush1.bf16.msra.mxu0 0
  %124 = vmatprep.subr.bf16.mxu0 0
  %125 = vmatpush1.bf16.msra.mxu0 0
  %126 = vmatprep.subr.bf16.mxu0 0
  %127 = vmatpush1.bf16.msra.mxu0 0
  %128 = vmatprep.subr.bf16.mxu0 0
  %129 = vmatpush1.bf16.msra.mxu0 0
  %130 = vmatprep.subr.bf16.mxu0 0
  %131 = vmatpush1.bf16.msra.mxu0 0
  %132 = vmatprep.mubr.bf16.mxu0 0
  %133 = vmatmul.mubr.bf16.gmra.mrb[0].mxu0 %v89
  %v134 = vpop.f32.mrb[0].mxu0
  %v135 = vadd.f32 0.0, %v134
  %v136 = vpop.f32.mrb[0].mxu0
  %v137 = vadd.f32 0.0, %v136
  %v138 = vpop.f32.mrb[0].mxu0
  %v139 = vadd.f32 0.0, %v138
  %v140 = vpop.f32.mrb[0].mxu0
  %v141 = vadd.f32 0.0, %v140
  %142 = vmatprep.mubr.bf16.mxu0 0
  %143 = vmatmul.mubr.bf16.gmra.mrb[0].mxu0 %v92
  %v144 = vpop.f32.mrb[0].mxu0
  %v145 = vadd.f32 0.0, %v144
  %v146 = vpop.f32.mrb[0].mxu0
  %v147 = vadd.f32 0.0, %v146
  %v148 = vpop.f32.mrb[0].mxu0
  %v149 = vadd.f32 0.0, %v148
  %v150 = vpop.f32.mrb[0].mxu0
  %v151 = vadd.f32 0.0, %v150
  %152 = vmatprep.mubr.bf16.mxu0 0
  %153 = vmatmul.mubr.bf16.gmra.mrb[0].mxu0 %v95
  %v154 = vpop.f32.mrb[0].mxu0
  %v155 = vadd.f32 0.0, %v154
  %v156 = vpop.f32.mrb[0].mxu0
  %v157 = vadd.f32 0.0, %v156
  %v158 = vpop.f32.mrb[0].mxu0
  %v159 = vadd.f32 0.0, %v158
  %v160 = vpop.f32.mrb[0].mxu0
  %v161 = vadd.f32 0.0, %v160
  %162 = vmatprep.mubr.bf16.mxu0 0
  %163 = vmatmul.mubr.bf16.gmra.mrb[0].mxu0 %v98
  %v164 = vpop.f32.mrb[0].mxu0
  %v165 = vadd.f32 0.0, %v164
  %v166 = vpop.f32.mrb[0].mxu0
  %v167 = vadd.f32 0.0, %v166
  %v168 = vpop.f32.mrb[0].mxu0
  %v169 = vadd.f32 0.0, %v168
  %v170 = vpop.f32.mrb[0].mxu0
  %v171 = vadd.f32 0.0, %v170
  %172 = vdwg.mxu0
  %173 = vmatprep.subr.bf16.mxu0 %v82
  %174 = vmatpush1.bf16.msra.mxu0 %v81
  %175 = vmatprep.subr.bf16.mxu0 0
  %176 = vmatpush1.bf16.msra.mxu0 0
  %177 = vmatprep.subr.bf16.mxu0 0
  %178 = vmatpush1.bf16.msra.mxu0 0
  %179 = vmatprep.subr.bf16.mxu0 0
  %180 = vmatpush1.bf16.msra.mxu0 0
  %181 = vmatprep.subr.bf16.mxu0 0
  %182 = vmatpush1.bf16.msra.mxu0 0
  %183 = vmatprep.subr.bf16.mxu0 0
  %184 = vmatpush1.bf16.msra.mxu0 0
  %185 = vmatprep.subr.bf16.mxu0 0
  %186 = vmatpush1.bf16.msra.mxu0 0
  %187 = vmatprep.subr.bf16.mxu0 0
  %188 = vmatpush1.bf16.msra.mxu0 0
  %189 = vmatprep.subr.bf16.mxu0 0
  %190 = vmatpush1.bf16.msra.mxu0 0
  %191 = vmatprep.subr.bf16.mxu0 0
  %192 = vmatpush1.bf16.msra.mxu0 0
  %193 = vmatprep.subr.bf16.mxu0 0
  %194 = vmatpush1.bf16.msra.mxu0 0
  %195 = vmatprep.subr.bf16.mxu0 0
  %196 = vmatpush1.bf16.msra.mxu0 0
  %197 = vmatprep.subr.bf16.mxu0 0
  %198 = vmatpush1.bf16.msra.mxu0 0
  %199 = vmatprep.subr.bf16.mxu0 0
  %200 = vmatpush1.bf16.msra.mxu0 0
  %201 = vmatprep.subr.bf16.mxu0 0
  %202 = vmatpush1.bf16.msra.mxu0 0
  %203 = vmatprep.subr.bf16.mxu0 0
  %204 = vmatpush1.bf16.msra.mxu0 0
  %205 = vmatprep.mubr.bf16.mxu0 0
  %206 = vmatmul.mubr.bf16.gmra.mrb[0].mxu0 %v89
  %v207 = vpop.f32.mrb[0].mxu0
  %v208 = vadd.f32 0.0, %v207
  %v209 = vpop.f32.mrb[0].mxu0
  %v210 = vadd.f32 0.0, %v209
  %v211 = vpop.f32.mrb[0].mxu0
  %v212 = vadd.f32 0.0, %v211
  %v213 = vpop.f32.mrb[0].mxu0
  %v214 = vadd.f32 0.0, %v213
  %215 = vmatprep.mubr.bf16.mxu0 0
  %216 = vmatmul.mubr.bf16.gmra.mrb[0].mxu0 %v92
  %v217 = vpop.f32.mrb[0].mxu0
  %v218 = vadd.f32 0.0, %v217
  %v219 = vpop.f32.mrb[0].mxu0
  %v220 = vadd.f32 0.0, %v219
  %v221 = vpop.f32.mrb[0].mxu0
  %v222 = vadd.f32 0.0, %v221
  %v223 = vpop.f32.mrb[0].mxu0
  %v224 = vadd.f32 0.0, %v223
  %225 = vmatprep.mubr.bf16.mxu0 0
  %226 = vmatmul.mubr.bf16.gmra.mrb[0].mxu0 %v95
  %v227 = vpop.f32.mrb[0].mxu0
  %v228 = vadd.f32 0.0, %v227
  %v229 = vpop.f32.mrb[0].mxu0
  %v230 = vadd.f32 0.0, %v229
  %v231 = vpop.f32.mrb[0].mxu0
  %v232 = vadd.f32 0.0, %v231
  %v233 = vpop.f32.mrb[0].mxu0
  %v234 = vadd.f32 0.0, %v233
  %235 = vmatprep.mubr.bf16.mxu0 0
  %236 = vmatmul.mubr.bf16.gmra.mrb[0].mxu0 %v98
  %v237 = vpop.f32.mrb[0].mxu0
  %v238 = vadd.f32 0.0, %v237
  %v239 = vpop.f32.mrb[0].mxu0
  %v240 = vadd.f32 0.0, %v239
  %v241 = vpop.f32.mrb[0].mxu0
  %v242 = vadd.f32 0.0, %v241
  %v243 = vpop.f32.mrb[0].mxu0
  %v244 = vadd.f32 0.0, %v243
  %245 = vdwg.mxu0
  %v246 = vld [vmem:[%s2] sm:$0xf]
  %v248 = vlaneseq
  %v249 = vshrl.u32 %v248, 7
  %v250 = vsub.s32 0, %v249
  %v251 = vrot.slane %v246, %v250
  %v252 = vlaneseq
  %v253 = vshrl.u32 %v252, 7
  %v254 = vsub.s32 1, %v253
  %v255 = vrot.slane %v246, %v254
  %v256 = vlaneseq
  %v257 = vshrl.u32 %v256, 7
  %v258 = vsub.s32 2, %v257
  %v259 = vrot.slane %v246, %v258
  %v260 = vlaneseq
  %v261 = vshrl.u32 %v260, 7
  %v262 = vsub.s32 3, %v261
  %v263 = vrot.slane %v246, %v262
  %v268 = vadd.f32 %v135, %v251
  %v269 = vadd.f32 %v137, %v255
  %v270 = vadd.f32 %v208, %v259
  %v271 = vadd.f32 %v210, %v263
  %v272 = vadd.f32 %v139, %v251
  %v273 = vadd.f32 %v141, %v255
  %v274 = vadd.f32 %v212, %v259
  %v275 = vadd.f32 %v214, %v263
  %v276 = vadd.f32 %v145, %v251
  %v277 = vadd.f32 %v147, %v255
  %v278 = vadd.f32 %v218, %v259
  %v279 = vadd.f32 %v220, %v263
  %v280 = vadd.f32 %v149, %v251
  %v281 = vadd.f32 %v151, %v255
  %v282 = vadd.f32 %v222, %v259
  %v283 = vadd.f32 %v224, %v263
  %v284 = vadd.f32 %v155, %v251
  %v285 = vadd.f32 %v157, %v255
  %v286 = vadd.f32 %v228, %v259
  %v287 = vadd.f32 %v230, %v263
  %v288 = vadd.f32 %v159, %v251
  %v289 = vadd.f32 %v161, %v255
  %v290 = vadd.f32 %v232, %v259
  %v291 = vadd.f32 %v234, %v263
  %v292 = vadd.f32 %v165, %v251
  %v293 = vadd.f32 %v167, %v255
  %v294 = vadd.f32 %v238, %v259
  %v295 = vadd.f32 %v240, %v263
  %v296 = vadd.f32 %v169, %v251
  %v297 = vadd.f32 %v171, %v255
  %v298 = vadd.f32 %v242, %v259
  %v299 = vadd.f32 %v244, %v263
  %300 = vst [vmem:[#allocation2] sm:$0xff] %v268
  %301 = vst [vmem:[#allocation2 + $0x8] sm:$0xff] %v269
  %302 = vst [vmem:[#allocation2 + $0x10] sm:$0xff] %v270
  %303 = vst [vmem:[#allocation2 + $0x18] sm:$0xff] %v271
  %304 = vst [vmem:[#allocation2 + $0x20] sm:$0xff] %v272
  %305 = vst [vmem:[#allocation2 + $0x28] sm:$0xff] %v273
  %306 = vst [vmem:[#allocation2 + $0x30] sm:$0xff] %v274
  %307 = vst [vmem:[#allocation2 + $0x38] sm:$0xff] %v275
  %308 = vst [vmem:[#allocation2 + $0x40] sm:$0xff] %v276
  %309 = vst [vmem:[#allocation2 + $0x48] sm:$0xff] %v277
  %310 = vst [vmem:[#allocation2 + $0x50] sm:$0xff] %v278
  %311 = vst [vmem:[#allocation2 + $0x58] sm:$0xff] %v279
  %312 = vst [vmem:[#allocation2 + $0x60] sm:$0xff] %v280
  %313 = vst [vmem:[#allocation2 + $0x68] sm:$0xff] %v281
  %314 = vst [vmem:[#allocation2 + $0x70] sm:$0xff] %v282
  %315 = vst [vmem:[#allocation2 + $0x78] sm:$0xff] %v283
  %316 = vst [vmem:[#allocation2 + $0x80] sm:$0xff] %v284
  %317 = vst [vmem:[#allocation2 + $0x88] sm:$0xff] %v285
  %318 = vst [vmem:[#allocation2 + $0x90] sm:$0xff] %v286
  %319 = vst [vmem:[#allocation2 + $0x98] sm:$0xff] %v287
  %320 = vst [vmem:[#allocation2 + $0xa0] sm:$0xff] %v288
  %321 = vst [vmem:[#allocation2 + $0xa8] sm:$0xff] %v289
  %322 = vst [vmem:[#allocation2 + $0xb0] sm:$0xff] %v290
  %323 = vst [vmem:[#allocation2 + $0xb8] sm:$0xff] %v291
  %324 = vst [vmem:[#allocation2 + $0xc0] sm:$0xff] %v292
  %325 = vst [vmem:[#allocation2 + $0xc8] sm:$0xff] %v293
  %326 = vst [vmem:[#allocation2 + $0xd0] sm:$0xff] %v294
  %327 = vst [vmem:[#allocation2 + $0xd8] sm:$0xff] %v295
  %328 = vst [vmem:[#allocation2 + $0xe0] sm:$0xff] %v296
  %329 = vst [vmem:[#allocation2 + $0xe8] sm:$0xff] %v297
  %330 = vst [vmem:[#allocation2 + $0xf0] sm:$0xff] %v298
  %331 = vst [vmem:[#allocation2 + $0xf8] sm:$0xff] %v299
  %v332 = vld [vmem:[%s3] sm:$0xff]
  %v333 = vld [vmem:[%s3 + $0x8] sm:$0xff]
  %v334 = vld [vmem:[%s3 + $0x10] sm:$0xff]
  %v335 = vld [vmem:[%s3 + $0x18] sm:$0xff]
  %v336 = vld [vmem:[%s3 + $0x20] sm:$0xff]
  %v337 = vld [vmem:[%s3 + $0x28] sm:$0xff]
  %v338 = vld [vmem:[%s3 + $0x30] sm:$0xff]
  %v339 = vld [vmem:[%s3 + $0x38] sm:$0xff]
  %v340 = vld [vmem:[%s3 + $0x40] sm:$0xff]
  %v341 = vld [vmem:[%s3 + $0x48] sm:$0xff]
  %v342 = vld [vmem:[%s3 + $0x50] sm:$0xff]
  %v343 = vld [vmem:[%s3 + $0x58] sm:$0xff]
  %v344 = vld [vmem:[%s3 + $0x60] sm:$0xff]
  %v345 = vld [vmem:[%s3 + $0x68] sm:$0xff]
  %v346 = vld [vmem:[%s3 + $0x70] sm:$0xff]
  %v347 = vld [vmem:[%s3 + $0x78] sm:$0xff]
  %v348 = vld [vmem:[%s3 + $0x80] sm:$0xff]
  %v349 = vld [vmem:[%s3 + $0x88] sm:$0xff]
  %v350 = vld [vmem:[%s3 + $0x90] sm:$0xff]
  %v351 = vld [vmem:[%s3 + $0x98] sm:$0xff]
  %v352 = vld [vmem:[%s3 + $0xa0] sm:$0xff]
  %v353 = vld [vmem:[%s3 + $0xa8] sm:$0xff]
  %v354 = vld [vmem:[%s3 + $0xb0] sm:$0xff]
  %v355 = vld [vmem:[%s3 + $0xb8] sm:$0xff]
  %v356 = vld [vmem:[%s3 + $0xc0] sm:$0xff]
  %v357 = vld [vmem:[%s3 + $0xc8] sm:$0xff]
  %v358 = vld [vmem:[%s3 + $0xd0] sm:$0xff]
  %v359 = vld [vmem:[%s3 + $0xd8] sm:$0xff]
  %v360 = vld [vmem:[%s3 + $0xe0] sm:$0xff]
  %v361 = vld [vmem:[%s3 + $0xe8] sm:$0xff]
  %v362 = vld [vmem:[%s3 + $0xf0] sm:$0xff]
  %v363 = vld [vmem:[%s3 + $0xf8] sm:$0xff]
  %v364 = vld [vmem:[#allocation3] sm:$0xff]
  %v365 = vld [vmem:[#allocation4] sm:$0xff]
  %v366 = vld [vmem:[#allocation2] sm:$0xff]
  %v367 = vld [vmem:[#allocation2 + $0x8] sm:$0xff]
  %v368 = vld [vmem:[#allocation2 + $0x10] sm:$0xff]
  %v369 = vld [vmem:[#allocation2 + $0x18] sm:$0xff]
  %v370 = vpack.c.bf16 %v364, %v364
  %v403 = vunpack.c.l.b16 %v332
  %v404 = vunpack.c.h.b16 %v332
  %v405 = vunpack.c.l.b16 %v333
  %v406 = vunpack.c.h.b16 %v333
  %v407 = vunpack.c.l.b16 %v334
  %v408 = vunpack.c.h.b16 %v334
  %v409 = vunpack.c.l.b16 %v335
  %v410 = vunpack.c.h.b16 %v335
  %v411 = vunpack.c.l.b16 %v336
  %v412 = vunpack.c.h.b16 %v336
  %v413 = vunpack.c.l.b16 %v337
  %v414 = vunpack.c.h.b16 %v337
  %v415 = vunpack.c.l.b16 %v338
  %v416 = vunpack.c.h.b16 %v338
  %v417 = vunpack.c.l.b16 %v339
  %v418 = vunpack.c.h.b16 %v339
  %v419 = vunpack.c.l.b16 %v340
  %v420 = vunpack.c.h.b16 %v340
  %v421 = vunpack.c.l.b16 %v341
  %v422 = vunpack.c.h.b16 %v341
  %v423 = vunpack.c.l.b16 %v342
  %v424 = vunpack.c.h.b16 %v342
  %v425 = vunpack.c.l.b16 %v343
  %v426 = vunpack.c.h.b16 %v343
  %v427 = vunpack.c.l.b16 %v344
  %v428 = vunpack.c.h.b16 %v344
  %v429 = vunpack.c.l.b16 %v345
  %v430 = vunpack.c.h.b16 %v345
  %v431 = vunpack.c.l.b16 %v346
  %v432 = vunpack.c.h.b16 %v346
  %v433 = vunpack.c.l.b16 %v347
  %v434 = vunpack.c.h.b16 %v347
  %v435 = vunpack.c.l.b16 %v348
  %v436 = vunpack.c.h.b16 %v348
  %v437 = vunpack.c.l.b16 %v349
  %v438 = vunpack.c.h.b16 %v349
  %v439 = vunpack.c.l.b16 %v350
  %v440 = vunpack.c.h.b16 %v350
  %v441 = vunpack.c.l.b16 %v351
  %v442 = vunpack.c.h.b16 %v351
  %v443 = vunpack.c.l.b16 %v352
  %v444 = vunpack.c.h.b16 %v352
  %v445 = vunpack.c.l.b16 %v353
  %v446 = vunpack.c.h.b16 %v353
  %v447 = vunpack.c.l.b16 %v354
  %v448 = vunpack.c.h.b16 %v354
  %v449 = vunpack.c.l.b16 %v355
  %v450 = vunpack.c.h.b16 %v355
  %v451 = vunpack.c.l.b16 %v356
  %v452 = vunpack.c.h.b16 %v356
  %v453 = vunpack.c.l.b16 %v357
  %v454 = vunpack.c.h.b16 %v357
  %v455 = vunpack.c.l.b16 %v358
  %v456 = vunpack.c.h.b16 %v358
  %v457 = vunpack.c.l.b16 %v359
  %v458 = vunpack.c.h.b16 %v359
  %v459 = vunpack.c.l.b16 %v360
  %v460 = vunpack.c.h.b16 %v360
  %v461 = vunpack.c.l.b16 %v361
  %v462 = vunpack.c.h.b16 %v361
  %v463 = vunpack.c.l.b16 %v362
  %v464 = vunpack.c.h.b16 %v362
  %v465 = vunpack.c.l.b16 %v363
  %v466 = vunpack.c.h.b16 %v363
  %v467 = vpack.c.b16 %v407, %v403
  %v468 = vpack.c.b16 %v408, %v404
  %v469 = vpack.c.b16 %v409, %v405
  %v470 = vpack.c.b16 %v410, %v406
  %v471 = vpack.c.b16 %v415, %v411
  %v472 = vpack.c.b16 %v416, %v412
  %v473 = vpack.c.b16 %v417, %v413
  %v474 = vpack.c.b16 %v418, %v414
  %v475 = vpack.c.b16 %v423, %v419
  %v476 = vpack.c.b16 %v424, %v420
  %v477 = vpack.c.b16 %v425, %v421
  %v478 = vpack.c.b16 %v426, %v422
  %v479 = vpack.c.b16 %v431, %v427
  %v480 = vpack.c.b16 %v432, %v428
  %v481 = vpack.c.b16 %v433, %v429
  %v482 = vpack.c.b16 %v434, %v430
  %v483 = vpack.c.b16 %v439, %v435
  %v484 = vpack.c.b16 %v440, %v436
  %v485 = vpack.c.b16 %v441, %v437
  %v486 = vpack.c.b16 %v442, %v438
  %v487 = vpack.c.b16 %v447, %v443
  %v488 = vpack.c.b16 %v448, %v444
  %v489 = vpack.c.b16 %v449, %v445
  %v490 = vpack.c.b16 %v450, %v446
  %v491 = vpack.c.b16 %v455, %v451
  %v492 = vpack.c.b16 %v456, %v452
  %v493 = vpack.c.b16 %v457, %v453
  %v494 = vpack.c.b16 %v458, %v454
  %v495 = vpack.c.b16 %v463, %v459
  %v496 = vpack.c.b16 %v464, %v460
  %v497 = vpack.c.b16 %v465, %v461
  %v498 = vpack.c.b16 %v466, %v462
  %531 = vmatprep.subr.bf16.mxu0 %v468
  %532 = vmatpush1.bf16.msra.mxu0 %v467
  %533 = vmatprep.subr.bf16.mxu0 %v472
  %534 = vmatpush1.bf16.msra.mxu0 %v471
  %535 = vmatprep.subr.bf16.mxu0 %v476
  %536 = vmatpush1.bf16.msra.mxu0 %v475
  %537 = vmatprep.subr.bf16.mxu0 %v480
  %538 = vmatpush1.bf16.msra.mxu0 %v479
  %539 = vmatprep.subr.bf16.mxu0 %v484
  %540 = vmatpush1.bf16.msra.mxu0 %v483
  %541 = vmatprep.subr.bf16.mxu0 %v488
  %542 = vmatpush1.bf16.msra.mxu0 %v487
  %543 = vmatprep.subr.bf16.mxu0 %v492
  %544 = vmatpush1.bf16.msra.mxu0 %v491
  %545 = vmatprep.subr.bf16.mxu0 %v496
  %546 = vmatpush1.bf16.msra.mxu0 %v495
  %547 = vmatprep.subr.bf16.mxu0 0
  %548 = vmatpush1.bf16.msra.mxu0 0
  %549 = vmatprep.subr.bf16.mxu0 0
  %550 = vmatpush1.bf16.msra.mxu0 0
  %551 = vmatprep.subr.bf16.mxu0 0
  %552 = vmatpush1.bf16.msra.mxu0 0
  %553 = vmatprep.subr.bf16.mxu0 0
  %554 = vmatpush1.bf16.msra.mxu0 0
  %555 = vmatprep.subr.bf16.mxu0 0
  %556 = vmatpush1.bf16.msra.mxu0 0
  %557 = vmatprep.subr.bf16.mxu0 0
  %558 = vmatpush1.bf16.msra.mxu0 0
  %559 = vmatprep.subr.bf16.mxu0 0
  %560 = vmatpush1.bf16.msra.mxu0 0
  %561 = vmatprep.subr.bf16.mxu0 0
  %562 = vmatpush1.bf16.msra.mxu0 0
  %563 = vmatprep.mubr.bf16.mxu0 0
  %564 = vmatmul.mubr.bf16.gmra.mrb[0].mxu0 %v370
  %v565 = vpop.f32.mrb[0].mxu0
  %v566 = vadd.f32 0.0, %v565
  %v567 = vpop.f32.mrb[0].mxu0
  %v568 = vadd.f32 0.0, %v567
  %v569 = vpop.f32.mrb[0].mxu0
  %v570 = vpop.f32.mrb[0].mxu0
  %571 = vdwg.mxu0
  %572 = vmatprep.subr.bf16.mxu0 %v470
  %573 = vmatpush1.bf16.msra.mxu0 %v469
  %574 = vmatprep.subr.bf16.mxu0 %v474
  %575 = vmatpush1.bf16.msra.mxu0 %v473
  %576 = vmatprep.subr.bf16.mxu0 %v478
  %577 = vmatpush1.bf16.msra.mxu0 %v477
  %578 = vmatprep.subr.bf16.mxu0 %v482
  %579 = vmatpush1.bf16.msra.mxu0 %v481
  %580 = vmatprep.subr.bf16.mxu0 %v486
  %581 = vmatpush1.bf16.msra.mxu0 %v485
  %582 = vmatprep.subr.bf16.mxu0 %v490
  %583 = vmatpush1.bf16.msra.mxu0 %v489
  %584 = vmatprep.subr.bf16.mxu0 %v494
  %585 = vmatpush1.bf16.msra.mxu0 %v493
  %586 = vmatprep.subr.bf16.mxu0 %v498
  %587 = vmatpush1.bf16.msra.mxu0 %v497
  %588 = vmatprep.subr.bf16.mxu0 0
  %589 = vmatpush1.bf16.msra.mxu0 0
  %590 = vmatprep.subr.bf16.mxu0 0
  %591 = vmatpush1.bf16.msra.mxu0 0
  %592 = vmatprep.subr.bf16.mxu0 0
  %593 = vmatpush1.bf16.msra.mxu0 0
  %594 = vmatprep.subr.bf16.mxu0 0
  %595 = vmatpush1.bf16.msra.mxu0 0
  %596 = vmatprep.subr.bf16.mxu0 0
  %597 = vmatpush1.bf16.msra.mxu0 0
  %598 = vmatprep.subr.bf16.mxu0 0
  %599 = vmatpush1.bf16.msra.mxu0 0
  %600 = vmatprep.subr.bf16.mxu0 0
  %601 = vmatpush1.bf16.msra.mxu0 0
  %602 = vmatprep.subr.bf16.mxu0 0
  %603 = vmatpush1.bf16.msra.mxu0 0
  %604 = vmatprep.mubr.bf16.mxu0 0
  %605 = vmatmul.mubr.bf16.gmra.mrb[0].mxu0 %v370
  %v606 = vpop.f32.mrb[0].mxu0
  %v607 = vadd.f32 0.0, %v606
  %v608 = vpop.f32.mrb[0].mxu0
  %v609 = vadd.f32 0.0, %v608
  %v610 = vpop.f32.mrb[0].mxu0
  %v611 = vpop.f32.mrb[0].mxu0
  %612 = vdwg.mxu0
  %v613 = vadd.f32 %v366, %v566
  %v614 = vadd.f32 %v367, %v568
  %v615 = vadd.f32 %v368, %v607
  %v616 = vadd.f32 %v369, %v609
  %v617 = vmul.f32 %v613, 0.5
  %v618 = vtanh.pop %v617
  %v619 = vmul.f32 %v618, 0.5
  %v620 = vadd.f32 %v619, 0.5
  %v621 = vmul.f32 %v614, 0.5
  %v622 = vtanh.pop %v621
  %v623 = vmul.f32 %v622, 0.5
  %v624 = vadd.f32 %v623, 0.5
  %v625 = vtanh.pop %v615
  %v626 = vmul.f32 %v616, 0.5
  %v627 = vtanh.pop %v626
  %v628 = vmul.f32 %v627, 0.5
  %v629 = vadd.f32 %v628, 0.5
  %v630 = vmul.f32 %v624, %v365
  %v631 = vmul.f32 %v620, %v625
  %v632 = vadd.f32 %v630, %v631
  %v633 = vtanh.pop %v632
  %v634 = vmul.f32 %v629, %v633
  %v635 = vpack.c.bf16 %v634, %v634
  %636 = vst [vmem:[%s4] sm:$0xf] %v635
  %s637 = scalar_lea.vmem [#allocation2], 32
  %v638 = vld [vmem:[%s637] sm:$0xff]
  %v639 = vld [vmem:[%s637 + $0x8] sm:$0xff]
  %v640 = vld [vmem:[%s637 + $0x10] sm:$0xff]
  %v641 = vld [vmem:[%s637 + $0x18] sm:$0xff]
  %642 = vmatprep.subr.bf16.mxu0 %v468
  %643 = vmatpush1.bf16.msra.mxu0 %v467
  %644 = vmatprep.subr.bf16.mxu0 %v472
  %645 = vmatpush1.bf16.msra.mxu0 %v471
  %646 = vmatprep.subr.bf16.mxu0 %v476
  %647 = vmatpush1.bf16.msra.mxu0 %v475
  %648 = vmatprep.subr.bf16.mxu0 %v480
  %649 = vmatpush1.bf16.msra.mxu0 %v479
  %650 = vmatprep.subr.bf16.mxu0 %v484
  %651 = vmatpush1.bf16.msra.mxu0 %v483
  %652 = vmatprep.subr.bf16.mxu0 %v488
  %653 = vmatpush1.bf16.msra.mxu0 %v487
  %654 = vmatprep.subr.bf16.mxu0 %v492
  %655 = vmatpush1.bf16.msra.mxu0 %v491
  %656 = vmatprep.subr.bf16.mxu0 %v496
  %657 = vmatpush1.bf16.msra.mxu0 %v495
  %658 = vmatprep.subr.bf16.mxu0 0
  %659 = vmatpush1.bf16.msra.mxu0 0
  %660 = vmatprep.subr.bf16.mxu0 0
  %661 = vmatpush1.bf16.msra.mxu0 0
  %662 = vmatprep.subr.bf16.mxu0 0
  %663 = vmatpush1.bf16.msra.mxu0 0
  %664 = vmatprep.subr.bf16.mxu0 0
  %665 = vmatpush1.bf16.msra.mxu0 0
  %666 = vmatprep.subr.bf16.mxu0 0
  %667 = vmatpush1.bf16.msra.mxu0 0
  %668 = vmatprep.subr.bf16.mxu0 0
  %669 = vmatpush1.bf16.msra.mxu0 0
  %670 = vmatprep.subr.bf16.mxu0 0
  %671 = vmatpush1.bf16.msra.mxu0 0
  %672 = vmatprep.subr.bf16.mxu0 0
  %673 = vmatpush1.bf16.msra.mxu0 0
  %674 = vmatprep.mubr.bf16.mxu0 0
  %675 = vmatmul.mubr.bf16.gmra.mrb[0].mxu0 %v635
  %v676 = vpop.f32.mrb[0].mxu0
  %v677 = vadd.f32 0.0, %v676
  %v678 = vpop.f32.mrb[0].mxu0
  %v679 = vadd.f32 0.0, %v678
  %v680 = vpop.f32.mrb[0].mxu0
  %v681 = vpop.f32.mrb[0].mxu0
  %682 = vdwg.mxu0
  %683 = vmatprep.subr.bf16.mxu0 %v470
  %684 = vmatpush1.bf16.msra.mxu0 %v469
  %685 = vmatprep.subr.bf16.mxu0 %v474
  %686 = vmatpush1.bf16.msra.mxu0 %v473
  %687 = vmatprep.subr.bf16.mxu0 %v478
  %688 = vmatpush1.bf16.msra.mxu0 %v477
  %689 = vmatprep.subr.bf16.mxu0 %v482
  %690 = vmatpush1.bf16.msra.mxu0 %v481
  %691 = vmatprep.subr.bf16.mxu0 %v486
  %692 = vmatpush1.bf16.msra.mxu0 %v485
  %693 = vmatprep.subr.bf16.mxu0 %v490
  %694 = vmatpush1.bf16.msra.mxu0 %v489
  %695 = vmatprep.subr.bf16.mxu0 %v494
  %696 = vmatpush1.bf16.msra.mxu0 %v493
  %697 = vmatprep.subr.bf16.mxu0 %v498
  %698 = vmatpush1.bf16.msra.mxu0 %v497
  %699 = vmatprep.subr.bf16.mxu0 0
  %700 = vmatpush1.bf16.msra.mxu0 0
  %701 = vmatprep.subr.bf16.mxu0 0
  %702 = vmatpush1.bf16.msra.mxu0 0
  %703 = vmatprep.subr.bf16.mxu0 0
  %704 = vmatpush1.bf16.msra.mxu0 0
  %705 = vmatprep.subr.bf16.mxu0 0
  %706 = vmatpush1.bf16.msra.mxu0 0
  %707 = vmatprep.subr.bf16.mxu0 0
  %708 = vmatpush1.bf16.msra.mxu0 0
  %709 = vmatprep.subr.bf16.mxu0 0
  %710 = vmatpush1.bf16.msra.mxu0 0
  %711 = vmatprep.subr.bf16.mxu0 0
  %712 = vmatpush1.bf16.msra.mxu0 0
  %713 = vmatprep.subr.bf16.mxu0 0
  %714 = vmatpush1.bf16.msra.mxu0 0
  %715 = vmatprep.mubr.bf16.mxu0 0
  %716 = vmatmul.mubr.bf16.gmra.mrb[0].mxu0 %v635
  %v717 = vpop.f32.mrb[0].mxu0
  %v718 = vadd.f32 0.0, %v717
  %v719 = vpop.f32.mrb[0].mxu0
  %v720 = vadd.f32 0.0, %v719
  %v721 = vpop.f32.mrb[0].mxu0
  %v722 = vpop.f32.mrb[0].mxu0
  %723 = vdwg.mxu0
  %v724 = vadd.f32 %v638, %v677
  %v725 = vadd.f32 %v639, %v679
  %v726 = vadd.f32 %v640, %v718
  %v727 = vadd.f32 %v641, %v720
  %v728 = vmul.f32 %v724, 0.5
  %v729 = vtanh.pop %v728
  %v730 = vmul.f32 %v729, 0.5
  %v731 = vadd.f32 %v730, 0.5
  %v732 = vmul.f32 %v725, 0.5
  %v733 = vtanh.pop %v732
  %v734 = vmul.f32 %v733, 0.5
  %v735 = vadd.f32 %v734, 0.5
  %v736 = vtanh.pop %v726
  %v737 = vmul.f32 %v727, 0.5
  %v738 = vtanh.pop %v737
  %v739 = vmul.f32 %v738, 0.5
  %v740 = vadd.f32 %v739, 0.5
  %v741 = vmul.f32 %v735, %v632
  %v742 = vmul.f32 %v731, %v736
  %v743 = vadd.f32 %v741, %v742
  %v744 = vtanh.pop %v743
  %v745 = vmul.f32 %v740, %v744
  %v746 = vpack.c.bf16 %v745, %v745
  %s747 = scalar_lea.vmem %s4, 4
  %748 = vst [vmem:[%s747] sm:$0xf] %v746
  %s749 = scalar_lea.vmem [#allocation2], 64
  %v750 = vld [vmem:[%s749] sm:$0xff]
  %v751 = vld [vmem:[%s749 + $0x8] sm:$0xff]
  %v752 = vld [vmem:[%s749 + $0x10] sm:$0xff]
  %v753 = vld [vmem:[%s749 + $0x18] sm:$0xff]
  %754 = vmatprep.subr.bf16.mxu0 %v468
  %755 = vmatpush1.bf16.msra.mxu0 %v467
  %756 = vmatprep.subr.bf16.mxu0 %v472
  %757 = vmatpush1.bf16.msra.mxu0 %v471
  %758 = vmatprep.subr.bf16.mxu0 %v476
  %759 = vmatpush1.bf16.msra.mxu0 %v475
  %760 = vmatprep.subr.bf16.mxu0 %v480
  %761 = vmatpush1.bf16.msra.mxu0 %v479
  %762 = vmatprep.subr.bf16.mxu0 %v484
  %763 = vmatpush1.bf16.msra.mxu0 %v483
  %764 = vmatprep.subr.bf16.mxu0 %v488
  %765 = vmatpush1.bf16.msra.mxu0 %v487
  %766 = vmatprep.subr.bf16.mxu0 %v492
  %767 = vmatpush1.bf16.msra.mxu0 %v491
  %768 = vmatprep.subr.bf16.mxu0 %v496
  %769 = vmatpush1.bf16.msra.mxu0 %v495
  %770 = vmatprep.subr.bf16.mxu0 0
  %771 = vmatpush1.bf16.msra.mxu0 0
  %772 = vmatprep.subr.bf16.mxu0 0
  %773 = vmatpush1.bf16.msra.mxu0 0
  %774 = vmatprep.subr.bf16.mxu0 0
  %775 = vmatpush1.bf16.msra.mxu0 0
  %776 = vmatprep.subr.bf16.mxu0 0
  %777 = vmatpush1.bf16.msra.mxu0 0
  %778 = vmatprep.subr.bf16.mxu0 0
  %779 = vmatpush1.bf16.msra.mxu0 0
  %780 = vmatprep.subr.bf16.mxu0 0
  %781 = vmatpush1.bf16.msra.mxu0 0
  %782 = vmatprep.subr.bf16.mxu0 0
  %783 = vmatpush1.bf16.msra.mxu0 0
  %784 = vmatprep.subr.bf16.mxu0 0
  %785 = vmatpush1.bf16.msra.mxu0 0
  %786 = vmatprep.mubr.bf16.mxu0 0
  %787 = vmatmul.mubr.bf16.gmra.mrb[0].mxu0 %v746
  %v788 = vpop.f32.mrb[0].mxu0
  %v789 = vadd.f32 0.0, %v788
  %v790 = vpop.f32.mrb[0].mxu0
  %v791 = vadd.f32 0.0, %v790
  %v792 = vpop.f32.mrb[0].mxu0
  %v793 = vpop.f32.mrb[0].mxu0
  %794 = vdwg.mxu0
  %795 = vmatprep.subr.bf16.mxu0 %v470
  %796 = vmatpush1.bf16.msra.mxu0 %v469
  %797 = vmatprep.subr.bf16.mxu0 %v474
  %798 = vmatpush1.bf16.msra.mxu0 %v473
  %799 = vmatprep.subr.bf16.mxu0 %v478
  %800 = vmatpush1.bf16.msra.mxu0 %v477
  %801 = vmatprep.subr.bf16.mxu0 %v482
  %802 = vmatpush1.bf16.msra.mxu0 %v481
  %803 = vmatprep.subr.bf16.mxu0 %v486
  %804 = vmatpush1.bf16.msra.mxu0 %v485
  %805 = vmatprep.subr.bf16.mxu0 %v490
  %806 = vmatpush1.bf16.msra.mxu0 %v489
  %807 = vmatprep.subr.bf16.mxu0 %v494
  %808 = vmatpush1.bf16.msra.mxu0 %v493
  %809 = vmatprep.subr.bf16.mxu0 %v498
  %810 = vmatpush1.bf16.msra.mxu0 %v497
  %811 = vmatprep.subr.bf16.mxu0 0
  %812 = vmatpush1.bf16.msra.mxu0 0
  %813 = vmatprep.subr.bf16.mxu0 0
  %814 = vmatpush1.bf16.msra.mxu0 0
  %815 = vmatprep.subr.bf16.mxu0 0
  %816 = vmatpush1.bf16.msra.mxu0 0
  %817 = vmatprep.subr.bf16.mxu0 0
  %818 = vmatpush1.bf16.msra.mxu0 0
  %819 = vmatprep.subr.bf16.mxu0 0
  %820 = vmatpush1.bf16.msra.mxu0 0
  %821 = vmatprep.subr.bf16.mxu0 0
  %822 = vmatpush1.bf16.msra.mxu0 0
  %823 = vmatprep.subr.bf16.mxu0 0
  %824 = vmatpush1.bf16.msra.mxu0 0
  %825 = vmatprep.subr.bf16.mxu0 0
  %826 = vmatpush1.bf16.msra.mxu0 0
  %827 = vmatprep.mubr.bf16.mxu0 0
  %828 = vmatmul.mubr.bf16.gmra.mrb[0].mxu0 %v746
  %v829 = vpop.f32.mrb[0].mxu0
  %v830 = vadd.f32 0.0, %v829
  %v831 = vpop.f32.mrb[0].mxu0
  %v832 = vadd.f32 0.0, %v831
  %v833 = vpop.f32.mrb[0].mxu0
  %v834 = vpop.f32.mrb[0].mxu0
  %835 = vdwg.mxu0
  %v836 = vadd.f32 %v750, %v789
  %v837 = vadd.f32 %v751, %v791
  %v838 = vadd.f32 %v752, %v830
  %v839 = vadd.f32 %v753, %v832
  %v840 = vmul.f32 %v836, 0.5
  %v841 = vtanh.pop %v840
  %v842 = vmul.f32 %v841, 0.5
  %v843 = vadd.f32 %v842, 0.5
  %v844 = vmul.f32 %v837, 0.5
  %v845 = vtanh.pop %v844
  %v846 = vmul.f32 %v845, 0.5
  %v847 = vadd.f32 %v846, 0.5
  %v848 = vtanh.pop %v838
  %v849 = vmul.f32 %v839, 0.5
  %v850 = vtanh.pop %v849
  %v851 = vmul.f32 %v850, 0.5
  %v852 = vadd.f32 %v851, 0.5
  %v853 = vmul.f32 %v847, %v743
  %v854 = vmul.f32 %v843, %v848
  %v855 = vadd.f32 %v853, %v854
  %v856 = vtanh.pop %v855
  %v857 = vmul.f32 %v852, %v856
  %v858 = vpack.c.bf16 %v857, %v857
  %s859 = scalar_lea.vmem %s4, 8
  %860 = vst [vmem:[%s859] sm:$0xf] %v858
  %s861 = scalar_lea.vmem [#allocation2], 96
  %v862 = vld [vmem:[%s861] sm:$0xff]
  %v863 = vld [vmem:[%s861 + $0x8] sm:$0xff]
  %v864 = vld [vmem:[%s861 + $0x10] sm:$0xff]
  %v865 = vld [vmem:[%s861 + $0x18] sm:$0xff]
  %866 = vmatprep.subr.bf16.mxu0 %v468
  %867 = vmatpush1.bf16.msra.mxu0 %v467
  %868 = vmatprep.subr.bf16.mxu0 %v472
  %869 = vmatpush1.bf16.msra.mxu0 %v471
  %870 = vmatprep.subr.bf16.mxu0 %v476
  %871 = vmatpush1.bf16.msra.mxu0 %v475
  %872 = vmatprep.subr.bf16.mxu0 %v480
  %873 = vmatpush1.bf16.msra.mxu0 %v479
  %874 = vmatprep.subr.bf16.mxu0 %v484
  %875 = vmatpush1.bf16.msra.mxu0 %v483
  %876 = vmatprep.subr.bf16.mxu0 %v488
  %877 = vmatpush1.bf16.msra.mxu0 %v487
  %878 = vmatprep.subr.bf16.mxu0 %v492
  %879 = vmatpush1.bf16.msra.mxu0 %v491
  %880 = vmatprep.subr.bf16.mxu0 %v496
  %881 = vmatpush1.bf16.msra.mxu0 %v495
  %882 = vmatprep.subr.bf16.mxu0 0
  %883 = vmatpush1.bf16.msra.mxu0 0
  %884 = vmatprep.subr.bf16.mxu0 0
  %885 = vmatpush1.bf16.msra.mxu0 0
  %886 = vmatprep.subr.bf16.mxu0 0
  %887 = vmatpush1.bf16.msra.mxu0 0
  %888 = vmatprep.subr.bf16.mxu0 0
  %889 = vmatpush1.bf16.msra.mxu0 0
  %890 = vmatprep.subr.bf16.mxu0 0
  %891 = vmatpush1.bf16.msra.mxu0 0
  %892 = vmatprep.subr.bf16.mxu0 0
  %893 = vmatpush1.bf16.msra.mxu0 0
  %894 = vmatprep.subr.bf16.mxu0 0
  %895 = vmatpush1.bf16.msra.mxu0 0
  %896 = vmatprep.subr.bf16.mxu0 0
  %897 = vmatpush1.bf16.msra.mxu0 0
  %898 = vmatprep.mubr.bf16.mxu0 0
  %899 = vmatmul.mubr.bf16.gmra.mrb[0].mxu0 %v858
  %v900 = vpop.f32.mrb[0].mxu0
  %v901 = vadd.f32 0.0, %v900
  %v902 = vpop.f32.mrb[0].mxu0
  %v903 = vadd.f32 0.0, %v902
  %v904 = vpop.f32.mrb[0].mxu0
  %v905 = vpop.f32.mrb[0].mxu0
  %906 = vdwg.mxu0
  %907 = vmatprep.subr.bf16.mxu0 %v470
  %908 = vmatpush1.bf16.msra.mxu0 %v469
  %909 = vmatprep.subr.bf16.mxu0 %v474
  %910 = vmatpush1.bf16.msra.mxu0 %v473
  %911 = vmatprep.subr.bf16.mxu0 %v478
  %912 = vmatpush1.bf16.msra.mxu0 %v477
  %913 = vmatprep.subr.bf16.mxu0 %v482
  %914 = vmatpush1.bf16.msra.mxu0 %v481
  %915 = vmatprep.subr.bf16.mxu0 %v486
  %916 = vmatpush1.bf16.msra.mxu0 %v485
  %917 = vmatprep.subr.bf16.mxu0 %v490
  %918 = vmatpush1.bf16.msra.mxu0 %v489
  %919 = vmatprep.subr.bf16.mxu0 %v494
  %920 = vmatpush1.bf16.msra.mxu0 %v493
  %921 = vmatprep.subr.bf16.mxu0 %v498
  %922 = vmatpush1.bf16.msra.mxu0 %v497
  %923 = vmatprep.subr.bf16.mxu0 0
  %924 = vmatpush1.bf16.msra.mxu0 0
  %925 = vmatprep.subr.bf16.mxu0 0
  %926 = vmatpush1.bf16.msra.mxu0 0
  %927 = vmatprep.subr.bf16.mxu0 0
  %928 = vmatpush1.bf16.msra.mxu0 0
  %929 = vmatprep.subr.bf16.mxu0 0
  %930 = vmatpush1.bf16.msra.mxu0 0
  %931 = vmatprep.subr.bf16.mxu0 0
  %932 = vmatpush1.bf16.msra.mxu0 0
  %933 = vmatprep.subr.bf16.mxu0 0
  %934 = vmatpush1.bf16.msra.mxu0 0
  %935 = vmatprep.subr.bf16.mxu0 0
  %936 = vmatpush1.bf16.msra.mxu0 0
  %937 = vmatprep.subr.bf16.mxu0 0
  %938 = vmatpush1.bf16.msra.mxu0 0
  %939 = vmatprep.mubr.bf16.mxu0 0
  %940 = vmatmul.mubr.bf16.gmra.mrb[0].mxu0 %v858
  %v941 = vpop.f32.mrb[0].mxu0
  %v942 = vadd.f32 0.0, %v941
  %v943 = vpop.f32.mrb[0].mxu0
  %v944 = vadd.f32 0.0, %v943
  %v945 = vpop.f32.mrb[0].mxu0
  %v946 = vpop.f32.mrb[0].mxu0
  %947 = vdwg.mxu0
  %v948 = vadd.f32 %v862, %v901
  %v949 = vadd.f32 %v863, %v903
  %v950 = vadd.f32 %v864, %v942
  %v951 = vadd.f32 %v865, %v944
  %v952 = vmul.f32 %v948, 0.5
  %v953 = vtanh.pop %v952
  %v954 = vmul.f32 %v953, 0.5
  %v955 = vadd.f32 %v954, 0.5
  %v956 = vmul.f32 %v949, 0.5
  %v957 = vtanh.pop %v956
  %v958 = vmul.f32 %v957, 0.5
  %v959 = vadd.f32 %v958, 0.5
  %v960 = vtanh.pop %v950
  %v961 = vmul.f32 %v951, 0.5
  %v962 = vtanh.pop %v961
  %v963 = vmul.f32 %v962, 0.5
  %v964 = vadd.f32 %v963, 0.5
  %v965 = vmul.f32 %v959, %v855
  %v966 = vmul.f32 %v955, %v960
  %v967 = vadd.f32 %v965, %v966
  %v968 = vtanh.pop %v967
  %v969 = vmul.f32 %v964, %v968
  %v970 = vpack.c.bf16 %v969, %v969
  %s971 = scalar_lea.vmem %s4, 12
  %972 = vst [vmem:[%s971] sm:$0xf] %v970
  %s973 = scalar_lea.vmem [#allocation2], 128
  %v974 = vld [vmem:[%s973] sm:$0xff]
  %v975 = vld [vmem:[%s973 + $0x8] sm:$0xff]
  %v976 = vld [vmem:[%s973 + $0x10] sm:$0xff]
  %v977 = vld [vmem:[%s973 + $0x18] sm:$0xff]
  %978 = vmatprep.subr.bf16.mxu0 %v468
  %979 = vmatpush1.bf16.msra.mxu0 %v467
  %980 = vmatprep.subr.bf16.mxu0 %v472
  %981 = vmatpush1.bf16.msra.mxu0 %v471
  %982 = vmatprep.subr.bf16.mxu0 %v476
  %983 = vmatpush1.bf16.msra.mxu0 %v475
  %984 = vmatprep.subr.bf16.mxu0 %v480
  %985 = vmatpush1.bf16.msra.mxu0 %v479
  %986 = vmatprep.subr.bf16.mxu0 %v484
  %987 = vmatpush1.bf16.msra.mxu0 %v483
  %988 = vmatprep.subr.bf16.mxu0 %v488
  %989 = vmatpush1.bf16.msra.mxu0 %v487
  %990 = vmatprep.subr.bf16.mxu0 %v492
  %991 = vmatpush1.bf16.msra.mxu0 %v491
  %992 = vmatprep.subr.bf16.mxu0 %v496
  %993 = vmatpush1.bf16.msra.mxu0 %v495
  %994 = vmatprep.subr.bf16.mxu0 0
  %995 = vmatpush1.bf16.msra.mxu0 0
  %996 = vmatprep.subr.bf16.mxu0 0
  %997 = vmatpush1.bf16.msra.mxu0 0
  %998 = vmatprep.subr.bf16.mxu0 0
  %999 = vmatpush1.bf16.msra.mxu0 0
  %1000 = vmatprep.subr.bf16.mxu0 0
  %1001 = vmatpush1.bf16.msra.mxu0 0
  %1002 = vmatprep.subr.bf16.mxu0 0
  %1003 = vmatpush1.bf16.msra.mxu0 0
  %1004 = vmatprep.subr.bf16.mxu0 0
  %1005 = vmatpush1.bf16.msra.mxu0 0
  %1006 = vmatprep.subr.bf16.mxu0 0
  %1007 = vmatpush1.bf16.msra.mxu0 0
  %1008 = vmatprep.subr.bf16.mxu0 0
  %1009 = vmatpush1.bf16.msra.mxu0 0
  %1010 = vmatprep.mubr.bf16.mxu0 0
  %1011 = vmatmul.mubr.bf16.gmra.mrb[0].mxu0 %v970
  %v1012 = vpop.f32.mrb[0].mxu0
  %v1013 = vadd.f32 0.0, %v1012
  %v1014 = vpop.f32.mrb[0].mxu0
  %v1015 = vadd.f32 0.0, %v1014
  %v1016 = vpop.f32.mrb[0].mxu0
  %v1017 = vpop.f32.mrb[0].mxu0
  %1018 = vdwg.mxu0
  %1019 = vmatprep.subr.bf16.mxu0 %v470
  %1020 = vmatpush1.bf16.msra.mxu0 %v469
  %1021 = vmatprep.subr.bf16.mxu0 %v474
  %1022 = vmatpush1.bf16.msra.mxu0 %v473
  %1023 = vmatprep.subr.bf16.mxu0 %v478
  %1024 = vmatpush1.bf16.msra.mxu0 %v477
  %1025 = vmatprep.subr.bf16.mxu0 %v482
  %1026 = vmatpush1.bf16.msra.mxu0 %v481
  %1027 = vmatprep.subr.bf16.mxu0 %v486
  %1028 = vmatpush1.bf16.msra.mxu0 %v485
  %1029 = vmatprep.subr.bf16.mxu0 %v490
  %1030 = vmatpush1.bf16.msra.mxu0 %v489
  %1031 = vmatprep.subr.bf16.mxu0 %v494
  %1032 = vmatpush1.bf16.msra.mxu0 %v493
  %1033 = vmatprep.subr.bf16.mxu0 %v498
  %1034 = vmatpush1.bf16.msra.mxu0 %v497
  %1035 = vmatprep.subr.bf16.mxu0 0
  %1036 = vmatpush1.bf16.msra.mxu0 0
  %1037 = vmatprep.subr.bf16.mxu0 0
  %1038 = vmatpush1.bf16.msra.mxu0 0
  %1039 = vmatprep.subr.bf16.mxu0 0
  %1040 = vmatpush1.bf16.msra.mxu0 0
  %1041 = vmatprep.subr.bf16.mxu0 0
  %1042 = vmatpush1.bf16.msra.mxu0 0
  %1043 = vmatprep.subr.bf16.mxu0 0
  %1044 = vmatpush1.bf16.msra.mxu0 0
  %1045 = vmatprep.subr.bf16.mxu0 0
  %1046 = vmatpush1.bf16.msra.mxu0 0
  %1047 = vmatprep.subr.bf16.mxu0 0
  %1048 = vmatpush1.bf16.msra.mxu0 0
  %1049 = vmatprep.subr.bf16.mxu0 0
  %1050 = vmatpush1.bf16.msra.mxu0 0
  %1051 = vmatprep.mubr.bf16.mxu0 0
  %1052 = vmatmul.mubr.bf16.gmra.mrb[0].mxu0 %v970
  %v1053 = vpop.f32.mrb[0].mxu0
  %v1054 = vadd.f32 0.0, %v1053
  %v1055 = vpop.f32.mrb[0].mxu0
  %v1056 = vadd.f32 0.0, %v1055
  %v1057 = vpop.f32.mrb[0].mxu0
  %v1058 = vpop.f32.mrb[0].mxu0
  %1059 = vdwg.mxu0
  %v1060 = vadd.f32 %v974, %v1013
  %v1061 = vadd.f32 %v975, %v1015
  %v1062 = vadd.f32 %v976, %v1054
  %v1063 = vadd.f32 %v977, %v1056
  %v1064 = vmul.f32 %v1060, 0.5
  %v1065 = vtanh.pop %v1064
  %v1066 = vmul.f32 %v1065, 0.5
  %v1067 = vadd.f32 %v1066, 0.5
  %v1068 = vmul.f32 %v1061, 0.5
  %v1069 = vtanh.pop %v1068
  %v1070 = vmul.f32 %v1069, 0.5
  %v1071 = vadd.f32 %v1070, 0.5
  %v1072 = vtanh.pop %v1062
  %v1073 = vmul.f32 %v1063, 0.5
  %v1074 = vtanh.pop %v1073
  %v1075 = vmul.f32 %v1074, 0.5
  %v1076 = vadd.f32 %v1075, 0.5
  %v1077 = vmul.f32 %v1071, %v967
  %v1078 = vmul.f32 %v1067, %v1072
  %v1079 = vadd.f32 %v1077, %v1078
  %v1080 = vtanh.pop %v1079
  %v1081 = vmul.f32 %v1076, %v1080
  %v1082 = vpack.c.bf16 %v1081, %v1081
  %s1083 = scalar_lea.vmem %s4, 16
  %1084 = vst [vmem:[%s1083] sm:$0xf] %v1082
  %s1085 = scalar_lea.vmem [#allocation2], 160
  %v1086 = vld [vmem:[%s1085] sm:$0xff]
  %v1087 = vld [vmem:[%s1085 + $0x8] sm:$0xff]
  %v1088 = vld [vmem:[%s1085 + $0x10] sm:$0xff]
  %v1089 = vld [vmem:[%s1085 + $0x18] sm:$0xff]
  %1090 = vmatprep.subr.bf16.mxu0 %v468
  %1091 = vmatpush1.bf16.msra.mxu0 %v467
  %1092 = vmatprep.subr.bf16.mxu0 %v472
  %1093 = vmatpush1.bf16.msra.mxu0 %v471
  %1094 = vmatprep.subr.bf16.mxu0 %v476
  %1095 = vmatpush1.bf16.msra.mxu0 %v475
  %1096 = vmatprep.subr.bf16.mxu0 %v480
  %1097 = vmatpush1.bf16.msra.mxu0 %v479
  %1098 = vmatprep.subr.bf16.mxu0 %v484
  %1099 = vmatpush1.bf16.msra.mxu0 %v483
  %1100 = vmatprep.subr.bf16.mxu0 %v488
  %1101 = vmatpush1.bf16.msra.mxu0 %v487
  %1102 = vmatprep.subr.bf16.mxu0 %v492
  %1103 = vmatpush1.bf16.msra.mxu0 %v491
  %1104 = vmatprep.subr.bf16.mxu0 %v496
  %1105 = vmatpush1.bf16.msra.mxu0 %v495
  %1106 = vmatprep.subr.bf16.mxu0 0
  %1107 = vmatpush1.bf16.msra.mxu0 0
  %1108 = vmatprep.subr.bf16.mxu0 0
  %1109 = vmatpush1.bf16.msra.mxu0 0
  %1110 = vmatprep.subr.bf16.mxu0 0
  %1111 = vmatpush1.bf16.msra.mxu0 0
  %1112 = vmatprep.subr.bf16.mxu0 0
  %1113 = vmatpush1.bf16.msra.mxu0 0
  %1114 = vmatprep.subr.bf16.mxu0 0
  %1115 = vmatpush1.bf16.msra.mxu0 0
  %1116 = vmatprep.subr.bf16.mxu0 0
  %1117 = vmatpush1.bf16.msra.mxu0 0
  %1118 = vmatprep.subr.bf16.mxu0 0
  %1119 = vmatpush1.bf16.msra.mxu0 0
  %1120 = vmatprep.subr.bf16.mxu0 0
  %1121 = vmatpush1.bf16.msra.mxu0 0
  %1122 = vmatprep.mubr.bf16.mxu0 0
  %1123 = vmatmul.mubr.bf16.gmra.mrb[0].mxu0 %v1082
  %v1124 = vpop.f32.mrb[0].mxu0
  %v1125 = vadd.f32 0.0, %v1124
  %v1126 = vpop.f32.mrb[0].mxu0
  %v1127 = vadd.f32 0.0, %v1126
  %v1128 = vpop.f32.mrb[0].mxu0
  %v1129 = vpop.f32.mrb[0].mxu0
  %1130 = vdwg.mxu0
  %1131 = vmatprep.subr.bf16.mxu0 %v470
  %1132 = vmatpush1.bf16.msra.mxu0 %v469
  %1133 = vmatprep.subr.bf16.mxu0 %v474
  %1134 = vmatpush1.bf16.msra.mxu0 %v473
  %1135 = vmatprep.subr.bf16.mxu0 %v478
  %1136 = vmatpush1.bf16.msra.mxu0 %v477
  %1137 = vmatprep.subr.bf16.mxu0 %v482
  %1138 = vmatpush1.bf16.msra.mxu0 %v481
  %1139 = vmatprep.subr.bf16.mxu0 %v486
  %1140 = vmatpush1.bf16.msra.mxu0 %v485
  %1141 = vmatprep.subr.bf16.mxu0 %v490
  %1142 = vmatpush1.bf16.msra.mxu0 %v489
  %1143 = vmatprep.subr.bf16.mxu0 %v494
  %1144 = vmatpush1.bf16.msra.mxu0 %v493
  %1145 = vmatprep.subr.bf16.mxu0 %v498
  %1146 = vmatpush1.bf16.msra.mxu0 %v497
  %1147 = vmatprep.subr.bf16.mxu0 0
  %1148 = vmatpush1.bf16.msra.mxu0 0
  %1149 = vmatprep.subr.bf16.mxu0 0
  %1150 = vmatpush1.bf16.msra.mxu0 0
  %1151 = vmatprep.subr.bf16.mxu0 0
  %1152 = vmatpush1.bf16.msra.mxu0 0
  %1153 = vmatprep.subr.bf16.mxu0 0
  %1154 = vmatpush1.bf16.msra.mxu0 0
  %1155 = vmatprep.subr.bf16.mxu0 0
  %1156 = vmatpush1.bf16.msra.mxu0 0
  %1157 = vmatprep.subr.bf16.mxu0 0
  %1158 = vmatpush1.bf16.msra.mxu0 0
  %1159 = vmatprep.subr.bf16.mxu0 0
  %1160 = vmatpush1.bf16.msra.mxu0 0
  %1161 = vmatprep.subr.bf16.mxu0 0
  %1162 = vmatpush1.bf16.msra.mxu0 0
  %1163 = vmatprep.mubr.bf16.mxu0 0
  %1164 = vmatmul.mubr.bf16.gmra.mrb[0].mxu0 %v1082
  %v1165 = vpop.f32.mrb[0].mxu0
  %v1166 = vadd.f32 0.0, %v1165
  %v1167 = vpop.f32.mrb[0].mxu0
  %v1168 = vadd.f32 0.0, %v1167
  %v1169 = vpop.f32.mrb[0].mxu0
  %v1170 = vpop.f32.mrb[0].mxu0
  %1171 = vdwg.mxu0
  %v1172 = vadd.f32 %v1086, %v1125
  %v1173 = vadd.f32 %v1087, %v1127
  %v1174 = vadd.f32 %v1088, %v1166
  %v1175 = vadd.f32 %v1089, %v1168
  %v1176 = vmul.f32 %v1172, 0.5
  %v1177 = vtanh.pop %v1176
  %v1178 = vmul.f32 %v1177, 0.5
  %v1179 = vadd.f32 %v1178, 0.5
  %v1180 = vmul.f32 %v1173, 0.5
  %v1181 = vtanh.pop %v1180
  %v1182 = vmul.f32 %v1181, 0.5
  %v1183 = vadd.f32 %v1182, 0.5
  %v1184 = vtanh.pop %v1174
  %v1185 = vmul.f32 %v1175, 0.5
  %v1186 = vtanh.pop %v1185
  %v1187 = vmul.f32 %v1186, 0.5
  %v1188 = vadd.f32 %v1187, 0.5
  %v1189 = vmul.f32 %v1183, %v1079
  %v1190 = vmul.f32 %v1179, %v1184
  %v1191 = vadd.f32 %v1189, %v1190
  %v1192 = vtanh.pop %v1191
  %v1193 = vmul.f32 %v1188, %v1192
  %v1194 = vpack.c.bf16 %v1193, %v1193
  %s1195 = scalar_lea.vmem %s4, 20
  %1196 = vst [vmem:[%s1195] sm:$0xf] %v1194
  %s1197 = scalar_lea.vmem [#allocation2], 192
  %v1198 = vld [vmem:[%s1197] sm:$0xff]
  %v1199 = vld [vmem:[%s1197 + $0x8] sm:$0xff]
  %v1200 = vld [vmem:[%s1197 + $0x10] sm:$0xff]
  %v1201 = vld [vmem:[%s1197 + $0x18] sm:$0xff]
  %1202 = vmatprep.subr.bf16.mxu0 %v468
  %1203 = vmatpush1.bf16.msra.mxu0 %v467
  %1204 = vmatprep.subr.bf16.mxu0 %v472
  %1205 = vmatpush1.bf16.msra.mxu0 %v471
  %1206 = vmatprep.subr.bf16.mxu0 %v476
  %1207 = vmatpush1.bf16.msra.mxu0 %v475
  %1208 = vmatprep.subr.bf16.mxu0 %v480
  %1209 = vmatpush1.bf16.msra.mxu0 %v479
  %1210 = vmatprep.subr.bf16.mxu0 %v484
  %1211 = vmatpush1.bf16.msra.mxu0 %v483
  %1212 = vmatprep.subr.bf16.mxu0 %v488
  %1213 = vmatpush1.bf16.msra.mxu0 %v487
  %1214 = vmatprep.subr.bf16.mxu0 %v492
  %1215 = vmatpush1.bf16.msra.mxu0 %v491
  %1216 = vmatprep.subr.bf16.mxu0 %v496
  %1217 = vmatpush1.bf16.msra.mxu0 %v495
  %1218 = vmatprep.subr.bf16.mxu0 0
  %1219 = vmatpush1.bf16.msra.mxu0 0
  %1220 = vmatprep.subr.bf16.mxu0 0
  %1221 = vmatpush1.bf16.msra.mxu0 0
  %1222 = vmatprep.subr.bf16.mxu0 0
  %1223 = vmatpush1.bf16.msra.mxu0 0
  %1224 = vmatprep.subr.bf16.mxu0 0
  %1225 = vmatpush1.bf16.msra.mxu0 0
  %1226 = vmatprep.subr.bf16.mxu0 0
  %1227 = vmatpush1.bf16.msra.mxu0 0
  %1228 = vmatprep.subr.bf16.mxu0 0
  %1229 = vmatpush1.bf16.msra.mxu0 0
  %1230 = vmatprep.subr.bf16.mxu0 0
  %1231 = vmatpush1.bf16.msra.mxu0 0
  %1232 = vmatprep.subr.bf16.mxu0 0
  %1233 = vmatpush1.bf16.msra.mxu0 0
  %1234 = vmatprep.mubr.bf16.mxu0 0
  %1235 = vmatmul.mubr.bf16.gmra.mrb[0].mxu0 %v1194
  %v1236 = vpop.f32.mrb[0].mxu0
  %v1237 = vadd.f32 0.0, %v1236
  %v1238 = vpop.f32.mrb[0].mxu0
  %v1239 = vadd.f32 0.0, %v1238
  %v1240 = vpop.f32.mrb[0].mxu0
  %v1241 = vpop.f32.mrb[0].mxu0
  %1242 = vdwg.mxu0
  %1243 = vmatprep.subr.bf16.mxu0 %v470
  %1244 = vmatpush1.bf16.msra.mxu0 %v469
  %1245 = vmatprep.subr.bf16.mxu0 %v474
  %1246 = vmatpush1.bf16.msra.mxu0 %v473
  %1247 = vmatprep.subr.bf16.mxu0 %v478
  %1248 = vmatpush1.bf16.msra.mxu0 %v477
  %1249 = vmatprep.subr.bf16.mxu0 %v482
  %1250 = vmatpush1.bf16.msra.mxu0 %v481
  %1251 = vmatprep.subr.bf16.mxu0 %v486
  %1252 = vmatpush1.bf16.msra.mxu0 %v485
  %1253 = vmatprep.subr.bf16.mxu0 %v490
  %1254 = vmatpush1.bf16.msra.mxu0 %v489
  %1255 = vmatprep.subr.bf16.mxu0 %v494
  %1256 = vmatpush1.bf16.msra.mxu0 %v493
  %1257 = vmatprep.subr.bf16.mxu0 %v498
  %1258 = vmatpush1.bf16.msra.mxu0 %v497
  %1259 = vmatprep.subr.bf16.mxu0 0
  %1260 = vmatpush1.bf16.msra.mxu0 0
  %1261 = vmatprep.subr.bf16.mxu0 0
  %1262 = vmatpush1.bf16.msra.mxu0 0
  %1263 = vmatprep.subr.bf16.mxu0 0
  %1264 = vmatpush1.bf16.msra.mxu0 0
  %1265 = vmatprep.subr.bf16.mxu0 0
  %1266 = vmatpush1.bf16.msra.mxu0 0
  %1267 = vmatprep.subr.bf16.mxu0 0
  %1268 = vmatpush1.bf16.msra.mxu0 0
  %1269 = vmatprep.subr.bf16.mxu0 0
  %1270 = vmatpush1.bf16.msra.mxu0 0
  %1271 = vmatprep.subr.bf16.mxu0 0
  %1272 = vmatpush1.bf16.msra.mxu0 0
  %1273 = vmatprep.subr.bf16.mxu0 0
  %1274 = vmatpush1.bf16.msra.mxu0 0
  %1275 = vmatprep.mubr.bf16.mxu0 0
  %1276 = vmatmul.mubr.bf16.gmra.mrb[0].mxu0 %v1194
  %v1277 = vpop.f32.mrb[0].mxu0
  %v1278 = vadd.f32 0.0, %v1277
  %v1279 = vpop.f32.mrb[0].mxu0
  %v1280 = vadd.f32 0.0, %v1279
  %v1281 = vpop.f32.mrb[0].mxu0
  %v1282 = vpop.f32.mrb[0].mxu0
  %1283 = vdwg.mxu0
  %v1284 = vadd.f32 %v1198, %v1237
  %v1285 = vadd.f32 %v1199, %v1239
  %v1286 = vadd.f32 %v1200, %v1278
  %v1287 = vadd.f32 %v1201, %v1280
  %v1288 = vmul.f32 %v1284, 0.5
  %v1289 = vtanh.pop %v1288
  %v1290 = vmul.f32 %v1289, 0.5
  %v1291 = vadd.f32 %v1290, 0.5
  %v1292 = vmul.f32 %v1285, 0.5
  %v1293 = vtanh.pop %v1292
  %v1294 = vmul.f32 %v1293, 0.5
  %v1295 = vadd.f32 %v1294, 0.5
  %v1296 = vtanh.pop %v1286
  %v1297 = vmul.f32 %v1287, 0.5
  %v1298 = vtanh.pop %v1297
  %v1299 = vmul.f32 %v1298, 0.5
  %v1300 = vadd.f32 %v1299, 0.5
  %v1301 = vmul.f32 %v1295, %v1191
  %v1302 = vmul.f32 %v1291, %v1296
  %v1303 = vadd.f32 %v1301, %v1302
  %v1304 = vtanh.pop %v1303
  %v1305 = vmul.f32 %v1300, %v1304
  %v1306 = vpack.c.bf16 %v1305, %v1305
  %s1307 = scalar_lea.vmem %s4, 24
  %1308 = vst [vmem:[%s1307] sm:$0xf] %v1306
  %s1309 = scalar_lea.vmem [#allocation2], 224
  %v1310 = vld [vmem:[%s1309] sm:$0xff]
  %v1311 = vld [vmem:[%s1309 + $0x8] sm:$0xff]
  %v1312 = vld [vmem:[%s1309 + $0x10] sm:$0xff]
  %v1313 = vld [vmem:[%s1309 + $0x18] sm:$0xff]
  %1314 = vmatprep.subr.bf16.mxu0 %v468
  %1315 = vmatpush1.bf16.msra.mxu0 %v467
  %1316 = vmatprep.subr.bf16.mxu0 %v472
  %1317 = vmatpush1.bf16.msra.mxu0 %v471
  %1318 = vmatprep.subr.bf16.mxu0 %v476
  %1319 = vmatpush1.bf16.msra.mxu0 %v475
  %1320 = vmatprep.subr.bf16.mxu0 %v480
  %1321 = vmatpush1.bf16.msra.mxu0 %v479
  %1322 = vmatprep.subr.bf16.mxu0 %v484
  %1323 = vmatpush1.bf16.msra.mxu0 %v483
  %1324 = vmatprep.subr.bf16.mxu0 %v488
  %1325 = vmatpush1.bf16.msra.mxu0 %v487
  %1326 = vmatprep.subr.bf16.mxu0 %v492
  %1327 = vmatpush1.bf16.msra.mxu0 %v491
  %1328 = vmatprep.subr.bf16.mxu0 %v496
  %1329 = vmatpush1.bf16.msra.mxu0 %v495
  %1330 = vmatprep.subr.bf16.mxu0 0
  %1331 = vmatpush1.bf16.msra.mxu0 0
  %1332 = vmatprep.subr.bf16.mxu0 0
  %1333 = vmatpush1.bf16.msra.mxu0 0
  %1334 = vmatprep.subr.bf16.mxu0 0
  %1335 = vmatpush1.bf16.msra.mxu0 0
  %1336 = vmatprep.subr.bf16.mxu0 0
  %1337 = vmatpush1.bf16.msra.mxu0 0
  %1338 = vmatprep.subr.bf16.mxu0 0
  %1339 = vmatpush1.bf16.msra.mxu0 0
  %1340 = vmatprep.subr.bf16.mxu0 0
  %1341 = vmatpush1.bf16.msra.mxu0 0
  %1342 = vmatprep.subr.bf16.mxu0 0
  %1343 = vmatpush1.bf16.msra.mxu0 0
  %1344 = vmatprep.subr.bf16.mxu0 0
  %1345 = vmatpush1.bf16.msra.mxu0 0
  %1346 = vmatprep.mubr.bf16.mxu0 0
  %1347 = vmatmul.mubr.bf16.gmra.mrb[0].mxu0 %v1306
  %v1348 = vpop.f32.mrb[0].mxu0
  %v1349 = vadd.f32 0.0, %v1348
  %v1350 = vpop.f32.mrb[0].mxu0
  %v1351 = vadd.f32 0.0, %v1350
  %v1352 = vpop.f32.mrb[0].mxu0
  %v1353 = vpop.f32.mrb[0].mxu0
  %1354 = vdwg.mxu0
  %1355 = vmatprep.subr.bf16.mxu0 %v470
  %1356 = vmatpush1.bf16.msra.mxu0 %v469
  %1357 = vmatprep.subr.bf16.mxu0 %v474
  %1358 = vmatpush1.bf16.msra.mxu0 %v473
  %1359 = vmatprep.subr.bf16.mxu0 %v478
  %1360 = vmatpush1.bf16.msra.mxu0 %v477
  %1361 = vmatprep.subr.bf16.mxu0 %v482
  %1362 = vmatpush1.bf16.msra.mxu0 %v481
  %1363 = vmatprep.subr.bf16.mxu0 %v486
  %1364 = vmatpush1.bf16.msra.mxu0 %v485
  %1365 = vmatprep.subr.bf16.mxu0 %v490
  %1366 = vmatpush1.bf16.msra.mxu0 %v489
  %1367 = vmatprep.subr.bf16.mxu0 %v494
  %1368 = vmatpush1.bf16.msra.mxu0 %v493
  %1369 = vmatprep.subr.bf16.mxu0 %v498
  %1370 = vmatpush1.bf16.msra.mxu0 %v497
  %1371 = vmatprep.subr.bf16.mxu0 0
  %1372 = vmatpush1.bf16.msra.mxu0 0
  %1373 = vmatprep.subr.bf16.mxu0 0
  %1374 = vmatpush1.bf16.msra.mxu0 0
  %1375 = vmatprep.subr.bf16.mxu0 0
  %1376 = vmatpush1.bf16.msra.mxu0 0
  %1377 = vmatprep.subr.bf16.mxu0 0
  %1378 = vmatpush1.bf16.msra.mxu0 0
  %1379 = vmatprep.subr.bf16.mxu0 0
  %1380 = vmatpush1.bf16.msra.mxu0 0
  %1381 = vmatprep.subr.bf16.mxu0 0
  %1382 = vmatpush1.bf16.msra.mxu0 0
  %1383 = vmatprep.subr.bf16.mxu0 0
  %1384 = vmatpush1.bf16.msra.mxu0 0
  %1385 = vmatprep.subr.bf16.mxu0 0
  %1386 = vmatpush1.bf16.msra.mxu0 0
  %1387 = vmatprep.mubr.bf16.mxu0 0
  %1388 = vmatmul.mubr.bf16.gmra.mrb[0].mxu0 %v1306
  %v1389 = vpop.f32.mrb[0].mxu0
  %v1390 = vadd.f32 0.0, %v1389
  %v1391 = vpop.f32.mrb[0].mxu0
  %v1392 = vadd.f32 0.0, %v1391
  %v1393 = vpop.f32.mrb[0].mxu0
  %v1394 = vpop.f32.mrb[0].mxu0
  %1395 = vdwg.mxu0
  %v1396 = vadd.f32 %v1310, %v1349
  %v1397 = vadd.f32 %v1311, %v1351
  %v1398 = vadd.f32 %v1312, %v1390
  %v1399 = vadd.f32 %v1313, %v1392
  %v1400 = vmul.f32 %v1396, 0.5
  %v1401 = vtanh.pop %v1400
  %v1402 = vmul.f32 %v1401, 0.5
  %v1403 = vadd.f32 %v1402, 0.5
  %v1404 = vmul.f32 %v1397, 0.5
  %v1405 = vtanh.pop %v1404
  %v1406 = vmul.f32 %v1405, 0.5
  %v1407 = vadd.f32 %v1406, 0.5
  %v1408 = vtanh.pop %v1398
  %v1409 = vmul.f32 %v1399, 0.5
  %v1410 = vtanh.pop %v1409
  %v1411 = vmul.f32 %v1410, 0.5
  %v1412 = vadd.f32 %v1411, 0.5
  %v1413 = vmul.f32 %v1407, %v1303
  %v1414 = vmul.f32 %v1403, %v1408
  %v1415 = vadd.f32 %v1413, %v1414
  %v1416 = vtanh.pop %v1415
  %v1417 = vmul.f32 %v1412, %v1416
  %v1418 = vpack.c.bf16 %v1417, %v1417
  %s1419 = scalar_lea.vmem %s4, 28
  %1420 = vst [vmem:[%s1419] sm:$0xf] %v1418
  %1421 = vst [vmem:[#allocation3] sm:$0xff] %v1417
  %1422 = vst [vmem:[#allocation4] sm:$0xff] %v1415
  // Predicated region
  $region22: #{encoder_forward.2} parent=0 // pred_check
    %p1423 = pneg %p21
  $region23: #{encoder_forward.2} parent=0 // pred_check_branch
    %1425 = sbr.rel (%p1423) target = $region25
  $region24: #{encoder_forward.2} parent=0 // pred_region
    %1426 = vst [vmem:[%s5] sm:$0xff] %v1417
    %1427 = vst [vmem:[%s6] sm:$0xff] %v1415
  $region25: #{encoder_forward.2} parent=0 // pred_fallthru
    _
  // Predicated region
  $region26: #{encoder_forward.2} parent=0 // pred_check
    _
  $region27: #{encoder_forward.2} parent=0 // pred_check_branch
    %1429 = sbr.rel (0) target = $region29
  $region28: #{encoder_forward.2} parent=0 // pred_region
    _
  $region29: #{encoder_forward.2} parent=0 // pred_fallthru
    _
  // Predicated region
  $region30: #{encoder_forward.2} parent=0 // pred_check
    _
  $region31: #{encoder_forward.2} parent=0 // pred_check_branch
    %1431 = sbr.rel (0) target = $region33
  $region32: #{encoder_forward.2} parent=0 // pred_region
    _
  $region33: #{encoder_forward.2} parent=0 // pred_fallthru
    _
  // Predicated region
  $region34: #{encoder_forward.2} parent=0 // pred_check
    _
  $region35: #{encoder_forward.2} parent=0 // pred_check_branch
    %1433 = sbr.rel (0) target = $region37
  $region36: #{encoder_forward.2} parent=0 // pred_region
    _
  $region37: #{encoder_forward.2} parent=0 // pred_fallthru
    _
  // Predicated region
  $region38: #{encoder_forward.2} parent=0 // pred_check
    _
  $region39: #{encoder_forward.2} parent=0 // pred_check_branch
    %1435 = sbr.rel (0) target = $region41
  $region40: #{encoder_forward.2} parent=0 // pred_region
    _
  $region41: #{encoder_forward.2} parent=0 // pred_fallthru
    _
  // Predicated region
  $region42: #{encoder_forward.2} parent=0 // pred_check
    _
  $region43: #{encoder_forward.2} parent=0 // pred_check_branch
    %1437 = sbr.rel (0) target = $region45
  $region44: #{encoder_forward.2} parent=0 // pred_region
    _
  $region45: #{encoder_forward.2} parent=0 // pred_fallthru
    _
  // Predicated region
  $region46: #{encoder_forward.2} parent=0 // pred_check
    _
  $region47: #{encoder_forward.2} parent=0 // pred_check_branch
    %1439 = sbr.rel (0) target = $region49
  $region48: #{encoder_forward.2} parent=0 // pred_region
    _
  $region49: #{encoder_forward.2} parent=0 // pred_fallthru
    _

</llo_original>
